<compile_context>
chip_gen: v7x
topology: tpu7x:2x2x1
jax: 0.10.0
libtpu: 0.0.40
codegen_flags: <defaults>
</compile_context>

<pallas_src>
import functools

import jax
import jax.numpy as jnp
from jax.experimental import pallas as pl
from jax.experimental.pallas import tpu as pltpu


def _encoder_kernel(emb_ref, w_ih_ref, b_gi_ref,
                    w_hh_f_ref, w_hh_b_ref, b_hn_f_ref, b_hn_b_ref,
                    w_lin_f_ref, w_lin_b_ref, b_lin_ref,
                    out_ref, hid_ref,
                    hf_s, hb_s,
                    *, T, B, H):
    x = emb_ref[...]                                     # (T*B, H)
    w_hh_f = w_hh_f_ref[...]                             # (H, 3H)
    w_hh_b = w_hh_b_ref[...]                             # (H, 3H)

    # Batched input-gate matmul for both directions at once (hoisted out of
    # the latency-critical recurrence).  b_ih plus the r/z slice of b_hh are
    # pre-folded into b_gi (the n-gate b_hh must stay inside r * (...)).
    gi = jnp.dot(x, w_ih_ref[...],
                 preferred_element_type=jnp.float32) + b_gi_ref[...]  # (T*B, 6H)
    gi_f = gi[:, 0:3 * H]                                # split once, not per step
    gi_b = gi[:, 3 * H:6 * H]

    # Hoist the (1,H) -> (B,H) bias broadcasts out of the unrolled loop
    # (JAX does not CSE broadcast_in_dim inside loops).
    b_hn_f = jnp.broadcast_to(b_hn_f_ref[...], (B, H))
    b_hn_b = jnp.broadcast_to(b_hn_b_ref[...], (B, H))

    def cell(g, h, w_hh, b_hn):
        gh = jnp.dot(h, w_hh, preferred_element_type=jnp.float32)    # (B, 3H)
        r = jax.nn.sigmoid(g[:, 0:H] + gh[:, 0:H])
        z = jax.nn.sigmoid(g[:, H:2 * H] + gh[:, H:2 * H])
        n = jnp.tanh(g[:, 2 * H:3 * H] + r * (gh[:, 2 * H:3 * H] + b_hn))
        return (1.0 - z) * n + z * h

    h_f = jnp.zeros((B, H), jnp.float32)
    h_b = jnp.zeros((B, H), jnp.float32)

    # T is small and static: full unroll with static indices.  The two
    # directions are independent dependency chains once gi and the output
    # projection are hoisted, so they interleave within each iteration.
    for i in range(T):
        tf = i
        tb = T - 1 - i
        h_f = cell(gi_f[tf * B:(tf + 1) * B, :], h_f, w_hh_f, b_hn_f)
        h_b = cell(gi_b[tb * B:(tb + 1) * B, :], h_b, w_hh_b, b_hn_b)
        hf_s[tf * B:(tf + 1) * B, :] = h_f               # off the critical path
        hb_s[tb * B:(tb + 1) * B, :] = h_b

    # Deferred, batched output projection + single lane-contiguous store.
    out_ref[...] = jnp.tanh(
        jnp.dot(hf_s[...], w_lin_f_ref[...], preferred_element_type=jnp.float32)
        + jnp.dot(hb_s[...], w_lin_b_ref[...], preferred_element_type=jnp.float32)
        + b_lin_ref[...])
    hid_ref[0:B, :] = h_f
    hid_ref[B:2 * B, :] = h_b


def encoder_forward(src, king_id, params):
    """src: (T, B) int32 token ids.  Returns (outputs (T,B,H), hidden (2,B,H))."""
    # TODO(synk): king_id is ignored — nn.Embedding.forward takes one tensor.
    del king_id
    T, B = src.shape
    H = params["hidden_size"]

    # Embedding lookup (glue, plain JAX gather); padding_idx row is zero.
    emb_flat = params["embedding"][src].astype(jnp.float32).reshape(T * B, H)
    # embedding_dropout == 0.0 and dropout == 0.0  -> identity (eval semantics).

    # One-time weight/bias prep (tiny XLA-side ops):
    #  - concat forward/backward w_ih into one (H, 6H) operand,
    #  - fold b_ih and the r/z part of b_hh into the gi bias,
    #  - keep the n-gate b_hh separately (it sits inside r * (...)).
    zH = jnp.zeros((1, H), jnp.float32)
    b_gi_f = params["b_ih_f"] + jnp.concatenate(
        [params["b_hh_f"][:, :2 * H], zH], axis=1)
    b_gi_b = params["b_ih_b"] + jnp.concatenate(
        [params["b_hh_b"][:, :2 * H], zH], axis=1)
    w_ih_cat = jnp.concatenate([params["w_ih_f"], params["w_ih_b"]], axis=1)
    b_gi_cat = jnp.concatenate([b_gi_f, b_gi_b], axis=1)
    b_hn_f = params["b_hh_f"][:, 2 * H:]
    b_hn_b = params["b_hh_b"][:, 2 * H:]

    ins = (emb_flat, w_ih_cat, b_gi_cat,
           params["w_hh_f"], params["w_hh_b"], b_hn_f, b_hn_b,
           params["w_lin_f"], params["w_lin_b"], params["b_lin"])

    vmem = pl.BlockSpec(memory_space=pltpu.MemorySpace.VMEM)

    flops = int(2 * T * B * H * 6 * H            # batched input-gate matmul
                + T * 2 * 2 * B * H * 3 * H      # recurrence (both directions)
                + 2 * 2 * T * B * H * H          # output projection
                + 20 * T * B * H)                # elementwise gate math
    bytes_accessed = int(4 * (emb_flat.size + w_ih_cat.size + b_gi_cat.size
                              + 2 * params["w_hh_f"].size + 2 * b_hn_f.size
                              + 2 * params["w_lin_f"].size + params["b_lin"].size
                              + T * B * H + 2 * B * H))
    cost = pl.CostEstimate(flops=flops,
                           transcendentals=int(7 * T * B * H),
                           bytes_accessed=bytes_accessed)

    kern = functools.partial(_encoder_kernel, T=T, B=B, H=H)
    out_flat, hid_flat = pl.pallas_call(
        kern,
        out_shape=(jax.ShapeDtypeStruct((T * B, H), jnp.float32),
                   jax.ShapeDtypeStruct((2 * B, H), jnp.float32)),
        in_specs=[vmem] * len(ins),
        out_specs=(vmem, vmem),
        scratch_shapes=[pltpu.VMEM((T * B, H), jnp.float32),
                        pltpu.VMEM((T * B, H), jnp.float32)],
        cost_estimate=cost,
    )(*ins)
    return out_flat.reshape(T, B, H), hid_flat.reshape(2, B, H)


def init_params(key, vocab, hidden):
    ks = jax.random.split(key, 12)
    s = 1.0 / float(hidden) ** 0.5

    def u(k, shape, scale=s):
        return jax.random.uniform(k, shape, jnp.float32, -scale, scale)

    emb = jax.random.normal(ks[0], (vocab, hidden), jnp.float32)
    emb = emb.at[0].set(0.0)                      # padding_idx = 0
    sl = 1.0 / float(2 * hidden) ** 0.5
    return dict(
        hidden_size=hidden,
        embedding=emb,
        # GRU weights stored transposed (in_dim, 3H) so the kernel does x @ W.
        w_ih_f=u(ks[1], (hidden, 3 * hidden)),
        w_hh_f=u(ks[2], (hidden, 3 * hidden)),
        b_ih_f=u(ks[3], (1, 3 * hidden)),
        b_hh_f=u(ks[4], (1, 3 * hidden)),
        w_ih_b=u(ks[5], (hidden, 3 * hidden)),
        w_hh_b=u(ks[6], (hidden, 3 * hidden)),
        b_ih_b=u(ks[7], (1, 3 * hidden)),
        b_hh_b=u(ks[8], (1, 3 * hidden)),
        # Linear(2H -> H) split into forward / backward halves (rows [:H], [H:]).
        w_lin_f=u(ks[9], (hidden, hidden), sl),
        w_lin_b=u(ks[10], (hidden, hidden), sl),
        b_lin=u(ks[11], (1, hidden), sl),
    )


def ref_forward(src, params):
    """Pure-JAX reference of the same forward pass (for verification)."""
    H = params["hidden_size"]
    emb = params["embedding"][src].astype(jnp.float32)
    T, B, _ = emb.shape

    def cell(x_t, h, wih, whh, bih, bhh):
        gi = x_t @ wih + bih
        gh = h @ whh + bhh
        r = jax.nn.sigmoid(gi[:, :H] + gh[:, :H])
        z = jax.nn.sigmoid(gi[:, H:2 * H] + gh[:, H:2 * H])
        n = jnp.tanh(gi[:, 2 * H:] + r * gh[:, 2 * H:])
        return (1.0 - z) * n + z * h

    h = jnp.zeros((B, H), jnp.float32)
    outs_f = []
    for t in range(T):
        h = cell(emb[t], h, params["w_ih_f"], params["w_hh_f"],
                 params["b_ih_f"], params["b_hh_f"])
        outs_f.append(h)
    h_f = h

    h = jnp.zeros((B, H), jnp.float32)
    outs_b = [None] * T
    for t in range(T - 1, -1, -1):
        h = cell(emb[t], h, params["w_ih_b"], params["w_hh_b"],
                 params["b_ih_b"], params["b_hh_b"])
        outs_b[t] = h
    h_b = h

    of = jnp.stack(outs_f)
    ob = jnp.stack(outs_b)
    out = jnp.tanh(of @ params["w_lin_f"] + ob @ params["w_lin_b"] + params["b_lin"])
    hid = jnp.stack([h_f, h_b])
    return out, hid


if __name__ == "__main__":
    T, B, H, VOCAB = 8, 2, 32, 50   # seq=8, batch=2, hidden=embed=32
    key = jax.random.PRNGKey(0)
    k_params, k_src = jax.random.split(key)

    params = init_params(k_params, VOCAB, H)
    src = jax.random.randint(k_src, (T, B), 0, VOCAB, dtype=jnp.int32)
    src = src.at[-1, :].set(0)      # some padding tokens (pad_idx = 0)
    king_id = jnp.zeros((B,), jnp.int32)

    outputs, hidden = encoder_forward(src, king_id, params)
    outputs = jax.block_until_ready(outputs)
    hidden = jax.block_until_ready(hidden)

    ref_out, ref_hid = ref_forward(src, params)
    assert outputs.shape == (T, B, H) and hidden.shape == (2, B, H)
    assert jnp.allclose(outputs, ref_out, atol=2e-3, rtol=2e-3)
    assert jnp.allclose(hidden, ref_hid, atol=2e-3, rtol=2e-3)

    print("KERNEL_OK")
</pallas_src>

<mosaic_0001>
module attributes {stable_mosaic.version = 11 : i64} {
  func.func @_encoder_kernel(%arg0: memref<16x32xf32, #tpu.memory_space<vmem>>, %arg1: memref<32x192xf32, #tpu.memory_space<vmem>>, %arg2: memref<1x192xf32, #tpu.memory_space<vmem>>, %arg3: memref<32x96xf32, #tpu.memory_space<vmem>>, %arg4: memref<32x96xf32, #tpu.memory_space<vmem>>, %arg5: memref<1x32xf32, #tpu.memory_space<vmem>>, %arg6: memref<1x32xf32, #tpu.memory_space<vmem>>, %arg7: memref<32x32xf32, #tpu.memory_space<vmem>>, %arg8: memref<32x32xf32, #tpu.memory_space<vmem>>, %arg9: memref<1x32xf32, #tpu.memory_space<vmem>>, %arg10: memref<16x32xf32, #tpu.memory_space<vmem>>, %arg11: memref<4x32xf32, #tpu.memory_space<vmem>>, %arg12: memref<16x32xf32, #tpu.memory_space<vmem>>, %arg13: memref<16x32xf32, #tpu.memory_space<vmem>>) attributes {dimension_semantics = [], scalar_prefetch = 0 : i64, scratch_operands = 2 : i64, tpu.core_type = #tpu.core_type<tc>} {
    %c0 = arith.constant 0 : index
    %c0_0 = arith.constant 0 : index
    %0 = vector.load %arg0[%c0, %c0_0] : memref<16x32xf32, #tpu.memory_space<vmem>>, vector<16x32xf32>
    %c0_1 = arith.constant 0 : index
    %c0_2 = arith.constant 0 : index
    %1 = vector.load %arg3[%c0_1, %c0_2] : memref<32x96xf32, #tpu.memory_space<vmem>>, vector<32x96xf32>
    %c0_3 = arith.constant 0 : index
    %c0_4 = arith.constant 0 : index
    %2 = vector.load %arg4[%c0_3, %c0_4] : memref<32x96xf32, #tpu.memory_space<vmem>>, vector<32x96xf32>
    %c0_5 = arith.constant 0 : index
    %c0_6 = arith.constant 0 : index
    %3 = vector.load %arg1[%c0_5, %c0_6] : memref<32x192xf32, #tpu.memory_space<vmem>>, vector<32x192xf32>
    %cst = arith.constant dense<0.000000e+00> : vector<16x192xf32>
    %4 = tpu.matmul %0, %3, %cst {dimension_numbers = #tpu.dot_dimension_numbers<[1], [0], [0], [1], [0, 0, 1, 1], [], []>} : vector<16x32xf32>, vector<32x192xf32>, vector<16x192xf32> -> vector<16x192xf32>
    %c0_7 = arith.constant 0 : index
    %c0_8 = arith.constant 0 : index
    %5 = vector.load %arg2[%c0_7, %c0_8] : memref<1x192xf32, #tpu.memory_space<vmem>>, vector<1x192xf32>
    %6 = vector.broadcast %5 : vector<1x192xf32> to vector<16x192xf32>
    %7 = arith.addf %4, %6 : vector<16x192xf32>
    %8 = vector.extract_strided_slice %7 {offsets = [0, 0], sizes = [16, 96], strides = [1, 1]} : vector<16x192xf32> to vector<16x96xf32>
    %9 = vector.extract_strided_slice %7 {offsets = [0, 96], sizes = [16, 96], strides = [1, 1]} : vector<16x192xf32> to vector<16x96xf32>
    %c0_9 = arith.constant 0 : index
    %c0_10 = arith.constant 0 : index
    %10 = vector.load %arg5[%c0_9, %c0_10] : memref<1x32xf32, #tpu.memory_space<vmem>>, vector<1x32xf32>
    %11 = vector.shape_cast %10 : vector<1x32xf32> to vector<1x32xf32>
    %12 = vector.broadcast %11 : vector<1x32xf32> to vector<2x32xf32>
    %c0_11 = arith.constant 0 : index
    %c0_12 = arith.constant 0 : index
    %13 = vector.load %arg6[%c0_11, %c0_12] : memref<1x32xf32, #tpu.memory_space<vmem>>, vector<1x32xf32>
    %14 = vector.shape_cast %13 : vector<1x32xf32> to vector<1x32xf32>
    %15 = vector.broadcast %14 : vector<1x32xf32> to vector<2x32xf32>
    %cst_13 = arith.constant 0.000000e+00 : f32
    %16 = vector.broadcast %cst_13 : f32 to vector<2x32xf32>
    %cst_14 = arith.constant 0.000000e+00 : f32
    %17 = vector.broadcast %cst_14 : f32 to vector<2x32xf32>
    %18 = vector.extract_strided_slice %8 {offsets = [0, 0], sizes = [2, 96], strides = [1, 1]} : vector<16x96xf32> to vector<2x96xf32>
    %cst_15 = arith.constant dense<0.000000e+00> : vector<2x96xf32>
    %19 = tpu.matmul %16, %1, %cst_15 {dimension_numbers = #tpu.dot_dimension_numbers<[1], [0], [0], [1], [0, 0, 1, 1], [], []>} : vector<2x32xf32>, vector<32x96xf32>, vector<2x96xf32> -> vector<2x96xf32>
    %20 = vector.extract_strided_slice %18 {offsets = [0, 0], sizes = [2, 32], strides = [1, 1]} : vector<2x96xf32> to vector<2x32xf32>
    %21 = vector.extract_strided_slice %19 {offsets = [0, 0], sizes = [2, 32], strides = [1, 1]} : vector<2x96xf32> to vector<2x32xf32>
    %22 = arith.addf %20, %21 : vector<2x32xf32>
    %23 = arith.negf %22 : vector<2x32xf32>
    %24 = math.exp %23 : vector<2x32xf32>
    %cst_16 = arith.constant 1.000000e+00 : f32
    %25 = vector.broadcast %cst_16 : f32 to vector<2x32xf32>
    %26 = arith.addf %25, %24 : vector<2x32xf32>
    %27 = arith.divf %25, %26 : vector<2x32xf32>
    %28 = vector.extract_strided_slice %18 {offsets = [0, 32], sizes = [2, 32], strides = [1, 1]} : vector<2x96xf32> to vector<2x32xf32>
    %29 = vector.extract_strided_slice %19 {offsets = [0, 32], sizes = [2, 32], strides = [1, 1]} : vector<2x96xf32> to vector<2x32xf32>
    %30 = arith.addf %28, %29 : vector<2x32xf32>
    %31 = arith.negf %30 : vector<2x32xf32>
    %32 = math.exp %31 : vector<2x32xf32>
    %cst_17 = arith.constant 1.000000e+00 : f32
    %33 = vector.broadcast %cst_17 : f32 to vector<2x32xf32>
    %34 = arith.addf %33, %32 : vector<2x32xf32>
    %35 = arith.divf %33, %34 : vector<2x32xf32>
    %36 = vector.extract_strided_slice %18 {offsets = [0, 64], sizes = [2, 32], strides = [1, 1]} : vector<2x96xf32> to vector<2x32xf32>
    %37 = vector.extract_strided_slice %19 {offsets = [0, 64], sizes = [2, 32], strides = [1, 1]} : vector<2x96xf32> to vector<2x32xf32>
    %38 = arith.addf %37, %12 : vector<2x32xf32>
    %39 = arith.mulf %27, %38 : vector<2x32xf32>
    %40 = arith.addf %36, %39 : vector<2x32xf32>
    %41 = math.tanh %40 : vector<2x32xf32>
    %cst_18 = arith.constant 1.000000e+00 : f32
    %42 = vector.broadcast %cst_18 : f32 to vector<2x32xf32>
    %43 = arith.subf %42, %35 : vector<2x32xf32>
    %44 = arith.mulf %43, %41 : vector<2x32xf32>
    %45 = arith.mulf %35, %16 : vector<2x32xf32>
    %46 = arith.addf %44, %45 : vector<2x32xf32>
    %47 = vector.extract_strided_slice %9 {offsets = [14, 0], sizes = [2, 96], strides = [1, 1]} : vector<16x96xf32> to vector<2x96xf32>
    %cst_19 = arith.constant dense<0.000000e+00> : vector<2x96xf32>
    %48 = tpu.matmul %17, %2, %cst_19 {dimension_numbers = #tpu.dot_dimension_numbers<[1], [0], [0], [1], [0, 0, 1, 1], [], []>} : vector<2x32xf32>, vector<32x96xf32>, vector<2x96xf32> -> vector<2x96xf32>
    %49 = vector.extract_strided_slice %47 {offsets = [0, 0], sizes = [2, 32], strides = [1, 1]} : vector<2x96xf32> to vector<2x32xf32>
    %50 = vector.extract_strided_slice %48 {offsets = [0, 0], sizes = [2, 32], strides = [1, 1]} : vector<2x96xf32> to vector<2x32xf32>
    %51 = arith.addf %49, %50 : vector<2x32xf32>
    %52 = arith.negf %51 : vector<2x32xf32>
    %53 = math.exp %52 : vector<2x32xf32>
    %cst_20 = arith.constant 1.000000e+00 : f32
    %54 = vector.broadcast %cst_20 : f32 to vector<2x32xf32>
    %55 = arith.addf %54, %53 : vector<2x32xf32>
    %56 = arith.divf %54, %55 : vector<2x32xf32>
    %57 = vector.extract_strided_slice %47 {offsets = [0, 32], sizes = [2, 32], strides = [1, 1]} : vector<2x96xf32> to vector<2x32xf32>
    %58 = vector.extract_strided_slice %48 {offsets = [0, 32], sizes = [2, 32], strides = [1, 1]} : vector<2x96xf32> to vector<2x32xf32>
    %59 = arith.addf %57, %58 : vector<2x32xf32>
    %60 = arith.negf %59 : vector<2x32xf32>
    %61 = math.exp %60 : vector<2x32xf32>
    %cst_21 = arith.constant 1.000000e+00 : f32
    %62 = vector.broadcast %cst_21 : f32 to vector<2x32xf32>
    %63 = arith.addf %62, %61 : vector<2x32xf32>
    %64 = arith.divf %62, %63 : vector<2x32xf32>
    %65 = vector.extract_strided_slice %47 {offsets = [0, 64], sizes = [2, 32], strides = [1, 1]} : vector<2x96xf32> to vector<2x32xf32>
    %66 = vector.extract_strided_slice %48 {offsets = [0, 64], sizes = [2, 32], strides = [1, 1]} : vector<2x96xf32> to vector<2x32xf32>
    %67 = arith.addf %66, %15 : vector<2x32xf32>
    %68 = arith.mulf %56, %67 : vector<2x32xf32>
    %69 = arith.addf %65, %68 : vector<2x32xf32>
    %70 = math.tanh %69 : vector<2x32xf32>
    %cst_22 = arith.constant 1.000000e+00 : f32
    %71 = vector.broadcast %cst_22 : f32 to vector<2x32xf32>
    %72 = arith.subf %71, %64 : vector<2x32xf32>
    %73 = arith.mulf %72, %70 : vector<2x32xf32>
    %74 = arith.mulf %64, %17 : vector<2x32xf32>
    %75 = arith.addf %73, %74 : vector<2x32xf32>
    %c0_23 = arith.constant 0 : index
    %c0_24 = arith.constant 0 : index
    %76 = vector.load %arg12[%c0_23, %c0_24] : memref<16x32xf32, #tpu.memory_space<vmem>>, vector<2x32xf32>
    tpu.vector_store %arg12[%c0_23, %c0_24], %46 {strides = array<i32>} : memref<16x32xf32, #tpu.memory_space<vmem>>, vector<2x32xf32>,
    %c14 = arith.constant 14 : index
    %c0_25 = arith.constant 0 : index
    %77 = vector.load %arg13[%c14, %c0_25] : memref<16x32xf32, #tpu.memory_space<vmem>>, vector<2x32xf32>
    tpu.vector_store %arg13[%c14, %c0_25], %75 {strides = array<i32>} : memref<16x32xf32, #tpu.memory_space<vmem>>, vector<2x32xf32>,
    %78 = vector.extract_strided_slice %8 {offsets = [2, 0], sizes = [2, 96], strides = [1, 1]} : vector<16x96xf32> to vector<2x96xf32>
    %cst_26 = arith.constant dense<0.000000e+00> : vector<2x96xf32>
    %79 = tpu.matmul %46, %1, %cst_26 {dimension_numbers = #tpu.dot_dimension_numbers<[1], [0], [0], [1], [0, 0, 1, 1], [], []>} : vector<2x32xf32>, vector<32x96xf32>, vector<2x96xf32> -> vector<2x96xf32>
    %80 = vector.extract_strided_slice %78 {offsets = [0, 0], sizes = [2, 32], strides = [1, 1]} : vector<2x96xf32> to vector<2x32xf32>
    %81 = vector.extract_strided_slice %79 {offsets = [0, 0], sizes = [2, 32], strides = [1, 1]} : vector<2x96xf32> to vector<2x32xf32>
    %82 = arith.addf %80, %81 : vector<2x32xf32>
    %83 = arith.negf %82 : vector<2x32xf32>
    %84 = math.exp %83 : vector<2x32xf32>
    %cst_27 = arith.constant 1.000000e+00 : f32
    %85 = vector.broadcast %cst_27 : f32 to vector<2x32xf32>
    %86 = arith.addf %85, %84 : vector<2x32xf32>
    %87 = arith.divf %85, %86 : vector<2x32xf32>
    %88 = vector.extract_strided_slice %78 {offsets = [0, 32], sizes = [2, 32], strides = [1, 1]} : vector<2x96xf32> to vector<2x32xf32>
    %89 = vector.extract_strided_slice %79 {offsets = [0, 32], sizes = [2, 32], strides = [1, 1]} : vector<2x96xf32> to vector<2x32xf32>
    %90 = arith.addf %88, %89 : vector<2x32xf32>
    %91 = arith.negf %90 : vector<2x32xf32>
    %92 = math.exp %91 : vector<2x32xf32>
    %cst_28 = arith.constant 1.000000e+00 : f32
    %93 = vector.broadcast %cst_28 : f32 to vector<2x32xf32>
    %94 = arith.addf %93, %92 : vector<2x32xf32>
    %95 = arith.divf %93, %94 : vector<2x32xf32>
    %96 = vector.extract_strided_slice %78 {offsets = [0, 64], sizes = [2, 32], strides = [1, 1]} : vector<2x96xf32> to vector<2x32xf32>
    %97 = vector.extract_strided_slice %79 {offsets = [0, 64], sizes = [2, 32], strides = [1, 1]} : vector<2x96xf32> to vector<2x32xf32>
    %98 = arith.addf %97, %12 : vector<2x32xf32>
    %99 = arith.mulf %87, %98 : vector<2x32xf32>
    %100 = arith.addf %96, %99 : vector<2x32xf32>
    %101 = math.tanh %100 : vector<2x32xf32>
    %cst_29 = arith.constant 1.000000e+00 : f32
    %102 = vector.broadcast %cst_29 : f32 to vector<2x32xf32>
    %103 = arith.subf %102, %95 : vector<2x32xf32>
    %104 = arith.mulf %103, %101 : vector<2x32xf32>
    %105 = arith.mulf %95, %46 : vector<2x32xf32>
    %106 = arith.addf %104, %105 : vector<2x32xf32>
    %107 = vector.extract_strided_slice %9 {offsets = [12, 0], sizes = [2, 96], strides = [1, 1]} : vector<16x96xf32> to vector<2x96xf32>
    %cst_30 = arith.constant dense<0.000000e+00> : vector<2x96xf32>
    %108 = tpu.matmul %75, %2, %cst_30 {dimension_numbers = #tpu.dot_dimension_numbers<[1], [0], [0], [1], [0, 0, 1, 1], [], []>} : vector<2x32xf32>, vector<32x96xf32>, vector<2x96xf32> -> vector<2x96xf32>
    %109 = vector.extract_strided_slice %107 {offsets = [0, 0], sizes = [2, 32], strides = [1, 1]} : vector<2x96xf32> to vector<2x32xf32>
    %110 = vector.extract_strided_slice %108 {offsets = [0, 0], sizes = [2, 32], strides = [1, 1]} : vector<2x96xf32> to vector<2x32xf32>
    %111 = arith.addf %109, %110 : vector<2x32xf32>
    %112 = arith.negf %111 : vector<2x32xf32>
    %113 = math.exp %112 : vector<2x32xf32>
    %cst_31 = arith.constant 1.000000e+00 : f32
    %114 = vector.broadcast %cst_31 : f32 to vector<2x32xf32>
    %115 = arith.addf %114, %113 : vector<2x32xf32>
    %116 = arith.divf %114, %115 : vector<2x32xf32>
    %117 = vector.extract_strided_slice %107 {offsets = [0, 32], sizes = [2, 32], strides = [1, 1]} : vector<2x96xf32> to vector<2x32xf32>
    %118 = vector.extract_strided_slice %108 {offsets = [0, 32], sizes = [2, 32], strides = [1, 1]} : vector<2x96xf32> to vector<2x32xf32>
    %119 = arith.addf %117, %118 : vector<2x32xf32>
    %120 = arith.negf %119 : vector<2x32xf32>
    %121 = math.exp %120 : vector<2x32xf32>
    %cst_32 = arith.constant 1.000000e+00 : f32
    %122 = vector.broadcast %cst_32 : f32 to vector<2x32xf32>
    %123 = arith.addf %122, %121 : vector<2x32xf32>
    %124 = arith.divf %122, %123 : vector<2x32xf32>
    %125 = vector.extract_strided_slice %107 {offsets = [0, 64], sizes = [2, 32], strides = [1, 1]} : vector<2x96xf32> to vector<2x32xf32>
    %126 = vector.extract_strided_slice %108 {offsets = [0, 64], sizes = [2, 32], strides = [1, 1]} : vector<2x96xf32> to vector<2x32xf32>
    %127 = arith.addf %126, %15 : vector<2x32xf32>
    %128 = arith.mulf %116, %127 : vector<2x32xf32>
    %129 = arith.addf %125, %128 : vector<2x32xf32>
    %130 = math.tanh %129 : vector<2x32xf32>
    %cst_33 = arith.constant 1.000000e+00 : f32
    %131 = vector.broadcast %cst_33 : f32 to vector<2x32xf32>
    %132 = arith.subf %131, %124 : vector<2x32xf32>
    %133 = arith.mulf %132, %130 : vector<2x32xf32>
    %134 = arith.mulf %124, %75 : vector<2x32xf32>
    %135 = arith.addf %133, %134 : vector<2x32xf32>
    %c2 = arith.constant 2 : index
    %c0_34 = arith.constant 0 : index
    %136 = vector.load %arg12[%c2, %c0_34] : memref<16x32xf32, #tpu.memory_space<vmem>>, vector<2x32xf32>
    tpu.vector_store %arg12[%c2, %c0_34], %106 {strides = array<i32>} : memref<16x32xf32, #tpu.memory_space<vmem>>, vector<2x32xf32>,
    %c12 = arith.constant 12 : index
    %c0_35 = arith.constant 0 : index
    %137 = vector.load %arg13[%c12, %c0_35] : memref<16x32xf32, #tpu.memory_space<vmem>>, vector<2x32xf32>
    tpu.vector_store %arg13[%c12, %c0_35], %135 {strides = array<i32>} : memref<16x32xf32, #tpu.memory_space<vmem>>, vector<2x32xf32>,
    %138 = vector.extract_strided_slice %8 {offsets = [4, 0], sizes = [2, 96], strides = [1, 1]} : vector<16x96xf32> to vector<2x96xf32>
    %cst_36 = arith.constant dense<0.000000e+00> : vector<2x96xf32>
    %139 = tpu.matmul %106, %1, %cst_36 {dimension_numbers = #tpu.dot_dimension_numbers<[1], [0], [0], [1], [0, 0, 1, 1], [], []>} : vector<2x32xf32>, vector<32x96xf32>, vector<2x96xf32> -> vector<2x96xf32>
    %140 = vector.extract_strided_slice %138 {offsets = [0, 0], sizes = [2, 32], strides = [1, 1]} : vector<2x96xf32> to vector<2x32xf32>
    %141 = vector.extract_strided_slice %139 {offsets = [0, 0], sizes = [2, 32], strides = [1, 1]} : vector<2x96xf32> to vector<2x32xf32>
    %142 = arith.addf %140, %141 : vector<2x32xf32>
    %143 = arith.negf %142 : vector<2x32xf32>
    %144 = math.exp %143 : vector<2x32xf32>
    %cst_37 = arith.constant 1.000000e+00 : f32
    %145 = vector.broadcast %cst_37 : f32 to vector<2x32xf32>
    %146 = arith.addf %145, %144 : vector<2x32xf32>
    %147 = arith.divf %145, %146 : vector<2x32xf32>
    %148 = vector.extract_strided_slice %138 {offsets = [0, 32], sizes = [2, 32], strides = [1, 1]} : vector<2x96xf32> to vector<2x32xf32>
    %149 = vector.extract_strided_slice %139 {offsets = [0, 32], sizes = [2, 32], strides = [1, 1]} : vector<2x96xf32> to vector<2x32xf32>
    %150 = arith.addf %148, %149 : vector<2x32xf32>
    %151 = arith.negf %150 : vector<2x32xf32>
    %152 = math.exp %151 : vector<2x32xf32>
    %cst_38 = arith.constant 1.000000e+00 : f32
    %153 = vector.broadcast %cst_38 : f32 to vector<2x32xf32>
    %154 = arith.addf %153, %152 : vector<2x32xf32>
    %155 = arith.divf %153, %154 : vector<2x32xf32>
    %156 = vector.extract_strided_slice %138 {offsets = [0, 64], sizes = [2, 32], strides = [1, 1]} : vector<2x96xf32> to vector<2x32xf32>
    %157 = vector.extract_strided_slice %139 {offsets = [0, 64], sizes = [2, 32], strides = [1, 1]} : vector<2x96xf32> to vector<2x32xf32>
    %158 = arith.addf %157, %12 : vector<2x32xf32>
    %159 = arith.mulf %147, %158 : vector<2x32xf32>
    %160 = arith.addf %156, %159 : vector<2x32xf32>
    %161 = math.tanh %160 : vector<2x32xf32>
    %cst_39 = arith.constant 1.000000e+00 : f32
    %162 = vector.broadcast %cst_39 : f32 to vector<2x32xf32>
    %163 = arith.subf %162, %155 : vector<2x32xf32>
    %164 = arith.mulf %163, %161 : vector<2x32xf32>
    %165 = arith.mulf %155, %106 : vector<2x32xf32>
    %166 = arith.addf %164, %165 : vector<2x32xf32>
    %167 = vector.extract_strided_slice %9 {offsets = [10, 0], sizes = [2, 96], strides = [1, 1]} : vector<16x96xf32> to vector<2x96xf32>
    %cst_40 = arith.constant dense<0.000000e+00> : vector<2x96xf32>
    %168 = tpu.matmul %135, %2, %cst_40 {dimension_numbers = #tpu.dot_dimension_numbers<[1], [0], [0], [1], [0, 0, 1, 1], [], []>} : vector<2x32xf32>, vector<32x96xf32>, vector<2x96xf32> -> vector<2x96xf32>
    %169 = vector.extract_strided_slice %167 {offsets = [0, 0], sizes = [2, 32], strides = [1, 1]} : vector<2x96xf32> to vector<2x32xf32>
    %170 = vector.extract_strided_slice %168 {offsets = [0, 0], sizes = [2, 32], strides = [1, 1]} : vector<2x96xf32> to vector<2x32xf32>
    %171 = arith.addf %169, %170 : vector<2x32xf32>
    %172 = arith.negf %171 : vector<2x32xf32>
    %173 = math.exp %172 : vector<2x32xf32>
    %cst_41 = arith.constant 1.000000e+00 : f32
    %174 = vector.broadcast %cst_41 : f32 to vector<2x32xf32>
    %175 = arith.addf %174, %173 : vector<2x32xf32>
    %176 = arith.divf %174, %175 : vector<2x32xf32>
    %177 = vector.extract_strided_slice %167 {offsets = [0, 32], sizes = [2, 32], strides = [1, 1]} : vector<2x96xf32> to vector<2x32xf32>
    %178 = vector.extract_strided_slice %168 {offsets = [0, 32], sizes = [2, 32], strides = [1, 1]} : vector<2x96xf32> to vector<2x32xf32>
    %179 = arith.addf %177, %178 : vector<2x32xf32>
    %180 = arith.negf %179 : vector<2x32xf32>
    %181 = math.exp %180 : vector<2x32xf32>
    %cst_42 = arith.constant 1.000000e+00 : f32
    %182 = vector.broadcast %cst_42 : f32 to vector<2x32xf32>
    %183 = arith.addf %182, %181 : vector<2x32xf32>
    %184 = arith.divf %182, %183 : vector<2x32xf32>
    %185 = vector.extract_strided_slice %167 {offsets = [0, 64], sizes = [2, 32], strides = [1, 1]} : vector<2x96xf32> to vector<2x32xf32>
    %186 = vector.extract_strided_slice %168 {offsets = [0, 64], sizes = [2, 32], strides = [1, 1]} : vector<2x96xf32> to vector<2x32xf32>
    %187 = arith.addf %186, %15 : vector<2x32xf32>
    %188 = arith.mulf %176, %187 : vector<2x32xf32>
    %189 = arith.addf %185, %188 : vector<2x32xf32>
    %190 = math.tanh %189 : vector<2x32xf32>
    %cst_43 = arith.constant 1.000000e+00 : f32
    %191 = vector.broadcast %cst_43 : f32 to vector<2x32xf32>
    %192 = arith.subf %191, %184 : vector<2x32xf32>
    %193 = arith.mulf %192, %190 : vector<2x32xf32>
    %194 = arith.mulf %184, %135 : vector<2x32xf32>
    %195 = arith.addf %193, %194 : vector<2x32xf32>
    %c4 = arith.constant 4 : index
    %c0_44 = arith.constant 0 : index
    %196 = vector.load %arg12[%c4, %c0_44] : memref<16x32xf32, #tpu.memory_space<vmem>>, vector<2x32xf32>
    tpu.vector_store %arg12[%c4, %c0_44], %166 {strides = array<i32>} : memref<16x32xf32, #tpu.memory_space<vmem>>, vector<2x32xf32>,
    %c10 = arith.constant 10 : index
    %c0_45 = arith.constant 0 : index
    %197 = vector.load %arg13[%c10, %c0_45] : memref<16x32xf32, #tpu.memory_space<vmem>>, vector<2x32xf32>
    tpu.vector_store %arg13[%c10, %c0_45], %195 {strides = array<i32>} : memref<16x32xf32, #tpu.memory_space<vmem>>, vector<2x32xf32>,
    %198 = vector.extract_strided_slice %8 {offsets = [6, 0], sizes = [2, 96], strides = [1, 1]} : vector<16x96xf32> to vector<2x96xf32>
    %cst_46 = arith.constant dense<0.000000e+00> : vector<2x96xf32>
    %199 = tpu.matmul %166, %1, %cst_46 {dimension_numbers = #tpu.dot_dimension_numbers<[1], [0], [0], [1], [0, 0, 1, 1], [], []>} : vector<2x32xf32>, vector<32x96xf32>, vector<2x96xf32> -> vector<2x96xf32>
    %200 = vector.extract_strided_slice %198 {offsets = [0, 0], sizes = [2, 32], strides = [1, 1]} : vector<2x96xf32> to vector<2x32xf32>
    %201 = vector.extract_strided_slice %199 {offsets = [0, 0], sizes = [2, 32], strides = [1, 1]} : vector<2x96xf32> to vector<2x32xf32>
    %202 = arith.addf %200, %201 : vector<2x32xf32>
    %203 = arith.negf %202 : vector<2x32xf32>
    %204 = math.exp %203 : vector<2x32xf32>
    %cst_47 = arith.constant 1.000000e+00 : f32
    %205 = vector.broadcast %cst_47 : f32 to vector<2x32xf32>
    %206 = arith.addf %205, %204 : vector<2x32xf32>
    %207 = arith.divf %205, %206 : vector<2x32xf32>
    %208 = vector.extract_strided_slice %198 {offsets = [0, 32], sizes = [2, 32], strides = [1, 1]} : vector<2x96xf32> to vector<2x32xf32>
    %209 = vector.extract_strided_slice %199 {offsets = [0, 32], sizes = [2, 32], strides = [1, 1]} : vector<2x96xf32> to vector<2x32xf32>
    %210 = arith.addf %208, %209 : vector<2x32xf32>
    %211 = arith.negf %210 : vector<2x32xf32>
    %212 = math.exp %211 : vector<2x32xf32>
    %cst_48 = arith.constant 1.000000e+00 : f32
    %213 = vector.broadcast %cst_48 : f32 to vector<2x32xf32>
    %214 = arith.addf %213, %212 : vector<2x32xf32>
    %215 = arith.divf %213, %214 : vector<2x32xf32>
    %216 = vector.extract_strided_slice %198 {offsets = [0, 64], sizes = [2, 32], strides = [1, 1]} : vector<2x96xf32> to vector<2x32xf32>
    %217 = vector.extract_strided_slice %199 {offsets = [0, 64], sizes = [2, 32], strides = [1, 1]} : vector<2x96xf32> to vector<2x32xf32>
    %218 = arith.addf %217, %12 : vector<2x32xf32>
    %219 = arith.mulf %207, %218 : vector<2x32xf32>
    %220 = arith.addf %216, %219 : vector<2x32xf32>
    %221 = math.tanh %220 : vector<2x32xf32>
    %cst_49 = arith.constant 1.000000e+00 : f32
    %222 = vector.broadcast %cst_49 : f32 to vector<2x32xf32>
    %223 = arith.subf %222, %215 : vector<2x32xf32>
    %224 = arith.mulf %223, %221 : vector<2x32xf32>
    %225 = arith.mulf %215, %166 : vector<2x32xf32>
    %226 = arith.addf %224, %225 : vector<2x32xf32>
    %227 = vector.extract_strided_slice %9 {offsets = [8, 0], sizes = [2, 96], strides = [1, 1]} : vector<16x96xf32> to vector<2x96xf32>
    %cst_50 = arith.constant dense<0.000000e+00> : vector<2x96xf32>
    %228 = tpu.matmul %195, %2, %cst_50 {dimension_numbers = #tpu.dot_dimension_numbers<[1], [0], [0], [1], [0, 0, 1, 1], [], []>} : vector<2x32xf32>, vector<32x96xf32>, vector<2x96xf32> -> vector<2x96xf32>
    %229 = vector.extract_strided_slice %227 {offsets = [0, 0], sizes = [2, 32], strides = [1, 1]} : vector<2x96xf32> to vector<2x32xf32>
    %230 = vector.extract_strided_slice %228 {offsets = [0, 0], sizes = [2, 32], strides = [1, 1]} : vector<2x96xf32> to vector<2x32xf32>
    %231 = arith.addf %229, %230 : vector<2x32xf32>
    %232 = arith.negf %231 : vector<2x32xf32>
    %233 = math.exp %232 : vector<2x32xf32>
    %cst_51 = arith.constant 1.000000e+00 : f32
    %234 = vector.broadcast %cst_51 : f32 to vector<2x32xf32>
    %235 = arith.addf %234, %233 : vector<2x32xf32>
    %236 = arith.divf %234, %235 : vector<2x32xf32>
    %237 = vector.extract_strided_slice %227 {offsets = [0, 32], sizes = [2, 32], strides = [1, 1]} : vector<2x96xf32> to vector<2x32xf32>
    %238 = vector.extract_strided_slice %228 {offsets = [0, 32], sizes = [2, 32], strides = [1, 1]} : vector<2x96xf32> to vector<2x32xf32>
    %239 = arith.addf %237, %238 : vector<2x32xf32>
    %240 = arith.negf %239 : vector<2x32xf32>
    %241 = math.exp %240 : vector<2x32xf32>
    %cst_52 = arith.constant 1.000000e+00 : f32
    %242 = vector.broadcast %cst_52 : f32 to vector<2x32xf32>
    %243 = arith.addf %242, %241 : vector<2x32xf32>
    %244 = arith.divf %242, %243 : vector<2x32xf32>
    %245 = vector.extract_strided_slice %227 {offsets = [0, 64], sizes = [2, 32], strides = [1, 1]} : vector<2x96xf32> to vector<2x32xf32>
    %246 = vector.extract_strided_slice %228 {offsets = [0, 64], sizes = [2, 32], strides = [1, 1]} : vector<2x96xf32> to vector<2x32xf32>
    %247 = arith.addf %246, %15 : vector<2x32xf32>
    %248 = arith.mulf %236, %247 : vector<2x32xf32>
    %249 = arith.addf %245, %248 : vector<2x32xf32>
    %250 = math.tanh %249 : vector<2x32xf32>
    %cst_53 = arith.constant 1.000000e+00 : f32
    %251 = vector.broadcast %cst_53 : f32 to vector<2x32xf32>
    %252 = arith.subf %251, %244 : vector<2x32xf32>
    %253 = arith.mulf %252, %250 : vector<2x32xf32>
    %254 = arith.mulf %244, %195 : vector<2x32xf32>
    %255 = arith.addf %253, %254 : vector<2x32xf32>
    %c6 = arith.constant 6 : index
    %c0_54 = arith.constant 0 : index
    %256 = vector.load %arg12[%c6, %c0_54] : memref<16x32xf32, #tpu.memory_space<vmem>>, vector<2x32xf32>
    tpu.vector_store %arg12[%c6, %c0_54], %226 {strides = array<i32>} : memref<16x32xf32, #tpu.memory_space<vmem>>, vector<2x32xf32>,
    %c8 = arith.constant 8 : index
    %c0_55 = arith.constant 0 : index
    %257 = vector.load %arg13[%c8, %c0_55] : memref<16x32xf32, #tpu.memory_space<vmem>>, vector<2x32xf32>
    tpu.vector_store %arg13[%c8, %c0_55], %255 {strides = array<i32>} : memref<16x32xf32, #tpu.memory_space<vmem>>, vector<2x32xf32>,
    %258 = vector.extract_strided_slice %8 {offsets = [8, 0], sizes = [2, 96], strides = [1, 1]} : vector<16x96xf32> to vector<2x96xf32>
    %cst_56 = arith.constant dense<0.000000e+00> : vector<2x96xf32>
    %259 = tpu.matmul %226, %1, %cst_56 {dimension_numbers = #tpu.dot_dimension_numbers<[1], [0], [0], [1], [0, 0, 1, 1], [], []>} : vector<2x32xf32>, vector<32x96xf32>, vector<2x96xf32> -> vector<2x96xf32>
    %260 = vector.extract_strided_slice %258 {offsets = [0, 0], sizes = [2, 32], strides = [1, 1]} : vector<2x96xf32> to vector<2x32xf32>
    %261 = vector.extract_strided_slice %259 {offsets = [0, 0], sizes = [2, 32], strides = [1, 1]} : vector<2x96xf32> to vector<2x32xf32>
    %262 = arith.addf %260, %261 : vector<2x32xf32>
    %263 = arith.negf %262 : vector<2x32xf32>
    %264 = math.exp %263 : vector<2x32xf32>
    %cst_57 = arith.constant 1.000000e+00 : f32
    %265 = vector.broadcast %cst_57 : f32 to vector<2x32xf32>
    %266 = arith.addf %265, %264 : vector<2x32xf32>
    %267 = arith.divf %265, %266 : vector<2x32xf32>
    %268 = vector.extract_strided_slice %258 {offsets = [0, 32], sizes = [2, 32], strides = [1, 1]} : vector<2x96xf32> to vector<2x32xf32>
    %269 = vector.extract_strided_slice %259 {offsets = [0, 32], sizes = [2, 32], strides = [1, 1]} : vector<2x96xf32> to vector<2x32xf32>
    %270 = arith.addf %268, %269 : vector<2x32xf32>
    %271 = arith.negf %270 : vector<2x32xf32>
    %272 = math.exp %271 : vector<2x32xf32>
    %cst_58 = arith.constant 1.000000e+00 : f32
    %273 = vector.broadcast %cst_58 : f32 to vector<2x32xf32>
    %274 = arith.addf %273, %272 : vector<2x32xf32>
    %275 = arith.divf %273, %274 : vector<2x32xf32>
    %276 = vector.extract_strided_slice %258 {offsets = [0, 64], sizes = [2, 32], strides = [1, 1]} : vector<2x96xf32> to vector<2x32xf32>
    %277 = vector.extract_strided_slice %259 {offsets = [0, 64], sizes = [2, 32], strides = [1, 1]} : vector<2x96xf32> to vector<2x32xf32>
    %278 = arith.addf %277, %12 : vector<2x32xf32>
    %279 = arith.mulf %267, %278 : vector<2x32xf32>
    %280 = arith.addf %276, %279 : vector<2x32xf32>
    %281 = math.tanh %280 : vector<2x32xf32>
    %cst_59 = arith.constant 1.000000e+00 : f32
    %282 = vector.broadcast %cst_59 : f32 to vector<2x32xf32>
    %283 = arith.subf %282, %275 : vector<2x32xf32>
    %284 = arith.mulf %283, %281 : vector<2x32xf32>
    %285 = arith.mulf %275, %226 : vector<2x32xf32>
    %286 = arith.addf %284, %285 : vector<2x32xf32>
    %287 = vector.extract_strided_slice %9 {offsets = [6, 0], sizes = [2, 96], strides = [1, 1]} : vector<16x96xf32> to vector<2x96xf32>
    %cst_60 = arith.constant dense<0.000000e+00> : vector<2x96xf32>
    %288 = tpu.matmul %255, %2, %cst_60 {dimension_numbers = #tpu.dot_dimension_numbers<[1], [0], [0], [1], [0, 0, 1, 1], [], []>} : vector<2x32xf32>, vector<32x96xf32>, vector<2x96xf32> -> vector<2x96xf32>
    %289 = vector.extract_strided_slice %287 {offsets = [0, 0], sizes = [2, 32], strides = [1, 1]} : vector<2x96xf32> to vector<2x32xf32>
    %290 = vector.extract_strided_slice %288 {offsets = [0, 0], sizes = [2, 32], strides = [1, 1]} : vector<2x96xf32> to vector<2x32xf32>
    %291 = arith.addf %289, %290 : vector<2x32xf32>
    %292 = arith.negf %291 : vector<2x32xf32>
    %293 = math.exp %292 : vector<2x32xf32>
    %cst_61 = arith.constant 1.000000e+00 : f32
    %294 = vector.broadcast %cst_61 : f32 to vector<2x32xf32>
    %295 = arith.addf %294, %293 : vector<2x32xf32>
    %296 = arith.divf %294, %295 : vector<2x32xf32>
    %297 = vector.extract_strided_slice %287 {offsets = [0, 32], sizes = [2, 32], strides = [1, 1]} : vector<2x96xf32> to vector<2x32xf32>
    %298 = vector.extract_strided_slice %288 {offsets = [0, 32], sizes = [2, 32], strides = [1, 1]} : vector<2x96xf32> to vector<2x32xf32>
    %299 = arith.addf %297, %298 : vector<2x32xf32>
    %300 = arith.negf %299 : vector<2x32xf32>
    %301 = math.exp %300 : vector<2x32xf32>
    %cst_62 = arith.constant 1.000000e+00 : f32
    %302 = vector.broadcast %cst_62 : f32 to vector<2x32xf32>
    %303 = arith.addf %302, %301 : vector<2x32xf32>
    %304 = arith.divf %302, %303 : vector<2x32xf32>
    %305 = vector.extract_strided_slice %287 {offsets = [0, 64], sizes = [2, 32], strides = [1, 1]} : vector<2x96xf32> to vector<2x32xf32>
    %306 = vector.extract_strided_slice %288 {offsets = [0, 64], sizes = [2, 32], strides = [1, 1]} : vector<2x96xf32> to vector<2x32xf32>
    %307 = arith.addf %306, %15 : vector<2x32xf32>
    %308 = arith.mulf %296, %307 : vector<2x32xf32>
    %309 = arith.addf %305, %308 : vector<2x32xf32>
    %310 = math.tanh %309 : vector<2x32xf32>
    %cst_63 = arith.constant 1.000000e+00 : f32
    %311 = vector.broadcast %cst_63 : f32 to vector<2x32xf32>
    %312 = arith.subf %311, %304 : vector<2x32xf32>
    %313 = arith.mulf %312, %310 : vector<2x32xf32>
    %314 = arith.mulf %304, %255 : vector<2x32xf32>
    %315 = arith.addf %313, %314 : vector<2x32xf32>
    %c8_64 = arith.constant 8 : index
    %c0_65 = arith.constant 0 : index
    %316 = vector.load %arg12[%c8_64, %c0_65] : memref<16x32xf32, #tpu.memory_space<vmem>>, vector<2x32xf32>
    tpu.vector_store %arg12[%c8_64, %c0_65], %286 {strides = array<i32>} : memref<16x32xf32, #tpu.memory_space<vmem>>, vector<2x32xf32>,
    %c6_66 = arith.constant 6 : index
    %c0_67 = arith.constant 0 : index
    %317 = vector.load %arg13[%c6_66, %c0_67] : memref<16x32xf32, #tpu.memory_space<vmem>>, vector<2x32xf32>
    tpu.vector_store %arg13[%c6_66, %c0_67], %315 {strides = array<i32>} : memref<16x32xf32, #tpu.memory_space<vmem>>, vector<2x32xf32>,
    %318 = vector.extract_strided_slice %8 {offsets = [10, 0], sizes = [2, 96], strides = [1, 1]} : vector<16x96xf32> to vector<2x96xf32>
    %cst_68 = arith.constant dense<0.000000e+00> : vector<2x96xf32>
    %319 = tpu.matmul %286, %1, %cst_68 {dimension_numbers = #tpu.dot_dimension_numbers<[1], [0], [0], [1], [0, 0, 1, 1], [], []>} : vector<2x32xf32>, vector<32x96xf32>, vector<2x96xf32> -> vector<2x96xf32>
    %320 = vector.extract_strided_slice %318 {offsets = [0, 0], sizes = [2, 32], strides = [1, 1]} : vector<2x96xf32> to vector<2x32xf32>
    %321 = vector.extract_strided_slice %319 {offsets = [0, 0], sizes = [2, 32], strides = [1, 1]} : vector<2x96xf32> to vector<2x32xf32>
    %322 = arith.addf %320, %321 : vector<2x32xf32>
    %323 = arith.negf %322 : vector<2x32xf32>
    %324 = math.exp %323 : vector<2x32xf32>
    %cst_69 = arith.constant 1.000000e+00 : f32
    %325 = vector.broadcast %cst_69 : f32 to vector<2x32xf32>
    %326 = arith.addf %325, %324 : vector<2x32xf32>
    %327 = arith.divf %325, %326 : vector<2x32xf32>
    %328 = vector.extract_strided_slice %318 {offsets = [0, 32], sizes = [2, 32], strides = [1, 1]} : vector<2x96xf32> to vector<2x32xf32>
    %329 = vector.extract_strided_slice %319 {offsets = [0, 32], sizes = [2, 32], strides = [1, 1]} : vector<2x96xf32> to vector<2x32xf32>
    %330 = arith.addf %328, %329 : vector<2x32xf32>
    %331 = arith.negf %330 : vector<2x32xf32>
    %332 = math.exp %331 : vector<2x32xf32>
    %cst_70 = arith.constant 1.000000e+00 : f32
    %333 = vector.broadcast %cst_70 : f32 to vector<2x32xf32>
    %334 = arith.addf %333, %332 : vector<2x32xf32>
    %335 = arith.divf %333, %334 : vector<2x32xf32>
    %336 = vector.extract_strided_slice %318 {offsets = [0, 64], sizes = [2, 32], strides = [1, 1]} : vector<2x96xf32> to vector<2x32xf32>
    %337 = vector.extract_strided_slice %319 {offsets = [0, 64], sizes = [2, 32], strides = [1, 1]} : vector<2x96xf32> to vector<2x32xf32>
    %338 = arith.addf %337, %12 : vector<2x32xf32>
    %339 = arith.mulf %327, %338 : vector<2x32xf32>
    %340 = arith.addf %336, %339 : vector<2x32xf32>
    %341 = math.tanh %340 : vector<2x32xf32>
    %cst_71 = arith.constant 1.000000e+00 : f32
    %342 = vector.broadcast %cst_71 : f32 to vector<2x32xf32>
    %343 = arith.subf %342, %335 : vector<2x32xf32>
    %344 = arith.mulf %343, %341 : vector<2x32xf32>
    %345 = arith.mulf %335, %286 : vector<2x32xf32>
    %346 = arith.addf %344, %345 : vector<2x32xf32>
    %347 = vector.extract_strided_slice %9 {offsets = [4, 0], sizes = [2, 96], strides = [1, 1]} : vector<16x96xf32> to vector<2x96xf32>
    %cst_72 = arith.constant dense<0.000000e+00> : vector<2x96xf32>
    %348 = tpu.matmul %315, %2, %cst_72 {dimension_numbers = #tpu.dot_dimension_numbers<[1], [0], [0], [1], [0, 0, 1, 1], [], []>} : vector<2x32xf32>, vector<32x96xf32>, vector<2x96xf32> -> vector<2x96xf32>
    %349 = vector.extract_strided_slice %347 {offsets = [0, 0], sizes = [2, 32], strides = [1, 1]} : vector<2x96xf32> to vector<2x32xf32>
    %350 = vector.extract_strided_slice %348 {offsets = [0, 0], sizes = [2, 32], strides = [1, 1]} : vector<2x96xf32> to vector<2x32xf32>
    %351 = arith.addf %349, %350 : vector<2x32xf32>
    %352 = arith.negf %351 : vector<2x32xf32>
    %353 = math.exp %352 : vector<2x32xf32>
    %cst_73 = arith.constant 1.000000e+00 : f32
    %354 = vector.broadcast %cst_73 : f32 to vector<2x32xf32>
    %355 = arith.addf %354, %353 : vector<2x32xf32>
    %356 = arith.divf %354, %355 : vector<2x32xf32>
    %357 = vector.extract_strided_slice %347 {offsets = [0, 32], sizes = [2, 32], strides = [1, 1]} : vector<2x96xf32> to vector<2x32xf32>
    %358 = vector.extract_strided_slice %348 {offsets = [0, 32], sizes = [2, 32], strides = [1, 1]} : vector<2x96xf32> to vector<2x32xf32>
    %359 = arith.addf %357, %358 : vector<2x32xf32>
    %360 = arith.negf %359 : vector<2x32xf32>
    %361 = math.exp %360 : vector<2x32xf32>
    %cst_74 = arith.constant 1.000000e+00 : f32
    %362 = vector.broadcast %cst_74 : f32 to vector<2x32xf32>
    %363 = arith.addf %362, %361 : vector<2x32xf32>
    %364 = arith.divf %362, %363 : vector<2x32xf32>
    %365 = vector.extract_strided_slice %347 {offsets = [0, 64], sizes = [2, 32], strides = [1, 1]} : vector<2x96xf32> to vector<2x32xf32>
    %366 = vector.extract_strided_slice %348 {offsets = [0, 64], sizes = [2, 32], strides = [1, 1]} : vector<2x96xf32> to vector<2x32xf32>
    %367 = arith.addf %366, %15 : vector<2x32xf32>
    %368 = arith.mulf %356, %367 : vector<2x32xf32>
    %369 = arith.addf %365, %368 : vector<2x32xf32>
    %370 = math.tanh %369 : vector<2x32xf32>
    %cst_75 = arith.constant 1.000000e+00 : f32
    %371 = vector.broadcast %cst_75 : f32 to vector<2x32xf32>
    %372 = arith.subf %371, %364 : vector<2x32xf32>
    %373 = arith.mulf %372, %370 : vector<2x32xf32>
    %374 = arith.mulf %364, %315 : vector<2x32xf32>
    %375 = arith.addf %373, %374 : vector<2x32xf32>
    %c10_76 = arith.constant 10 : index
    %c0_77 = arith.constant 0 : index
    %376 = vector.load %arg12[%c10_76, %c0_77] : memref<16x32xf32, #tpu.memory_space<vmem>>, vector<2x32xf32>
    tpu.vector_store %arg12[%c10_76, %c0_77], %346 {strides = array<i32>} : memref<16x32xf32, #tpu.memory_space<vmem>>, vector<2x32xf32>,
    %c4_78 = arith.constant 4 : index
    %c0_79 = arith.constant 0 : index
    %377 = vector.load %arg13[%c4_78, %c0_79] : memref<16x32xf32, #tpu.memory_space<vmem>>, vector<2x32xf32>
    tpu.vector_store %arg13[%c4_78, %c0_79], %375 {strides = array<i32>} : memref<16x32xf32, #tpu.memory_space<vmem>>, vector<2x32xf32>,
    %378 = vector.extract_strided_slice %8 {offsets = [12, 0], sizes = [2, 96], strides = [1, 1]} : vector<16x96xf32> to vector<2x96xf32>
    %cst_80 = arith.constant dense<0.000000e+00> : vector<2x96xf32>
    %379 = tpu.matmul %346, %1, %cst_80 {dimension_numbers = #tpu.dot_dimension_numbers<[1], [0], [0], [1], [0, 0, 1, 1], [], []>} : vector<2x32xf32>, vector<32x96xf32>, vector<2x96xf32> -> vector<2x96xf32>
    %380 = vector.extract_strided_slice %378 {offsets = [0, 0], sizes = [2, 32], strides = [1, 1]} : vector<2x96xf32> to vector<2x32xf32>
    %381 = vector.extract_strided_slice %379 {offsets = [0, 0], sizes = [2, 32], strides = [1, 1]} : vector<2x96xf32> to vector<2x32xf32>
    %382 = arith.addf %380, %381 : vector<2x32xf32>
    %383 = arith.negf %382 : vector<2x32xf32>
    %384 = math.exp %383 : vector<2x32xf32>
    %cst_81 = arith.constant 1.000000e+00 : f32
    %385 = vector.broadcast %cst_81 : f32 to vector<2x32xf32>
    %386 = arith.addf %385, %384 : vector<2x32xf32>
    %387 = arith.divf %385, %386 : vector<2x32xf32>
    %388 = vector.extract_strided_slice %378 {offsets = [0, 32], sizes = [2, 32], strides = [1, 1]} : vector<2x96xf32> to vector<2x32xf32>
    %389 = vector.extract_strided_slice %379 {offsets = [0, 32], sizes = [2, 32], strides = [1, 1]} : vector<2x96xf32> to vector<2x32xf32>
    %390 = arith.addf %388, %389 : vector<2x32xf32>
    %391 = arith.negf %390 : vector<2x32xf32>
    %392 = math.exp %391 : vector<2x32xf32>
    %cst_82 = arith.constant 1.000000e+00 : f32
    %393 = vector.broadcast %cst_82 : f32 to vector<2x32xf32>
    %394 = arith.addf %393, %392 : vector<2x32xf32>
    %395 = arith.divf %393, %394 : vector<2x32xf32>
    %396 = vector.extract_strided_slice %378 {offsets = [0, 64], sizes = [2, 32], strides = [1, 1]} : vector<2x96xf32> to vector<2x32xf32>
    %397 = vector.extract_strided_slice %379 {offsets = [0, 64], sizes = [2, 32], strides = [1, 1]} : vector<2x96xf32> to vector<2x32xf32>
    %398 = arith.addf %397, %12 : vector<2x32xf32>
    %399 = arith.mulf %387, %398 : vector<2x32xf32>
    %400 = arith.addf %396, %399 : vector<2x32xf32>
    %401 = math.tanh %400 : vector<2x32xf32>
    %cst_83 = arith.constant 1.000000e+00 : f32
    %402 = vector.broadcast %cst_83 : f32 to vector<2x32xf32>
    %403 = arith.subf %402, %395 : vector<2x32xf32>
    %404 = arith.mulf %403, %401 : vector<2x32xf32>
    %405 = arith.mulf %395, %346 : vector<2x32xf32>
    %406 = arith.addf %404, %405 : vector<2x32xf32>
    %407 = vector.extract_strided_slice %9 {offsets = [2, 0], sizes = [2, 96], strides = [1, 1]} : vector<16x96xf32> to vector<2x96xf32>
    %cst_84 = arith.constant dense<0.000000e+00> : vector<2x96xf32>
    %408 = tpu.matmul %375, %2, %cst_84 {dimension_numbers = #tpu.dot_dimension_numbers<[1], [0], [0], [1], [0, 0, 1, 1], [], []>} : vector<2x32xf32>, vector<32x96xf32>, vector<2x96xf32> -> vector<2x96xf32>
    %409 = vector.extract_strided_slice %407 {offsets = [0, 0], sizes = [2, 32], strides = [1, 1]} : vector<2x96xf32> to vector<2x32xf32>
    %410 = vector.extract_strided_slice %408 {offsets = [0, 0], sizes = [2, 32], strides = [1, 1]} : vector<2x96xf32> to vector<2x32xf32>
    %411 = arith.addf %409, %410 : vector<2x32xf32>
    %412 = arith.negf %411 : vector<2x32xf32>
    %413 = math.exp %412 : vector<2x32xf32>
    %cst_85 = arith.constant 1.000000e+00 : f32
    %414 = vector.broadcast %cst_85 : f32 to vector<2x32xf32>
    %415 = arith.addf %414, %413 : vector<2x32xf32>
    %416 = arith.divf %414, %415 : vector<2x32xf32>
    %417 = vector.extract_strided_slice %407 {offsets = [0, 32], sizes = [2, 32], strides = [1, 1]} : vector<2x96xf32> to vector<2x32xf32>
    %418 = vector.extract_strided_slice %408 {offsets = [0, 32], sizes = [2, 32], strides = [1, 1]} : vector<2x96xf32> to vector<2x32xf32>
    %419 = arith.addf %417, %418 : vector<2x32xf32>
    %420 = arith.negf %419 : vector<2x32xf32>
    %421 = math.exp %420 : vector<2x32xf32>
    %cst_86 = arith.constant 1.000000e+00 : f32
    %422 = vector.broadcast %cst_86 : f32 to vector<2x32xf32>
    %423 = arith.addf %422, %421 : vector<2x32xf32>
    %424 = arith.divf %422, %423 : vector<2x32xf32>
    %425 = vector.extract_strided_slice %407 {offsets = [0, 64], sizes = [2, 32], strides = [1, 1]} : vector<2x96xf32> to vector<2x32xf32>
    %426 = vector.extract_strided_slice %408 {offsets = [0, 64], sizes = [2, 32], strides = [1, 1]} : vector<2x96xf32> to vector<2x32xf32>
    %427 = arith.addf %426, %15 : vector<2x32xf32>
    %428 = arith.mulf %416, %427 : vector<2x32xf32>
    %429 = arith.addf %425, %428 : vector<2x32xf32>
    %430 = math.tanh %429 : vector<2x32xf32>
    %cst_87 = arith.constant 1.000000e+00 : f32
    %431 = vector.broadcast %cst_87 : f32 to vector<2x32xf32>
    %432 = arith.subf %431, %424 : vector<2x32xf32>
    %433 = arith.mulf %432, %430 : vector<2x32xf32>
    %434 = arith.mulf %424, %375 : vector<2x32xf32>
    %435 = arith.addf %433, %434 : vector<2x32xf32>
    %c12_88 = arith.constant 12 : index
    %c0_89 = arith.constant 0 : index
    %436 = vector.load %arg12[%c12_88, %c0_89] : memref<16x32xf32, #tpu.memory_space<vmem>>, vector<2x32xf32>
    tpu.vector_store %arg12[%c12_88, %c0_89], %406 {strides = array<i32>} : memref<16x32xf32, #tpu.memory_space<vmem>>, vector<2x32xf32>,
    %c2_90 = arith.constant 2 : index
    %c0_91 = arith.constant 0 : index
    %437 = vector.load %arg13[%c2_90, %c0_91] : memref<16x32xf32, #tpu.memory_space<vmem>>, vector<2x32xf32>
    tpu.vector_store %arg13[%c2_90, %c0_91], %435 {strides = array<i32>} : memref<16x32xf32, #tpu.memory_space<vmem>>, vector<2x32xf32>,
    %438 = vector.extract_strided_slice %8 {offsets = [14, 0], sizes = [2, 96], strides = [1, 1]} : vector<16x96xf32> to vector<2x96xf32>
    %cst_92 = arith.constant dense<0.000000e+00> : vector<2x96xf32>
    %439 = tpu.matmul %406, %1, %cst_92 {dimension_numbers = #tpu.dot_dimension_numbers<[1], [0], [0], [1], [0, 0, 1, 1], [], []>} : vector<2x32xf32>, vector<32x96xf32>, vector<2x96xf32> -> vector<2x96xf32>
    %440 = vector.extract_strided_slice %438 {offsets = [0, 0], sizes = [2, 32], strides = [1, 1]} : vector<2x96xf32> to vector<2x32xf32>
    %441 = vector.extract_strided_slice %439 {offsets = [0, 0], sizes = [2, 32], strides = [1, 1]} : vector<2x96xf32> to vector<2x32xf32>
    %442 = arith.addf %440, %441 : vector<2x32xf32>
    %443 = arith.negf %442 : vector<2x32xf32>
    %444 = math.exp %443 : vector<2x32xf32>
    %cst_93 = arith.constant 1.000000e+00 : f32
    %445 = vector.broadcast %cst_93 : f32 to vector<2x32xf32>
    %446 = arith.addf %445, %444 : vector<2x32xf32>
    %447 = arith.divf %445, %446 : vector<2x32xf32>
    %448 = vector.extract_strided_slice %438 {offsets = [0, 32], sizes = [2, 32], strides = [1, 1]} : vector<2x96xf32> to vector<2x32xf32>
    %449 = vector.extract_strided_slice %439 {offsets = [0, 32], sizes = [2, 32], strides = [1, 1]} : vector<2x96xf32> to vector<2x32xf32>
    %450 = arith.addf %448, %449 : vector<2x32xf32>
    %451 = arith.negf %450 : vector<2x32xf32>
    %452 = math.exp %451 : vector<2x32xf32>
    %cst_94 = arith.constant 1.000000e+00 : f32
    %453 = vector.broadcast %cst_94 : f32 to vector<2x32xf32>
    %454 = arith.addf %453, %452 : vector<2x32xf32>
    %455 = arith.divf %453, %454 : vector<2x32xf32>
    %456 = vector.extract_strided_slice %438 {offsets = [0, 64], sizes = [2, 32], strides = [1, 1]} : vector<2x96xf32> to vector<2x32xf32>
    %457 = vector.extract_strided_slice %439 {offsets = [0, 64], sizes = [2, 32], strides = [1, 1]} : vector<2x96xf32> to vector<2x32xf32>
    %458 = arith.addf %457, %12 : vector<2x32xf32>
    %459 = arith.mulf %447, %458 : vector<2x32xf32>
    %460 = arith.addf %456, %459 : vector<2x32xf32>
    %461 = math.tanh %460 : vector<2x32xf32>
    %cst_95 = arith.constant 1.000000e+00 : f32
    %462 = vector.broadcast %cst_95 : f32 to vector<2x32xf32>
    %463 = arith.subf %462, %455 : vector<2x32xf32>
    %464 = arith.mulf %463, %461 : vector<2x32xf32>
    %465 = arith.mulf %455, %406 : vector<2x32xf32>
    %466 = arith.addf %464, %465 : vector<2x32xf32>
    %467 = vector.extract_strided_slice %9 {offsets = [0, 0], sizes = [2, 96], strides = [1, 1]} : vector<16x96xf32> to vector<2x96xf32>
    %cst_96 = arith.constant dense<0.000000e+00> : vector<2x96xf32>
    %468 = tpu.matmul %435, %2, %cst_96 {dimension_numbers = #tpu.dot_dimension_numbers<[1], [0], [0], [1], [0, 0, 1, 1], [], []>} : vector<2x32xf32>, vector<32x96xf32>, vector<2x96xf32> -> vector<2x96xf32>
    %469 = vector.extract_strided_slice %467 {offsets = [0, 0], sizes = [2, 32], strides = [1, 1]} : vector<2x96xf32> to vector<2x32xf32>
    %470 = vector.extract_strided_slice %468 {offsets = [0, 0], sizes = [2, 32], strides = [1, 1]} : vector<2x96xf32> to vector<2x32xf32>
    %471 = arith.addf %469, %470 : vector<2x32xf32>
    %472 = arith.negf %471 : vector<2x32xf32>
    %473 = math.exp %472 : vector<2x32xf32>
    %cst_97 = arith.constant 1.000000e+00 : f32
    %474 = vector.broadcast %cst_97 : f32 to vector<2x32xf32>
    %475 = arith.addf %474, %473 : vector<2x32xf32>
    %476 = arith.divf %474, %475 : vector<2x32xf32>
    %477 = vector.extract_strided_slice %467 {offsets = [0, 32], sizes = [2, 32], strides = [1, 1]} : vector<2x96xf32> to vector<2x32xf32>
    %478 = vector.extract_strided_slice %468 {offsets = [0, 32], sizes = [2, 32], strides = [1, 1]} : vector<2x96xf32> to vector<2x32xf32>
    %479 = arith.addf %477, %478 : vector<2x32xf32>
    %480 = arith.negf %479 : vector<2x32xf32>
    %481 = math.exp %480 : vector<2x32xf32>
    %cst_98 = arith.constant 1.000000e+00 : f32
    %482 = vector.broadcast %cst_98 : f32 to vector<2x32xf32>
    %483 = arith.addf %482, %481 : vector<2x32xf32>
    %484 = arith.divf %482, %483 : vector<2x32xf32>
    %485 = vector.extract_strided_slice %467 {offsets = [0, 64], sizes = [2, 32], strides = [1, 1]} : vector<2x96xf32> to vector<2x32xf32>
    %486 = vector.extract_strided_slice %468 {offsets = [0, 64], sizes = [2, 32], strides = [1, 1]} : vector<2x96xf32> to vector<2x32xf32>
    %487 = arith.addf %486, %15 : vector<2x32xf32>
    %488 = arith.mulf %476, %487 : vector<2x32xf32>
    %489 = arith.addf %485, %488 : vector<2x32xf32>
    %490 = math.tanh %489 : vector<2x32xf32>
    %cst_99 = arith.constant 1.000000e+00 : f32
    %491 = vector.broadcast %cst_99 : f32 to vector<2x32xf32>
    %492 = arith.subf %491, %484 : vector<2x32xf32>
    %493 = arith.mulf %492, %490 : vector<2x32xf32>
    %494 = arith.mulf %484, %435 : vector<2x32xf32>
    %495 = arith.addf %493, %494 : vector<2x32xf32>
    %c14_100 = arith.constant 14 : index
    %c0_101 = arith.constant 0 : index
    %496 = vector.load %arg12[%c14_100, %c0_101] : memref<16x32xf32, #tpu.memory_space<vmem>>, vector<2x32xf32>
    tpu.vector_store %arg12[%c14_100, %c0_101], %466 {strides = array<i32>} : memref<16x32xf32, #tpu.memory_space<vmem>>, vector<2x32xf32>,
    %c0_102 = arith.constant 0 : index
    %c0_103 = arith.constant 0 : index
    %497 = vector.load %arg13[%c0_102, %c0_103] : memref<16x32xf32, #tpu.memory_space<vmem>>, vector<2x32xf32>
    tpu.vector_store %arg13[%c0_102, %c0_103], %495 {strides = array<i32>} : memref<16x32xf32, #tpu.memory_space<vmem>>, vector<2x32xf32>,
    %c0_104 = arith.constant 0 : index
    %c0_105 = arith.constant 0 : index
    %498 = vector.load %arg12[%c0_104, %c0_105] : memref<16x32xf32, #tpu.memory_space<vmem>>, vector<16x32xf32>
    %c0_106 = arith.constant 0 : index
    %c0_107 = arith.constant 0 : index
    %499 = vector.load %arg7[%c0_106, %c0_107] : memref<32x32xf32, #tpu.memory_space<vmem>>, vector<32x32xf32>
    %cst_108 = arith.constant dense<0.000000e+00> : vector<16x32xf32>
    %500 = tpu.matmul %498, %499, %cst_108 {dimension_numbers = #tpu.dot_dimension_numbers<[1], [0], [0], [1], [0, 0, 1, 1], [], []>} : vector<16x32xf32>, vector<32x32xf32>, vector<16x32xf32> -> vector<16x32xf32>
    %c0_109 = arith.constant 0 : index
    %c0_110 = arith.constant 0 : index
    %501 = vector.load %arg13[%c0_109, %c0_110] : memref<16x32xf32, #tpu.memory_space<vmem>>, vector<16x32xf32>
    %c0_111 = arith.constant 0 : index
    %c0_112 = arith.constant 0 : index
    %502 = vector.load %arg8[%c0_111, %c0_112] : memref<32x32xf32, #tpu.memory_space<vmem>>, vector<32x32xf32>
    %cst_113 = arith.constant dense<0.000000e+00> : vector<16x32xf32>
    %503 = tpu.matmul %501, %502, %cst_113 {dimension_numbers = #tpu.dot_dimension_numbers<[1], [0], [0], [1], [0, 0, 1, 1], [], []>} : vector<16x32xf32>, vector<32x32xf32>, vector<16x32xf32> -> vector<16x32xf32>
    %504 = arith.addf %500, %503 : vector<16x32xf32>
    %c0_114 = arith.constant 0 : index
    %c0_115 = arith.constant 0 : index
    %505 = vector.load %arg9[%c0_114, %c0_115] : memref<1x32xf32, #tpu.memory_space<vmem>>, vector<1x32xf32>
    %506 = vector.broadcast %505 : vector<1x32xf32> to vector<16x32xf32>
    %507 = arith.addf %504, %506 : vector<16x32xf32>
    %508 = math.tanh %507 : vector<16x32xf32>
    %c0_116 = arith.constant 0 : index
    %c0_117 = arith.constant 0 : index
    %509 = vector.load %arg10[%c0_116, %c0_117] : memref<16x32xf32, #tpu.memory_space<vmem>>, vector<16x32xf32>
    tpu.vector_store %arg10[%c0_116, %c0_117], %508 {strides = array<i32>} : memref<16x32xf32, #tpu.memory_space<vmem>>, vector<16x32xf32>,
    %c0_118 = arith.constant 0 : index
    %c0_119 = arith.constant 0 : index
    %510 = vector.load %arg11[%c0_118, %c0_119] : memref<4x32xf32, #tpu.memory_space<vmem>>, vector<2x32xf32>
    tpu.vector_store %arg11[%c0_118, %c0_119], %466 {strides = array<i32>} : memref<4x32xf32, #tpu.memory_space<vmem>>, vector<2x32xf32>,
    %c2_120 = arith.constant 2 : index
    %c0_121 = arith.constant 0 : index
    %511 = vector.load %arg11[%c2_120, %c0_121] : memref<4x32xf32, #tpu.memory_space<vmem>>, vector<2x32xf32>
    tpu.vector_store %arg11[%c2_120, %c0_121], %495 {strides = array<i32>} : memref<4x32xf32, #tpu.memory_space<vmem>>, vector<2x32xf32>,
    return
  }
}

</mosaic_0001>

<llo_original>
// kernel: tpu_custom_call.1
$region0: #{tpu_custom_call.1}
  #allocation0 [shape = 'u32[]', space=smem, size = 0x4, offset = 0x4, fixed_abs, tag = 'smem constant byte address 0x4 - core index']
  #allocation1 [shape = 'u32[144,128]{1,0:T(1,128)}', space=vmem, size = 0x12000, scoped, tag = 'internal scratch']
  #allocation2 [shape = 'f32[16,32]{1,0:T(8,128)}', space=vmem, size = 0x2000, scoped, tag = 'scratch operand']
  #allocation3 [shape = 'f32[16,32]{1,0:T(8,128)}', space=vmem, size = 0x2000, scoped, tag = 'scratch operand']
  %s0 = inlined_call_operand.hbm [shape: f32[16,32], index: 0, kind: input, shape index: {}]
  %s1 = inlined_call_operand.hbm [shape: f32[32,192], index: 1, kind: input, shape index: {}]
  %s2 = inlined_call_operand.vmem [shape: f32[1,192], index: 2, kind: input, shape index: {}]
  %s3 = inlined_call_operand.hbm [shape: f32[32,96], index: 3, kind: input, shape index: {}]
  %s4 = inlined_call_operand.hbm [shape: f32[32,96], index: 4, kind: input, shape index: {}]
  %s5 = inlined_call_operand.vmem [shape: f32[1,32], index: 5, kind: input, shape index: {}]
  %s6 = inlined_call_operand.vmem [shape: f32[1,32], index: 6, kind: input, shape index: {}]
  %s7 = inlined_call_operand.hbm [shape: f32[32,32], index: 7, kind: input, shape index: {}]
  %s8 = inlined_call_operand.hbm [shape: f32[32,32], index: 8, kind: input, shape index: {}]
  %s9 = inlined_call_operand.vmem [shape: f32[1,32], index: 9, kind: input, shape index: {}]
  %s10 = inlined_call_operand.hbm [shape: f32[16,32], index: 10, kind: output, shape index: {0}]
  %s11 = inlined_call_operand.hbm [shape: f32[4,32], index: 11, kind: output, shape index: {1}]
  %12 = xla_tuple %s10, %s11
  %s13 = sld [smem:[#allocation0]]
  $region82: #{tpu_custom_call.1} parent=0
    _
  %s15 = ssub.s32 1, %s13
  %s16 = scalar_select 0, %s15, %s13
  $region1: #{tpu_custom_call.1} parent=0
    #allocation4 [shape = 'u8[8192]{0}', space=vmem, size = 0x2000, scoped, tag = 'input window, operand 0, single buffered']
    #allocation5 [shape = 's32[1]{0}', space=sflag, size = 0x4, scoped, tag = 'scoped memory for tpu_custom_call.1']
    #allocation6 [shape = 's32[1]{0}', space=sflag, size = 0x4, scoped, tag = 'scoped memory for tpu_custom_call.1']
    #allocation7 [shape = 'u8[32768]{0}', space=vmem, size = 0x8000, scoped, tag = 'input window, operand 1, single buffered']
    #allocation8 [shape = 's32[1]{0}', space=sflag, size = 0x4, scoped, tag = 'scoped memory for tpu_custom_call.1']
    #allocation9 [shape = 'u8[16384]{0}', space=vmem, size = 0x4000, scoped, tag = 'input window, operand 3, single buffered']
    #allocation10 [shape = 'u8[16384]{0}', space=vmem, size = 0x4000, scoped, tag = 'input window, operand 4, single buffered']
    #allocation11 [shape = 's32[1]{0}', space=sflag, size = 0x4, scoped, tag = 'scoped memory for tpu_custom_call.1']
    #allocation12 [shape = 'u8[16384]{0}', space=vmem, size = 0x4000, scoped, tag = 'input window, operand 7, single buffered']
    #allocation13 [shape = 'u8[16384]{0}', space=vmem, size = 0x4000, scoped, tag = 'input window, operand 8, single buffered']
    #allocation14 [shape = 's32[1]{0}', space=sflag, size = 0x4, scoped, tag = 'scoped memory for tpu_custom_call.1']
    #allocation15 [shape = 'u8[8192]{0}', space=vmem, size = 0x2000, scoped, tag = 'output window, operand 0, single buffered']
    #allocation16 [shape = 'u8[2048]{0}', space=vmem, size = 0x800, scoped, tag = 'output window, operand 1, single buffered']
    #allocation17 [shape = 's32[1]{0}', space=sflag, size = 0x4, scoped, tag = 'scoped memory for tpu_custom_call.1']
    %17 = vsyncpa [#allocation5], 0
    %18 = vsyncpa [#allocation8], 0
    %19 = vsyncpa [#allocation11], 0
    %20 = vsyncpa [#allocation14], 0
    %21 = vsyncpa [#allocation6], 0
    %22 = vsyncpa [#allocation17], 0
    // Predicated region
    $region2: #{tpu_custom_call.1} parent=1 // pred_check
      _
    $region3: #{tpu_custom_call.1} parent=1 // pred_check_branch
      %24 = sbr.rel (0) target = $region5
    $region4: #{tpu_custom_call.1} parent=1 // pred_region
      %s26 = ssub.s32 256, 256
      %27 = vsyncadd [#allocation5], %s26
      %s28 = sshll.u32 [#allocation4], 4
      %s29 = int_to_ptr.vmem [resolvable:$true] %s28
      %34 = dma.hbm_to_vmem [thread:$0]  %s0, 256, %s29, [#allocation5], 128, 128, 8
    $region5: #{tpu_custom_call.1} parent=1 // pred_fallthru
      _
    // Predicated region
    $region6: #{tpu_custom_call.1} parent=1 // pred_check
      _
    $region7: #{tpu_custom_call.1} parent=1 // pred_check_branch
      %36 = sbr.rel (0) target = $region9
    $region8: #{tpu_custom_call.1} parent=1 // pred_region
      %s38 = ssub.s32 1024, 1024
      %39 = vsyncadd [#allocation8], %s38
      %s40 = sshll.u32 [#allocation7], 4
      %s41 = int_to_ptr.vmem [resolvable:$true] %s40
      %46 = dma.hbm_to_vmem [thread:$0]  %s1, 1024, %s41, [#allocation8], 256, 256, 16
    $region9: #{tpu_custom_call.1} parent=1 // pred_fallthru
      _
    // Predicated region
    $region10: #{tpu_custom_call.1} parent=1 // pred_check
      _
    $region11: #{tpu_custom_call.1} parent=1 // pred_check_branch
      %48 = sbr.rel (0) target = $region13
    $region12: #{tpu_custom_call.1} parent=1 // pred_region
      _
    $region13: #{tpu_custom_call.1} parent=1 // pred_fallthru
      _
    // Predicated region
    $region14: #{tpu_custom_call.1} parent=1 // pred_check
      _
    $region15: #{tpu_custom_call.1} parent=1 // pred_check_branch
      %50 = sbr.rel (0) target = $region17
    $region16: #{tpu_custom_call.1} parent=1 // pred_region
      %s52 = ssub.s32 512, 512
      %53 = vsyncadd [#allocation8], %s52
      %s54 = sshll.u32 [#allocation9], 4
      %s55 = int_to_ptr.vmem [resolvable:$true] %s54
      %60 = dma.hbm_to_vmem [thread:$0]  %s3, 512, %s55, [#allocation8], 128, 128, 8
    $region17: #{tpu_custom_call.1} parent=1 // pred_fallthru
      _
    // Predicated region
    $region18: #{tpu_custom_call.1} parent=1 // pred_check
      _
    $region19: #{tpu_custom_call.1} parent=1 // pred_check_branch
      %62 = sbr.rel (0) target = $region21
    $region20: #{tpu_custom_call.1} parent=1 // pred_region
      %s64 = ssub.s32 512, 512
      %65 = vsyncadd [#allocation11], %s64
      %s66 = sshll.u32 [#allocation10], 4
      %s67 = int_to_ptr.vmem [resolvable:$true] %s66
      %72 = dma.hbm_to_vmem [thread:$0]  %s4, 512, %s67, [#allocation11], 128, 128, 8
    $region21: #{tpu_custom_call.1} parent=1 // pred_fallthru
      _
    // Predicated region
    $region22: #{tpu_custom_call.1} parent=1 // pred_check
      _
    $region23: #{tpu_custom_call.1} parent=1 // pred_check_branch
      %74 = sbr.rel (0) target = $region25
    $region24: #{tpu_custom_call.1} parent=1 // pred_region
      _
    $region25: #{tpu_custom_call.1} parent=1 // pred_fallthru
      _
    // Predicated region
    $region26: #{tpu_custom_call.1} parent=1 // pred_check
      _
    $region27: #{tpu_custom_call.1} parent=1 // pred_check_branch
      %76 = sbr.rel (0) target = $region29
    $region28: #{tpu_custom_call.1} parent=1 // pred_region
      _
    $region29: #{tpu_custom_call.1} parent=1 // pred_fallthru
      _
    // Predicated region
    $region30: #{tpu_custom_call.1} parent=1 // pred_check
      _
    $region31: #{tpu_custom_call.1} parent=1 // pred_check_branch
      %78 = sbr.rel (0) target = $region33
    $region32: #{tpu_custom_call.1} parent=1 // pred_region
      %s80 = ssub.s32 512, 512
      %81 = vsyncadd [#allocation11], %s80
      %s82 = sshll.u32 [#allocation12], 4
      %s83 = int_to_ptr.vmem [resolvable:$true] %s82
      %88 = dma.hbm_to_vmem [thread:$0]  %s7, 512, %s83, [#allocation11], 128, 128, 8
    $region33: #{tpu_custom_call.1} parent=1 // pred_fallthru
      _
    // Predicated region
    $region34: #{tpu_custom_call.1} parent=1 // pred_check
      _
    $region35: #{tpu_custom_call.1} parent=1 // pred_check_branch
      %90 = sbr.rel (0) target = $region37
    $region36: #{tpu_custom_call.1} parent=1 // pred_region
      %s92 = ssub.s32 512, 512
      %93 = vsyncadd [#allocation14], %s92
      %s94 = sshll.u32 [#allocation13], 4
      %s95 = int_to_ptr.vmem [resolvable:$true] %s94
      %100 = dma.hbm_to_vmem [thread:$0]  %s8, 512, %s95, [#allocation14], 128, 128, 8
    $region37: #{tpu_custom_call.1} parent=1 // pred_fallthru
      _
    // Predicated region
    $region38: #{tpu_custom_call.1} parent=1 // pred_check
      _
    $region39: #{tpu_custom_call.1} parent=1 // pred_check_branch
      %102 = sbr.rel (0) target = $region41
    $region40: #{tpu_custom_call.1} parent=1 // pred_region
      _
    $region41: #{tpu_custom_call.1} parent=1 // pred_fallthru
      _
    // Predicated region
    $region42: #{tpu_custom_call.1} parent=1 // pred_check
      _
    $region43: #{tpu_custom_call.1} parent=1 // pred_check_branch
      %104 = sbr.rel (0) target = $region45
    $region44: #{tpu_custom_call.1} parent=1 // pred_region
      %105 = dma.done [#allocation5], 256
    $region45: #{tpu_custom_call.1} parent=1 // pred_fallthru
      _
    // Predicated region
    $region46: #{tpu_custom_call.1} parent=1 // pred_check
      _
    $region47: #{tpu_custom_call.1} parent=1 // pred_check_branch
      %107 = sbr.rel (0) target = $region49
    $region48: #{tpu_custom_call.1} parent=1 // pred_region
      %108 = dma.done [#allocation8], 1024
    $region49: #{tpu_custom_call.1} parent=1 // pred_fallthru
      _
    // Predicated region
    $region50: #{tpu_custom_call.1} parent=1 // pred_check
      _
    $region51: #{tpu_custom_call.1} parent=1 // pred_check_branch
      %110 = sbr.rel (0) target = $region53
    $region52: #{tpu_custom_call.1} parent=1 // pred_region
      %111 = dma.done [#allocation8], 512
    $region53: #{tpu_custom_call.1} parent=1 // pred_fallthru
      _
    // Predicated region
    $region54: #{tpu_custom_call.1} parent=1 // pred_check
      _
    $region55: #{tpu_custom_call.1} parent=1 // pred_check_branch
      %113 = sbr.rel (0) target = $region57
    $region56: #{tpu_custom_call.1} parent=1 // pred_region
      %114 = dma.done [#allocation11], 512
    $region57: #{tpu_custom_call.1} parent=1 // pred_fallthru
      _
    // Predicated region
    $region58: #{tpu_custom_call.1} parent=1 // pred_check
      _
    $region59: #{tpu_custom_call.1} parent=1 // pred_check_branch
      %116 = sbr.rel (0) target = $region61
    $region60: #{tpu_custom_call.1} parent=1 // pred_region
      %117 = dma.done [#allocation11], 512
    $region61: #{tpu_custom_call.1} parent=1 // pred_fallthru
      _
    // Predicated region
    $region62: #{tpu_custom_call.1} parent=1 // pred_check
      _
    $region63: #{tpu_custom_call.1} parent=1 // pred_check_branch
      %119 = sbr.rel (0) target = $region65
    $region64: #{tpu_custom_call.1} parent=1 // pred_region
      %120 = dma.done [#allocation14], 512
    $region65: #{tpu_custom_call.1} parent=1 // pred_fallthru
      _
    %v121 = vld [vmem:[#allocation4] sm:$0xff]
    %v122 = vld [vmem:[#allocation4 + $0x8] sm:$0xff]
    %v123 = vld [vmem:[#allocation9] sm:$0xff]
    %v124 = vld [vmem:[#allocation9 + $0x8] sm:$0xff]
    %v125 = vld [vmem:[#allocation9 + $0x10] sm:$0xff]
    %v126 = vld [vmem:[#allocation9 + $0x18] sm:$0xff]
    %v127 = vld [vmem:[#allocation10] sm:$0xff]
    %v128 = vld [vmem:[#allocation10 + $0x8] sm:$0xff]
    %v129 = vld [vmem:[#allocation10 + $0x10] sm:$0xff]
    %v130 = vld [vmem:[#allocation10 + $0x18] sm:$0xff]
    %v131 = vld [vmem:[#allocation7] sm:$0xff]
    %v132 = vld [vmem:[#allocation7 + $0x8] sm:$0xff]
    %v133 = vld [vmem:[#allocation7 + $0x10] sm:$0xff]
    %v134 = vld [vmem:[#allocation7 + $0x18] sm:$0xff]
    %v135 = vld [vmem:[#allocation7 + $0x20] sm:$0xff]
    %v136 = vld [vmem:[#allocation7 + $0x28] sm:$0xff]
    %v137 = vld [vmem:[#allocation7 + $0x30] sm:$0xff]
    %v138 = vld [vmem:[#allocation7 + $0x38] sm:$0xff]
    %v139 = vld [vmem:[%s2] sm:$0x3]
    %v141 = vlaneseq
    %v142 = vshrl.u32 %v141, 7
    %v143 = vsub.s32 0, %v142
    %v144 = vrot.slane %v139, %v143
    %v145 = vlaneseq
    %v146 = vshrl.u32 %v145, 7
    %v147 = vsub.s32 1, %v146
    %v148 = vrot.slane %v139, %v147
    %vm151 = vcmask 261120
    %v153 = vsel %vm151, %v121, 0
    %v156 = vsel %vm151, %v122, 0
    %158 = vmatprep.subr.mxu0 %v132
    %159 = vmatpush1.msra.mxu0 %v131
    %160 = vmatprep.subr.mxu0 %v134
    %161 = vmatpush1.msra.mxu0 %v133
    %162 = vmatprep.subr.mxu0 %v136
    %163 = vmatpush1.msra.mxu0 %v135
    %164 = vmatprep.subr.mxu0 %v138
    %165 = vmatpush1.msra.mxu0 %v137
    %166 = vmatprep.subr.mxu0 0.0
    %167 = vmatpush1.msra.mxu0 0.0
    %168 = vmatprep.subr.mxu0 0.0
    %169 = vmatpush1.msra.mxu0 0.0
    %170 = vmatprep.subr.mxu0 0.0
    %171 = vmatpush1.msra.mxu0 0.0
    %172 = vmatprep.subr.mxu0 0.0
    %173 = vmatpush1.msra.mxu0 0.0
    %174 = vmatprep.subr.mxu0 0.0
    %175 = vmatpush1.msra.mxu0 0.0
    %176 = vmatprep.subr.mxu0 0.0
    %177 = vmatpush1.msra.mxu0 0.0
    %178 = vmatprep.subr.mxu0 0.0
    %179 = vmatpush1.msra.mxu0 0.0
    %180 = vmatprep.subr.mxu0 0.0
    %181 = vmatpush1.msra.mxu0 0.0
    %182 = vmatprep.subr.mxu0 0.0
    %183 = vmatpush1.msra.mxu0 0.0
    %184 = vmatprep.subr.mxu0 0.0
    %185 = vmatpush1.msra.mxu0 0.0
    %186 = vmatprep.subr.mxu0 0.0
    %187 = vmatpush1.msra.mxu0 0.0
    %188 = vmatprep.subr.mxu0 0.0
    %189 = vmatpush1.msra.mxu0 0.0
    %190 = vmatprep.subr.mxu0 0.0
    %191 = vmatpush1.msra.mxu0 0.0
    %192 = vmatprep.subr.mxu0 0.0
    %193 = vmatpush1.msra.mxu0 0.0
    %194 = vmatprep.subr.mxu0 0.0
    %195 = vmatpush1.msra.mxu0 0.0
    %196 = vmatprep.subr.mxu0 0.0
    %197 = vmatpush1.msra.mxu0 0.0
    %198 = vmatprep.subr.mxu0 0.0
    %199 = vmatpush1.msra.mxu0 0.0
    %200 = vmatprep.subr.mxu0 0.0
    %201 = vmatpush1.msra.mxu0 0.0
    %202 = vmatprep.subr.mxu0 0.0
    %203 = vmatpush1.msra.mxu0 0.0
    %204 = vmatprep.subr.mxu0 0.0
    %205 = vmatpush1.msra.mxu0 0.0
    %206 = vmatprep.subr.mxu0 0.0
    %207 = vmatpush1.msra.mxu0 0.0
    %208 = vmatprep.subr.mxu0 0.0
    %209 = vmatpush1.msra.mxu0 0.0
    %210 = vmatprep.subr.mxu0 0.0
    %211 = vmatpush1.msra.mxu0 0.0
    %212 = vmatprep.subr.mxu0 0.0
    %213 = vmatpush1.msra.mxu0 0.0
    %214 = vmatprep.subr.mxu0 0.0
    %215 = vmatpush1.msra.mxu0 0.0
    %216 = vmatprep.subr.mxu0 0.0
    %217 = vmatpush1.msra.mxu0 0.0
    %218 = vmatprep.subr.mxu0 0.0
    %219 = vmatpush1.msra.mxu0 0.0
    %220 = vmatprep.subr.mxu0 0.0
    %221 = vmatpush1.msra.mxu0 0.0
    %222 = vmatprep.mubr.f32.mxu0 0.0
    %223 = vmatmul.mubr.f32.gmra.mrb[0].mxu0 %v153
    %v224 = vpop.f32.mrb[0].mxu0
    %v225 = vadd.f32 %v144, %v224
    %v226 = vpop.f32.mrb[0].mxu0
    %v227 = vadd.f32 %v148, %v226
    %228 = vmatprep.mubr.f32.mxu0 0.0
    %229 = vmatmul.mubr.f32.gmra.mrb[0].mxu0 %v156
    %v230 = vpop.f32.mrb[0].mxu0
    %v231 = vadd.f32 %v144, %v230
    %v232 = vpop.f32.mrb[0].mxu0
    %v233 = vadd.f32 %v148, %v232
    %234 = vdwg.mxu0
    %v235 = vld [vmem:[%s5] sm:$0x1]
    %v237 = vlaneseq
    %v238 = vshrl.u32 %v237, 7
    %v239 = vsub.s32 0, %v238
    %v240 = vrot.slane %v235, %v239
    %v241 = vld [vmem:[%s6] sm:$0x1]
    %v243 = vlaneseq
    %v244 = vshrl.u32 %v243, 7
    %v245 = vsub.s32 0, %v244
    %v246 = vrot.slane %v241, %v245
    %v248 = vsel %vm151, 0.0, 0
    %250 = vmatprep.subr.mxu0 0.0
    %251 = vmatpush1.msra.mxu0 %v123
    %252 = vmatprep.subr.mxu0 0.0
    %253 = vmatpush1.msra.mxu0 %v124
    %254 = vmatprep.subr.mxu0 0.0
    %255 = vmatpush1.msra.mxu0 %v125
    %256 = vmatprep.subr.mxu0 0.0
    %257 = vmatpush1.msra.mxu0 %v126
    %258 = vmatprep.subr.mxu0 0.0
    %259 = vmatpush1.msra.mxu0 0.0
    %260 = vmatprep.subr.mxu0 0.0
    %261 = vmatpush1.msra.mxu0 0.0
    %262 = vmatprep.subr.mxu0 0.0
    %263 = vmatpush1.msra.mxu0 0.0
    %264 = vmatprep.subr.mxu0 0.0
    %265 = vmatpush1.msra.mxu0 0.0
    %266 = vmatprep.subr.mxu0 0.0
    %267 = vmatpush1.msra.mxu0 0.0
    %268 = vmatprep.subr.mxu0 0.0
    %269 = vmatpush1.msra.mxu0 0.0
    %270 = vmatprep.subr.mxu0 0.0
    %271 = vmatpush1.msra.mxu0 0.0
    %272 = vmatprep.subr.mxu0 0.0
    %273 = vmatpush1.msra.mxu0 0.0
    %274 = vmatprep.subr.mxu0 0.0
    %275 = vmatpush1.msra.mxu0 0.0
    %276 = vmatprep.subr.mxu0 0.0
    %277 = vmatpush1.msra.mxu0 0.0
    %278 = vmatprep.subr.mxu0 0.0
    %279 = vmatpush1.msra.mxu0 0.0
    %280 = vmatprep.subr.mxu0 0.0
    %281 = vmatpush1.msra.mxu0 0.0
    %282 = vmatprep.subr.mxu0 0.0
    %283 = vmatpush1.msra.mxu0 0.0
    %284 = vmatprep.subr.mxu0 0.0
    %285 = vmatpush1.msra.mxu0 0.0
    %286 = vmatprep.subr.mxu0 0.0
    %287 = vmatpush1.msra.mxu0 0.0
    %288 = vmatprep.subr.mxu0 0.0
    %289 = vmatpush1.msra.mxu0 0.0
    %290 = vmatprep.subr.mxu0 0.0
    %291 = vmatpush1.msra.mxu0 0.0
    %292 = vmatprep.subr.mxu0 0.0
    %293 = vmatpush1.msra.mxu0 0.0
    %294 = vmatprep.subr.mxu0 0.0
    %295 = vmatpush1.msra.mxu0 0.0
    %296 = vmatprep.subr.mxu0 0.0
    %297 = vmatpush1.msra.mxu0 0.0
    %298 = vmatprep.subr.mxu0 0.0
    %299 = vmatpush1.msra.mxu0 0.0
    %300 = vmatprep.subr.mxu0 0.0
    %301 = vmatpush1.msra.mxu0 0.0
    %302 = vmatprep.subr.mxu0 0.0
    %303 = vmatpush1.msra.mxu0 0.0
    %304 = vmatprep.subr.mxu0 0.0
    %305 = vmatpush1.msra.mxu0 0.0
    %306 = vmatprep.subr.mxu0 0.0
    %307 = vmatpush1.msra.mxu0 0.0
    %308 = vmatprep.subr.mxu0 0.0
    %309 = vmatpush1.msra.mxu0 0.0
    %310 = vmatprep.subr.mxu0 0.0
    %311 = vmatpush1.msra.mxu0 0.0
    %312 = vmatprep.subr.mxu0 0.0
    %313 = vmatpush1.msra.mxu0 0.0
    %314 = vmatprep.mubr.f32.mxu0 0.0
    %315 = vmatmul.mubr.f32.gmra.mrb[0].mxu0 %v248
    %v316 = vpop.f32.mrb[0].mxu0
    %v317 = vadd.f32 0.0, %v316
    %v318 = vpop.f32.mrb[0].mxu0
    %319 = vdwg.mxu0
    %v320 = vadd.f32 %v225, %v317
    %v321 = vxor.u32 %v320, 2147483648
    %v322 = vmul.f32 %v321, 1.442695
    %v323 = vpow.pop %v322
    %v324 = vadd.f32 %v323, 1.0
    %v325 = vrcp.pop %v324
    %v326 = vmul.f32 1.0, %v325
    %327 = vrot.lane.b32.xlu0 %v240, 64
    %v328 = vpop.permute.xlu0 %327
    %v330 = vadd.f32 %v317, %v328
    %332 = vrot.lane.b32.xlu0 %v330, 64
    %v333 = vpop.permute.xlu0 %332
    %v335 = vmul.f32 %v326, %v333
    %337 = vrot.lane.b32.xlu0 %v335, 64
    %v338 = vpop.permute.xlu0 %337
    %v340 = vadd.f32 %v225, %v338
    %v341 = vtanh.pop %v340
    %v342 = vsub.f32 1.0, %v326
    %344 = vrot.lane.b32.xlu0 %v341, 96
    %v345 = vpop.permute.xlu0 %344
    %v347 = vmul.f32 %v342, %v345
    %v348 = vmul.f32 %v326, 0.0
    %v349 = vadd.f32 %v347, %v348
    %350 = vmatprep.subr.mxu0 0.0
    %351 = vmatpush1.msra.mxu0 %v127
    %352 = vmatprep.subr.mxu0 0.0
    %353 = vmatpush1.msra.mxu0 %v128
    %354 = vmatprep.subr.mxu0 0.0
    %355 = vmatpush1.msra.mxu0 %v129
    %356 = vmatprep.subr.mxu0 0.0
    %357 = vmatpush1.msra.mxu0 %v130
    %358 = vmatprep.subr.mxu0 0.0
    %359 = vmatpush1.msra.mxu0 0.0
    %360 = vmatprep.subr.mxu0 0.0
    %361 = vmatpush1.msra.mxu0 0.0
    %362 = vmatprep.subr.mxu0 0.0
    %363 = vmatpush1.msra.mxu0 0.0
    %364 = vmatprep.subr.mxu0 0.0
    %365 = vmatpush1.msra.mxu0 0.0
    %366 = vmatprep.subr.mxu0 0.0
    %367 = vmatpush1.msra.mxu0 0.0
    %368 = vmatprep.subr.mxu0 0.0
    %369 = vmatpush1.msra.mxu0 0.0
    %370 = vmatprep.subr.mxu0 0.0
    %371 = vmatpush1.msra.mxu0 0.0
    %372 = vmatprep.subr.mxu0 0.0
    %373 = vmatpush1.msra.mxu0 0.0
    %374 = vmatprep.subr.mxu0 0.0
    %375 = vmatpush1.msra.mxu0 0.0
    %376 = vmatprep.subr.mxu0 0.0
    %377 = vmatpush1.msra.mxu0 0.0
    %378 = vmatprep.subr.mxu0 0.0
    %379 = vmatpush1.msra.mxu0 0.0
    %380 = vmatprep.subr.mxu0 0.0
    %381 = vmatpush1.msra.mxu0 0.0
    %382 = vmatprep.subr.mxu0 0.0
    %383 = vmatpush1.msra.mxu0 0.0
    %384 = vmatprep.subr.mxu0 0.0
    %385 = vmatpush1.msra.mxu0 0.0
    %386 = vmatprep.subr.mxu0 0.0
    %387 = vmatpush1.msra.mxu0 0.0
    %388 = vmatprep.subr.mxu0 0.0
    %389 = vmatpush1.msra.mxu0 0.0
    %390 = vmatprep.subr.mxu0 0.0
    %391 = vmatpush1.msra.mxu0 0.0
    %392 = vmatprep.subr.mxu0 0.0
    %393 = vmatpush1.msra.mxu0 0.0
    %394 = vmatprep.subr.mxu0 0.0
    %395 = vmatpush1.msra.mxu0 0.0
    %396 = vmatprep.subr.mxu0 0.0
    %397 = vmatpush1.msra.mxu0 0.0
    %398 = vmatprep.subr.mxu0 0.0
    %399 = vmatpush1.msra.mxu0 0.0
    %400 = vmatprep.subr.mxu0 0.0
    %401 = vmatpush1.msra.mxu0 0.0
    %402 = vmatprep.subr.mxu0 0.0
    %403 = vmatpush1.msra.mxu0 0.0
    %404 = vmatprep.subr.mxu0 0.0
    %405 = vmatpush1.msra.mxu0 0.0
    %406 = vmatprep.subr.mxu0 0.0
    %407 = vmatpush1.msra.mxu0 0.0
    %408 = vmatprep.subr.mxu0 0.0
    %409 = vmatpush1.msra.mxu0 0.0
    %410 = vmatprep.subr.mxu0 0.0
    %411 = vmatpush1.msra.mxu0 0.0
    %412 = vmatprep.subr.mxu0 0.0
    %413 = vmatpush1.msra.mxu0 0.0
    %414 = vmatprep.mubr.f32.mxu0 0.0
    %415 = vmatmul.mubr.f32.gmra.mrb[0].mxu0 %v248
    %v416 = vpop.f32.mrb[0].mxu0
    %v417 = vadd.f32 0.0, %v416
    %v418 = vpop.f32.mrb[0].mxu0
    %419 = vdwg.mxu0
    %v421 = vrot.slane %v417, 2
    %422 = vrot.lane.b32.xlu0 %v421, 96
    %v423 = vpop.permute.xlu0 %422
    %v425 = vadd.f32 %v231, %v423
    %v426 = vxor.u32 %v425, 2147483648
    %v427 = vmul.f32 %v426, 1.442695
    %v428 = vpow.pop %v427
    %v429 = vadd.f32 %v428, 1.0
    %v430 = vrcp.pop %v429
    %v431 = vmul.f32 1.0, %v430
    %v432 = vadd.f32 %v233, %v423
    %v433 = vxor.u32 %v432, 2147483648
    %v434 = vmul.f32 %v433, 1.442695
    %v435 = vpow.pop %v434
    %v436 = vadd.f32 %v435, 1.0
    %v437 = vrcp.pop %v436
    %v438 = vmul.f32 1.0, %v437
    %439 = vrot.lane.b32.xlu0 %v246, 64
    %v440 = vpop.permute.xlu0 %439
    %v442 = vadd.f32 %v417, %v440
    %v444 = vrot.slane %v442, 2
    %445 = vrot.lane.b32.xlu0 %v444, 32
    %v446 = vpop.permute.xlu0 %445
    %v448 = vmul.f32 %v431, %v446
    %450 = vrot.lane.b32.xlu0 %v448, 64
    %v451 = vpop.permute.xlu0 %450
    %v453 = vadd.f32 %v233, %v451
    %v454 = vtanh.pop %v453
    %v455 = vsub.f32 1.0, %v438
    %457 = vrot.lane.b32.xlu0 %v454, 96
    %v458 = vpop.permute.xlu0 %457
    %v460 = vmul.f32 %v455, %v458
    %v461 = vmul.f32 %v438, 0.0
    %v462 = vadd.f32 %v460, %v461
    %464 = vrot.lane.b32.xlu0 %v349, 96
    %v465 = vpop.permute.xlu0 %464
    %vm467 = vcmask 254976
    %468 = vst.msk [vmem:[#allocation2] sm:$0x3] %vm467, %v465
    %vm469 = vcmask 261126
    %470 = vst.msk [vmem:[#allocation3 + $0x8] sm:$0xc0] %vm469, %v462
    %v471 = vsel %vm151, %v465, 0
    %473 = vmatprep.subr.mxu0 0.0
    %474 = vmatpush1.msra.mxu0 %v123
    %475 = vmatprep.subr.mxu0 0.0
    %476 = vmatpush1.msra.mxu0 %v124
    %477 = vmatprep.subr.mxu0 0.0
    %478 = vmatpush1.msra.mxu0 %v125
    %479 = vmatprep.subr.mxu0 0.0
    %480 = vmatpush1.msra.mxu0 %v126
    %481 = vmatprep.subr.mxu0 0.0
    %482 = vmatpush1.msra.mxu0 0.0
    %483 = vmatprep.subr.mxu0 0.0
    %484 = vmatpush1.msra.mxu0 0.0
    %485 = vmatprep.subr.mxu0 0.0
    %486 = vmatpush1.msra.mxu0 0.0
    %487 = vmatprep.subr.mxu0 0.0
    %488 = vmatpush1.msra.mxu0 0.0
    %489 = vmatprep.subr.mxu0 0.0
    %490 = vmatpush1.msra.mxu0 0.0
    %491 = vmatprep.subr.mxu0 0.0
    %492 = vmatpush1.msra.mxu0 0.0
    %493 = vmatprep.subr.mxu0 0.0
    %494 = vmatpush1.msra.mxu0 0.0
    %495 = vmatprep.subr.mxu0 0.0
    %496 = vmatpush1.msra.mxu0 0.0
    %497 = vmatprep.subr.mxu0 0.0
    %498 = vmatpush1.msra.mxu0 0.0
    %499 = vmatprep.subr.mxu0 0.0
    %500 = vmatpush1.msra.mxu0 0.0
    %501 = vmatprep.subr.mxu0 0.0
    %502 = vmatpush1.msra.mxu0 0.0
    %503 = vmatprep.subr.mxu0 0.0
    %504 = vmatpush1.msra.mxu0 0.0
    %505 = vmatprep.subr.mxu0 0.0
    %506 = vmatpush1.msra.mxu0 0.0
    %507 = vmatprep.subr.mxu0 0.0
    %508 = vmatpush1.msra.mxu0 0.0
    %509 = vmatprep.subr.mxu0 0.0
    %510 = vmatpush1.msra.mxu0 0.0
    %511 = vmatprep.subr.mxu0 0.0
    %512 = vmatpush1.msra.mxu0 0.0
    %513 = vmatprep.subr.mxu0 0.0
    %514 = vmatpush1.msra.mxu0 0.0
    %515 = vmatprep.subr.mxu0 0.0
    %516 = vmatpush1.msra.mxu0 0.0
    %517 = vmatprep.subr.mxu0 0.0
    %518 = vmatpush1.msra.mxu0 0.0
    %519 = vmatprep.subr.mxu0 0.0
    %520 = vmatpush1.msra.mxu0 0.0
    %521 = vmatprep.subr.mxu0 0.0
    %522 = vmatpush1.msra.mxu0 0.0
    %523 = vmatprep.subr.mxu0 0.0
    %524 = vmatpush1.msra.mxu0 0.0
    %525 = vmatprep.subr.mxu0 0.0
    %526 = vmatpush1.msra.mxu0 0.0
    %527 = vmatprep.subr.mxu0 0.0
    %528 = vmatpush1.msra.mxu0 0.0
    %529 = vmatprep.subr.mxu0 0.0
    %530 = vmatpush1.msra.mxu0 0.0
    %531 = vmatprep.subr.mxu0 0.0
    %532 = vmatpush1.msra.mxu0 0.0
    %533 = vmatprep.subr.mxu0 0.0
    %534 = vmatpush1.msra.mxu0 0.0
    %535 = vmatprep.subr.mxu0 0.0
    %536 = vmatpush1.msra.mxu0 0.0
    %537 = vmatprep.mubr.f32.mxu0 0.0
    %538 = vmatmul.mubr.f32.gmra.mrb[0].mxu0 %v471
    %v539 = vpop.f32.mrb[0].mxu0
    %v540 = vadd.f32 0.0, %v539
    %v541 = vpop.f32.mrb[0].mxu0
    %542 = vdwg.mxu0
    %v544 = vrot.slane %v540, 6
    %v546 = vadd.f32 %v225, %v544
    %v547 = vxor.u32 %v546, 2147483648
    %v548 = vmul.f32 %v547, 1.442695
    %v549 = vpow.pop %v548
    %v550 = vadd.f32 %v549, 1.0
    %v551 = vrcp.pop %v550
    %v552 = vmul.f32 1.0, %v551
    %v553 = vadd.f32 %v540, %v328
    %v555 = vrot.slane %v553, 6
    %556 = vrot.lane.b32.xlu0 %v555, 64
    %v557 = vpop.permute.xlu0 %556
    %v559 = vmul.f32 %v552, %v557
    %561 = vrot.lane.b32.xlu0 %v559, 64
    %v562 = vpop.permute.xlu0 %561
    %v564 = vadd.f32 %v225, %v562
    %v565 = vtanh.pop %v564
    %v566 = vsub.f32 1.0, %v552
    %568 = vrot.lane.b32.xlu0 %v565, 96
    %v569 = vpop.permute.xlu0 %568
    %v571 = vmul.f32 %v566, %v569
    %v572 = vrot.slane %v349, 6
    %v574 = vmul.f32 %v552, %v572
    %v575 = vadd.f32 %v571, %v574
    %v577 = vrot.slane %v462, 6
    %v578 = vsel %vm151, %v577, 0
    %580 = vmatprep.subr.mxu0 0.0
    %581 = vmatpush1.msra.mxu0 %v127
    %582 = vmatprep.subr.mxu0 0.0
    %583 = vmatpush1.msra.mxu0 %v128
    %584 = vmatprep.subr.mxu0 0.0
    %585 = vmatpush1.msra.mxu0 %v129
    %586 = vmatprep.subr.mxu0 0.0
    %587 = vmatpush1.msra.mxu0 %v130
    %588 = vmatprep.subr.mxu0 0.0
    %589 = vmatpush1.msra.mxu0 0.0
    %590 = vmatprep.subr.mxu0 0.0
    %591 = vmatpush1.msra.mxu0 0.0
    %592 = vmatprep.subr.mxu0 0.0
    %593 = vmatpush1.msra.mxu0 0.0
    %594 = vmatprep.subr.mxu0 0.0
    %595 = vmatpush1.msra.mxu0 0.0
    %596 = vmatprep.subr.mxu0 0.0
    %597 = vmatpush1.msra.mxu0 0.0
    %598 = vmatprep.subr.mxu0 0.0
    %599 = vmatpush1.msra.mxu0 0.0
    %600 = vmatprep.subr.mxu0 0.0
    %601 = vmatpush1.msra.mxu0 0.0
    %602 = vmatprep.subr.mxu0 0.0
    %603 = vmatpush1.msra.mxu0 0.0
    %604 = vmatprep.subr.mxu0 0.0
    %605 = vmatpush1.msra.mxu0 0.0
    %606 = vmatprep.subr.mxu0 0.0
    %607 = vmatpush1.msra.mxu0 0.0
    %608 = vmatprep.subr.mxu0 0.0
    %609 = vmatpush1.msra.mxu0 0.0
    %610 = vmatprep.subr.mxu0 0.0
    %611 = vmatpush1.msra.mxu0 0.0
    %612 = vmatprep.subr.mxu0 0.0
    %613 = vmatpush1.msra.mxu0 0.0
    %614 = vmatprep.subr.mxu0 0.0
    %615 = vmatpush1.msra.mxu0 0.0
    %616 = vmatprep.subr.mxu0 0.0
    %617 = vmatpush1.msra.mxu0 0.0
    %618 = vmatprep.subr.mxu0 0.0
    %619 = vmatpush1.msra.mxu0 0.0
    %620 = vmatprep.subr.mxu0 0.0
    %621 = vmatpush1.msra.mxu0 0.0
    %622 = vmatprep.subr.mxu0 0.0
    %623 = vmatpush1.msra.mxu0 0.0
    %624 = vmatprep.subr.mxu0 0.0
    %625 = vmatpush1.msra.mxu0 0.0
    %626 = vmatprep.subr.mxu0 0.0
    %627 = vmatpush1.msra.mxu0 0.0
    %628 = vmatprep.subr.mxu0 0.0
    %629 = vmatpush1.msra.mxu0 0.0
    %630 = vmatprep.subr.mxu0 0.0
    %631 = vmatpush1.msra.mxu0 0.0
    %632 = vmatprep.subr.mxu0 0.0
    %633 = vmatpush1.msra.mxu0 0.0
    %634 = vmatprep.subr.mxu0 0.0
    %635 = vmatpush1.msra.mxu0 0.0
    %636 = vmatprep.subr.mxu0 0.0
    %637 = vmatpush1.msra.mxu0 0.0
    %638 = vmatprep.subr.mxu0 0.0
    %639 = vmatpush1.msra.mxu0 0.0
    %640 = vmatprep.subr.mxu0 0.0
    %641 = vmatpush1.msra.mxu0 0.0
    %642 = vmatprep.subr.mxu0 0.0
    %643 = vmatpush1.msra.mxu0 0.0
    %644 = vmatprep.mubr.f32.mxu0 0.0
    %645 = vmatmul.mubr.f32.gmra.mrb[0].mxu0 %v578
    %v646 = vpop.f32.mrb[0].mxu0
    %v647 = vadd.f32 0.0, %v646
    %v648 = vpop.f32.mrb[0].mxu0
    %649 = vdwg.mxu0
    %v651 = vrot.slane %v647, 4
    %652 = vrot.lane.b32.xlu0 %v651, 96
    %v653 = vpop.permute.xlu0 %652
    %v655 = vadd.f32 %v231, %v653
    %v656 = vxor.u32 %v655, 2147483648
    %v657 = vmul.f32 %v656, 1.442695
    %v658 = vpow.pop %v657
    %v659 = vadd.f32 %v658, 1.0
    %v660 = vrcp.pop %v659
    %v661 = vmul.f32 1.0, %v660
    %v662 = vadd.f32 %v233, %v653
    %v663 = vxor.u32 %v662, 2147483648
    %v664 = vmul.f32 %v663, 1.442695
    %v665 = vpow.pop %v664
    %v666 = vadd.f32 %v665, 1.0
    %v667 = vrcp.pop %v666
    %v668 = vmul.f32 1.0, %v667
    %v669 = vadd.f32 %v647, %v440
    %v671 = vrot.slane %v669, 4
    %672 = vrot.lane.b32.xlu0 %v671, 32
    %v673 = vpop.permute.xlu0 %672
    %v675 = vmul.f32 %v661, %v673
    %677 = vrot.lane.b32.xlu0 %v675, 64
    %v678 = vpop.permute.xlu0 %677
    %v680 = vadd.f32 %v233, %v678
    %v681 = vtanh.pop %v680
    %v682 = vsub.f32 1.0, %v668
    %684 = vrot.lane.b32.xlu0 %v681, 96
    %v685 = vpop.permute.xlu0 %684
    %v687 = vmul.f32 %v682, %v685
    %v688 = vrot.slane %v462, 2
    %v690 = vmul.f32 %v668, %v688
    %v691 = vadd.f32 %v687, %v690
    %693 = vrot.lane.b32.xlu0 %v575, 96
    %v694 = vpop.permute.xlu0 %693
    %vm696 = vcmask 257026
    %697 = vst.msk [vmem:[#allocation2] sm:$0xc] %vm696, %v694
    %vm698 = vcmask 259076
    %699 = vst.msk [vmem:[#allocation3 + $0x8] sm:$0x30] %vm698, %v691
    %v700 = vrot.slane %v575, 2
    %701 = vrot.lane.b32.xlu0 %v700, 96
    %v702 = vpop.permute.xlu0 %701
    %v703 = vsel %vm151, %v702, 0
    %705 = vmatprep.subr.mxu0 0.0
    %706 = vmatpush1.msra.mxu0 %v123
    %707 = vmatprep.subr.mxu0 0.0
    %708 = vmatpush1.msra.mxu0 %v124
    %709 = vmatprep.subr.mxu0 0.0
    %710 = vmatpush1.msra.mxu0 %v125
    %711 = vmatprep.subr.mxu0 0.0
    %712 = vmatpush1.msra.mxu0 %v126
    %713 = vmatprep.subr.mxu0 0.0
    %714 = vmatpush1.msra.mxu0 0.0
    %715 = vmatprep.subr.mxu0 0.0
    %716 = vmatpush1.msra.mxu0 0.0
    %717 = vmatprep.subr.mxu0 0.0
    %718 = vmatpush1.msra.mxu0 0.0
    %719 = vmatprep.subr.mxu0 0.0
    %720 = vmatpush1.msra.mxu0 0.0
    %721 = vmatprep.subr.mxu0 0.0
    %722 = vmatpush1.msra.mxu0 0.0
    %723 = vmatprep.subr.mxu0 0.0
    %724 = vmatpush1.msra.mxu0 0.0
    %725 = vmatprep.subr.mxu0 0.0
    %726 = vmatpush1.msra.mxu0 0.0
    %727 = vmatprep.subr.mxu0 0.0
    %728 = vmatpush1.msra.mxu0 0.0
    %729 = vmatprep.subr.mxu0 0.0
    %730 = vmatpush1.msra.mxu0 0.0
    %731 = vmatprep.subr.mxu0 0.0
    %732 = vmatpush1.msra.mxu0 0.0
    %733 = vmatprep.subr.mxu0 0.0
    %734 = vmatpush1.msra.mxu0 0.0
    %735 = vmatprep.subr.mxu0 0.0
    %736 = vmatpush1.msra.mxu0 0.0
    %737 = vmatprep.subr.mxu0 0.0
    %738 = vmatpush1.msra.mxu0 0.0
    %739 = vmatprep.subr.mxu0 0.0
    %740 = vmatpush1.msra.mxu0 0.0
    %741 = vmatprep.subr.mxu0 0.0
    %742 = vmatpush1.msra.mxu0 0.0
    %743 = vmatprep.subr.mxu0 0.0
    %744 = vmatpush1.msra.mxu0 0.0
    %745 = vmatprep.subr.mxu0 0.0
    %746 = vmatpush1.msra.mxu0 0.0
    %747 = vmatprep.subr.mxu0 0.0
    %748 = vmatpush1.msra.mxu0 0.0
    %749 = vmatprep.subr.mxu0 0.0
    %750 = vmatpush1.msra.mxu0 0.0
    %751 = vmatprep.subr.mxu0 0.0
    %752 = vmatpush1.msra.mxu0 0.0
    %753 = vmatprep.subr.mxu0 0.0
    %754 = vmatpush1.msra.mxu0 0.0
    %755 = vmatprep.subr.mxu0 0.0
    %756 = vmatpush1.msra.mxu0 0.0
    %757 = vmatprep.subr.mxu0 0.0
    %758 = vmatpush1.msra.mxu0 0.0
    %759 = vmatprep.subr.mxu0 0.0
    %760 = vmatpush1.msra.mxu0 0.0
    %761 = vmatprep.subr.mxu0 0.0
    %762 = vmatpush1.msra.mxu0 0.0
    %763 = vmatprep.subr.mxu0 0.0
    %764 = vmatpush1.msra.mxu0 0.0
    %765 = vmatprep.subr.mxu0 0.0
    %766 = vmatpush1.msra.mxu0 0.0
    %767 = vmatprep.subr.mxu0 0.0
    %768 = vmatpush1.msra.mxu0 0.0
    %769 = vmatprep.mubr.f32.mxu0 0.0
    %770 = vmatmul.mubr.f32.gmra.mrb[0].mxu0 %v703
    %v771 = vpop.f32.mrb[0].mxu0
    %v772 = vadd.f32 0.0, %v771
    %v773 = vpop.f32.mrb[0].mxu0
    %774 = vdwg.mxu0
    %v776 = vrot.slane %v772, 4
    %v778 = vadd.f32 %v225, %v776
    %v779 = vxor.u32 %v778, 2147483648
    %v780 = vmul.f32 %v779, 1.442695
    %v781 = vpow.pop %v780
    %v782 = vadd.f32 %v781, 1.0
    %v783 = vrcp.pop %v782
    %v784 = vmul.f32 1.0, %v783
    %v785 = vadd.f32 %v772, %v328
    %v787 = vrot.slane %v785, 4
    %788 = vrot.lane.b32.xlu0 %v787, 64
    %v789 = vpop.permute.xlu0 %788
    %v791 = vmul.f32 %v784, %v789
    %793 = vrot.lane.b32.xlu0 %v791, 64
    %v794 = vpop.permute.xlu0 %793
    %v796 = vadd.f32 %v225, %v794
    %v797 = vtanh.pop %v796
    %v798 = vsub.f32 1.0, %v784
    %800 = vrot.lane.b32.xlu0 %v797, 96
    %v801 = vpop.permute.xlu0 %800
    %v803 = vmul.f32 %v798, %v801
    %v804 = vrot.slane %v575, 6
    %v806 = vmul.f32 %v784, %v804
    %v807 = vadd.f32 %v803, %v806
    %v809 = vrot.slane %v691, 4
    %v810 = vsel %vm151, %v809, 0
    %812 = vmatprep.subr.mxu0 0.0
    %813 = vmatpush1.msra.mxu0 %v127
    %814 = vmatprep.subr.mxu0 0.0
    %815 = vmatpush1.msra.mxu0 %v128
    %816 = vmatprep.subr.mxu0 0.0
    %817 = vmatpush1.msra.mxu0 %v129
    %818 = vmatprep.subr.mxu0 0.0
    %819 = vmatpush1.msra.mxu0 %v130
    %820 = vmatprep.subr.mxu0 0.0
    %821 = vmatpush1.msra.mxu0 0.0
    %822 = vmatprep.subr.mxu0 0.0
    %823 = vmatpush1.msra.mxu0 0.0
    %824 = vmatprep.subr.mxu0 0.0
    %825 = vmatpush1.msra.mxu0 0.0
    %826 = vmatprep.subr.mxu0 0.0
    %827 = vmatpush1.msra.mxu0 0.0
    %828 = vmatprep.subr.mxu0 0.0
    %829 = vmatpush1.msra.mxu0 0.0
    %830 = vmatprep.subr.mxu0 0.0
    %831 = vmatpush1.msra.mxu0 0.0
    %832 = vmatprep.subr.mxu0 0.0
    %833 = vmatpush1.msra.mxu0 0.0
    %834 = vmatprep.subr.mxu0 0.0
    %835 = vmatpush1.msra.mxu0 0.0
    %836 = vmatprep.subr.mxu0 0.0
    %837 = vmatpush1.msra.mxu0 0.0
    %838 = vmatprep.subr.mxu0 0.0
    %839 = vmatpush1.msra.mxu0 0.0
    %840 = vmatprep.subr.mxu0 0.0
    %841 = vmatpush1.msra.mxu0 0.0
    %842 = vmatprep.subr.mxu0 0.0
    %843 = vmatpush1.msra.mxu0 0.0
    %844 = vmatprep.subr.mxu0 0.0
    %845 = vmatpush1.msra.mxu0 0.0
    %846 = vmatprep.subr.mxu0 0.0
    %847 = vmatpush1.msra.mxu0 0.0
    %848 = vmatprep.subr.mxu0 0.0
    %849 = vmatpush1.msra.mxu0 0.0
    %850 = vmatprep.subr.mxu0 0.0
    %851 = vmatpush1.msra.mxu0 0.0
    %852 = vmatprep.subr.mxu0 0.0
    %853 = vmatpush1.msra.mxu0 0.0
    %854 = vmatprep.subr.mxu0 0.0
    %855 = vmatpush1.msra.mxu0 0.0
    %856 = vmatprep.subr.mxu0 0.0
    %857 = vmatpush1.msra.mxu0 0.0
    %858 = vmatprep.subr.mxu0 0.0
    %859 = vmatpush1.msra.mxu0 0.0
    %860 = vmatprep.subr.mxu0 0.0
    %861 = vmatpush1.msra.mxu0 0.0
    %862 = vmatprep.subr.mxu0 0.0
    %863 = vmatpush1.msra.mxu0 0.0
    %864 = vmatprep.subr.mxu0 0.0
    %865 = vmatpush1.msra.mxu0 0.0
    %866 = vmatprep.subr.mxu0 0.0
    %867 = vmatpush1.msra.mxu0 0.0
    %868 = vmatprep.subr.mxu0 0.0
    %869 = vmatpush1.msra.mxu0 0.0
    %870 = vmatprep.subr.mxu0 0.0
    %871 = vmatpush1.msra.mxu0 0.0
    %872 = vmatprep.subr.mxu0 0.0
    %873 = vmatpush1.msra.mxu0 0.0
    %874 = vmatprep.subr.mxu0 0.0
    %875 = vmatpush1.msra.mxu0 0.0
    %876 = vmatprep.mubr.f32.mxu0 0.0
    %877 = vmatmul.mubr.f32.gmra.mrb[0].mxu0 %v810
    %v878 = vpop.f32.mrb[0].mxu0
    %v879 = vadd.f32 0.0, %v878
    %v880 = vpop.f32.mrb[0].mxu0
    %881 = vdwg.mxu0
    %v883 = vrot.slane %v879, 6
    %884 = vrot.lane.b32.xlu0 %v883, 96
    %v885 = vpop.permute.xlu0 %884
    %v887 = vadd.f32 %v231, %v885
    %v888 = vxor.u32 %v887, 2147483648
    %v889 = vmul.f32 %v888, 1.442695
    %v890 = vpow.pop %v889
    %v891 = vadd.f32 %v890, 1.0
    %v892 = vrcp.pop %v891
    %v893 = vmul.f32 1.0, %v892
    %v894 = vadd.f32 %v233, %v885
    %v895 = vxor.u32 %v894, 2147483648
    %v896 = vmul.f32 %v895, 1.442695
    %v897 = vpow.pop %v896
    %v898 = vadd.f32 %v897, 1.0
    %v899 = vrcp.pop %v898
    %v900 = vmul.f32 1.0, %v899
    %v901 = vadd.f32 %v879, %v440
    %v903 = vrot.slane %v901, 6
    %904 = vrot.lane.b32.xlu0 %v903, 32
    %v905 = vpop.permute.xlu0 %904
    %v907 = vmul.f32 %v893, %v905
    %909 = vrot.lane.b32.xlu0 %v907, 64
    %v910 = vpop.permute.xlu0 %909
    %v912 = vadd.f32 %v233, %v910
    %v913 = vtanh.pop %v912
    %v914 = vsub.f32 1.0, %v900
    %916 = vrot.lane.b32.xlu0 %v913, 96
    %v917 = vpop.permute.xlu0 %916
    %v919 = vmul.f32 %v914, %v917
    %v920 = vrot.slane %v691, 2
    %v922 = vmul.f32 %v900, %v920
    %v923 = vadd.f32 %v919, %v922
    %925 = vrot.lane.b32.xlu0 %v807, 96
    %v926 = vpop.permute.xlu0 %925
    %928 = vst.msk [vmem:[#allocation2] sm:$0x30] %vm698, %v926
    %929 = vst.msk [vmem:[#allocation3 + $0x8] sm:$0xc] %vm696, %v923
    %v930 = vrot.slane %v807, 4
    %931 = vrot.lane.b32.xlu0 %v930, 96
    %v932 = vpop.permute.xlu0 %931
    %v933 = vsel %vm151, %v932, 0
    %935 = vmatprep.subr.mxu0 0.0
    %936 = vmatpush1.msra.mxu0 %v123
    %937 = vmatprep.subr.mxu0 0.0
    %938 = vmatpush1.msra.mxu0 %v124
    %939 = vmatprep.subr.mxu0 0.0
    %940 = vmatpush1.msra.mxu0 %v125
    %941 = vmatprep.subr.mxu0 0.0
    %942 = vmatpush1.msra.mxu0 %v126
    %943 = vmatprep.subr.mxu0 0.0
    %944 = vmatpush1.msra.mxu0 0.0
    %945 = vmatprep.subr.mxu0 0.0
    %946 = vmatpush1.msra.mxu0 0.0
    %947 = vmatprep.subr.mxu0 0.0
    %948 = vmatpush1.msra.mxu0 0.0
    %949 = vmatprep.subr.mxu0 0.0
    %950 = vmatpush1.msra.mxu0 0.0
    %951 = vmatprep.subr.mxu0 0.0
    %952 = vmatpush1.msra.mxu0 0.0
    %953 = vmatprep.subr.mxu0 0.0
    %954 = vmatpush1.msra.mxu0 0.0
    %955 = vmatprep.subr.mxu0 0.0
    %956 = vmatpush1.msra.mxu0 0.0
    %957 = vmatprep.subr.mxu0 0.0
    %958 = vmatpush1.msra.mxu0 0.0
    %959 = vmatprep.subr.mxu0 0.0
    %960 = vmatpush1.msra.mxu0 0.0
    %961 = vmatprep.subr.mxu0 0.0
    %962 = vmatpush1.msra.mxu0 0.0
    %963 = vmatprep.subr.mxu0 0.0
    %964 = vmatpush1.msra.mxu0 0.0
    %965 = vmatprep.subr.mxu0 0.0
    %966 = vmatpush1.msra.mxu0 0.0
    %967 = vmatprep.subr.mxu0 0.0
    %968 = vmatpush1.msra.mxu0 0.0
    %969 = vmatprep.subr.mxu0 0.0
    %970 = vmatpush1.msra.mxu0 0.0
    %971 = vmatprep.subr.mxu0 0.0
    %972 = vmatpush1.msra.mxu0 0.0
    %973 = vmatprep.subr.mxu0 0.0
    %974 = vmatpush1.msra.mxu0 0.0
    %975 = vmatprep.subr.mxu0 0.0
    %976 = vmatpush1.msra.mxu0 0.0
    %977 = vmatprep.subr.mxu0 0.0
    %978 = vmatpush1.msra.mxu0 0.0
    %979 = vmatprep.subr.mxu0 0.0
    %980 = vmatpush1.msra.mxu0 0.0
    %981 = vmatprep.subr.mxu0 0.0
    %982 = vmatpush1.msra.mxu0 0.0
    %983 = vmatprep.subr.mxu0 0.0
    %984 = vmatpush1.msra.mxu0 0.0
    %985 = vmatprep.subr.mxu0 0.0
    %986 = vmatpush1.msra.mxu0 0.0
    %987 = vmatprep.subr.mxu0 0.0
    %988 = vmatpush1.msra.mxu0 0.0
    %989 = vmatprep.subr.mxu0 0.0
    %990 = vmatpush1.msra.mxu0 0.0
    %991 = vmatprep.subr.mxu0 0.0
    %992 = vmatpush1.msra.mxu0 0.0
    %993 = vmatprep.subr.mxu0 0.0
    %994 = vmatpush1.msra.mxu0 0.0
    %995 = vmatprep.subr.mxu0 0.0
    %996 = vmatpush1.msra.mxu0 0.0
    %997 = vmatprep.subr.mxu0 0.0
    %998 = vmatpush1.msra.mxu0 0.0
    %999 = vmatprep.mubr.f32.mxu0 0.0
    %1000 = vmatmul.mubr.f32.gmra.mrb[0].mxu0 %v933
    %v1001 = vpop.f32.mrb[0].mxu0
    %v1002 = vadd.f32 0.0, %v1001
    %v1003 = vpop.f32.mrb[0].mxu0
    %1004 = vdwg.mxu0
    %v1006 = vrot.slane %v1002, 2
    %v1008 = vadd.f32 %v225, %v1006
    %v1009 = vxor.u32 %v1008, 2147483648
    %v1010 = vmul.f32 %v1009, 1.442695
    %v1011 = vpow.pop %v1010
    %v1012 = vadd.f32 %v1011, 1.0
    %v1013 = vrcp.pop %v1012
    %v1014 = vmul.f32 1.0, %v1013
    %v1015 = vadd.f32 %v1002, %v328
    %v1017 = vrot.slane %v1015, 2
    %1018 = vrot.lane.b32.xlu0 %v1017, 64
    %v1019 = vpop.permute.xlu0 %1018
    %v1021 = vmul.f32 %v1014, %v1019
    %1023 = vrot.lane.b32.xlu0 %v1021, 64
    %v1024 = vpop.permute.xlu0 %1023
    %v1026 = vadd.f32 %v225, %v1024
    %v1027 = vtanh.pop %v1026
    %v1028 = vsub.f32 1.0, %v1014
    %1030 = vrot.lane.b32.xlu0 %v1027, 96
    %v1031 = vpop.permute.xlu0 %1030
    %v1033 = vmul.f32 %v1028, %v1031
    %v1034 = vrot.slane %v807, 6
    %v1036 = vmul.f32 %v1014, %v1034
    %v1037 = vadd.f32 %v1033, %v1036
    %v1039 = vrot.slane %v923, 2
    %v1040 = vsel %vm151, %v1039, 0
    %1042 = vmatprep.subr.mxu0 0.0
    %1043 = vmatpush1.msra.mxu0 %v127
    %1044 = vmatprep.subr.mxu0 0.0
    %1045 = vmatpush1.msra.mxu0 %v128
    %1046 = vmatprep.subr.mxu0 0.0
    %1047 = vmatpush1.msra.mxu0 %v129
    %1048 = vmatprep.subr.mxu0 0.0
    %1049 = vmatpush1.msra.mxu0 %v130
    %1050 = vmatprep.subr.mxu0 0.0
    %1051 = vmatpush1.msra.mxu0 0.0
    %1052 = vmatprep.subr.mxu0 0.0
    %1053 = vmatpush1.msra.mxu0 0.0
    %1054 = vmatprep.subr.mxu0 0.0
    %1055 = vmatpush1.msra.mxu0 0.0
    %1056 = vmatprep.subr.mxu0 0.0
    %1057 = vmatpush1.msra.mxu0 0.0
    %1058 = vmatprep.subr.mxu0 0.0
    %1059 = vmatpush1.msra.mxu0 0.0
    %1060 = vmatprep.subr.mxu0 0.0
    %1061 = vmatpush1.msra.mxu0 0.0
    %1062 = vmatprep.subr.mxu0 0.0
    %1063 = vmatpush1.msra.mxu0 0.0
    %1064 = vmatprep.subr.mxu0 0.0
    %1065 = vmatpush1.msra.mxu0 0.0
    %1066 = vmatprep.subr.mxu0 0.0
    %1067 = vmatpush1.msra.mxu0 0.0
    %1068 = vmatprep.subr.mxu0 0.0
    %1069 = vmatpush1.msra.mxu0 0.0
    %1070 = vmatprep.subr.mxu0 0.0
    %1071 = vmatpush1.msra.mxu0 0.0
    %1072 = vmatprep.subr.mxu0 0.0
    %1073 = vmatpush1.msra.mxu0 0.0
    %1074 = vmatprep.subr.mxu0 0.0
    %1075 = vmatpush1.msra.mxu0 0.0
    %1076 = vmatprep.subr.mxu0 0.0
    %1077 = vmatpush1.msra.mxu0 0.0
    %1078 = vmatprep.subr.mxu0 0.0
    %1079 = vmatpush1.msra.mxu0 0.0
    %1080 = vmatprep.subr.mxu0 0.0
    %1081 = vmatpush1.msra.mxu0 0.0
    %1082 = vmatprep.subr.mxu0 0.0
    %1083 = vmatpush1.msra.mxu0 0.0
    %1084 = vmatprep.subr.mxu0 0.0
    %1085 = vmatpush1.msra.mxu0 0.0
    %1086 = vmatprep.subr.mxu0 0.0
    %1087 = vmatpush1.msra.mxu0 0.0
    %1088 = vmatprep.subr.mxu0 0.0
    %1089 = vmatpush1.msra.mxu0 0.0
    %1090 = vmatprep.subr.mxu0 0.0
    %1091 = vmatpush1.msra.mxu0 0.0
    %1092 = vmatprep.subr.mxu0 0.0
    %1093 = vmatpush1.msra.mxu0 0.0
    %1094 = vmatprep.subr.mxu0 0.0
    %1095 = vmatpush1.msra.mxu0 0.0
    %1096 = vmatprep.subr.mxu0 0.0
    %1097 = vmatpush1.msra.mxu0 0.0
    %1098 = vmatprep.subr.mxu0 0.0
    %1099 = vmatpush1.msra.mxu0 0.0
    %1100 = vmatprep.subr.mxu0 0.0
    %1101 = vmatpush1.msra.mxu0 0.0
    %1102 = vmatprep.subr.mxu0 0.0
    %1103 = vmatpush1.msra.mxu0 0.0
    %1104 = vmatprep.subr.mxu0 0.0
    %1105 = vmatpush1.msra.mxu0 0.0
    %1106 = vmatprep.mubr.f32.mxu0 0.0
    %1107 = vmatmul.mubr.f32.gmra.mrb[0].mxu0 %v1040
    %v1108 = vpop.f32.mrb[0].mxu0
    %v1109 = vadd.f32 0.0, %v1108
    %v1110 = vpop.f32.mrb[0].mxu0
    %1111 = vdwg.mxu0
    %1113 = vrot.lane.b32.xlu0 %v1109, 96
    %v1114 = vpop.permute.xlu0 %1113
    %v1116 = vadd.f32 %v231, %v1114
    %v1117 = vxor.u32 %v1116, 2147483648
    %v1118 = vmul.f32 %v1117, 1.442695
    %v1119 = vpow.pop %v1118
    %v1120 = vadd.f32 %v1119, 1.0
    %v1121 = vrcp.pop %v1120
    %v1122 = vmul.f32 1.0, %v1121
    %v1123 = vadd.f32 %v233, %v1114
    %v1124 = vxor.u32 %v1123, 2147483648
    %v1125 = vmul.f32 %v1124, 1.442695
    %v1126 = vpow.pop %v1125
    %v1127 = vadd.f32 %v1126, 1.0
    %v1128 = vrcp.pop %v1127
    %v1129 = vmul.f32 1.0, %v1128
    %v1130 = vadd.f32 %v1109, %v440
    %1132 = vrot.lane.b32.xlu0 %v1130, 32
    %v1133 = vpop.permute.xlu0 %1132
    %v1135 = vmul.f32 %v1122, %v1133
    %1137 = vrot.lane.b32.xlu0 %v1135, 64
    %v1138 = vpop.permute.xlu0 %1137
    %v1140 = vadd.f32 %v233, %v1138
    %v1141 = vtanh.pop %v1140
    %v1142 = vsub.f32 1.0, %v1129
    %1144 = vrot.lane.b32.xlu0 %v1141, 96
    %v1145 = vpop.permute.xlu0 %1144
    %v1147 = vmul.f32 %v1142, %v1145
    %v1149 = vmul.f32 %v1129, %v1039
    %v1150 = vadd.f32 %v1147, %v1149
    %1152 = vrot.lane.b32.xlu0 %v1037, 96
    %v1153 = vpop.permute.xlu0 %1152
    %1155 = vst.msk [vmem:[#allocation2] sm:$0xc0] %vm469, %v1153
    %1156 = vst.msk [vmem:[#allocation3 + $0x8] sm:$0x3] %vm467, %v1150
    %v1157 = vrot.slane %v1037, 6
    %1158 = vrot.lane.b32.xlu0 %v1157, 96
    %v1159 = vpop.permute.xlu0 %1158
    %v1160 = vsel %vm151, %v1159, 0
    %1162 = vmatprep.subr.mxu0 0.0
    %1163 = vmatpush1.msra.mxu0 %v123
    %1164 = vmatprep.subr.mxu0 0.0
    %1165 = vmatpush1.msra.mxu0 %v124
    %1166 = vmatprep.subr.mxu0 0.0
    %1167 = vmatpush1.msra.mxu0 %v125
    %1168 = vmatprep.subr.mxu0 0.0
    %1169 = vmatpush1.msra.mxu0 %v126
    %1170 = vmatprep.subr.mxu0 0.0
    %1171 = vmatpush1.msra.mxu0 0.0
    %1172 = vmatprep.subr.mxu0 0.0
    %1173 = vmatpush1.msra.mxu0 0.0
    %1174 = vmatprep.subr.mxu0 0.0
    %1175 = vmatpush1.msra.mxu0 0.0
    %1176 = vmatprep.subr.mxu0 0.0
    %1177 = vmatpush1.msra.mxu0 0.0
    %1178 = vmatprep.subr.mxu0 0.0
    %1179 = vmatpush1.msra.mxu0 0.0
    %1180 = vmatprep.subr.mxu0 0.0
    %1181 = vmatpush1.msra.mxu0 0.0
    %1182 = vmatprep.subr.mxu0 0.0
    %1183 = vmatpush1.msra.mxu0 0.0
    %1184 = vmatprep.subr.mxu0 0.0
    %1185 = vmatpush1.msra.mxu0 0.0
    %1186 = vmatprep.subr.mxu0 0.0
    %1187 = vmatpush1.msra.mxu0 0.0
    %1188 = vmatprep.subr.mxu0 0.0
    %1189 = vmatpush1.msra.mxu0 0.0
    %1190 = vmatprep.subr.mxu0 0.0
    %1191 = vmatpush1.msra.mxu0 0.0
    %1192 = vmatprep.subr.mxu0 0.0
    %1193 = vmatpush1.msra.mxu0 0.0
    %1194 = vmatprep.subr.mxu0 0.0
    %1195 = vmatpush1.msra.mxu0 0.0
    %1196 = vmatprep.subr.mxu0 0.0
    %1197 = vmatpush1.msra.mxu0 0.0
    %1198 = vmatprep.subr.mxu0 0.0
    %1199 = vmatpush1.msra.mxu0 0.0
    %1200 = vmatprep.subr.mxu0 0.0
    %1201 = vmatpush1.msra.mxu0 0.0
    %1202 = vmatprep.subr.mxu0 0.0
    %1203 = vmatpush1.msra.mxu0 0.0
    %1204 = vmatprep.subr.mxu0 0.0
    %1205 = vmatpush1.msra.mxu0 0.0
    %1206 = vmatprep.subr.mxu0 0.0
    %1207 = vmatpush1.msra.mxu0 0.0
    %1208 = vmatprep.subr.mxu0 0.0
    %1209 = vmatpush1.msra.mxu0 0.0
    %1210 = vmatprep.subr.mxu0 0.0
    %1211 = vmatpush1.msra.mxu0 0.0
    %1212 = vmatprep.subr.mxu0 0.0
    %1213 = vmatpush1.msra.mxu0 0.0
    %1214 = vmatprep.subr.mxu0 0.0
    %1215 = vmatpush1.msra.mxu0 0.0
    %1216 = vmatprep.subr.mxu0 0.0
    %1217 = vmatpush1.msra.mxu0 0.0
    %1218 = vmatprep.subr.mxu0 0.0
    %1219 = vmatpush1.msra.mxu0 0.0
    %1220 = vmatprep.subr.mxu0 0.0
    %1221 = vmatpush1.msra.mxu0 0.0
    %1222 = vmatprep.subr.mxu0 0.0
    %1223 = vmatpush1.msra.mxu0 0.0
    %1224 = vmatprep.subr.mxu0 0.0
    %1225 = vmatpush1.msra.mxu0 0.0
    %1226 = vmatprep.mubr.f32.mxu0 0.0
    %1227 = vmatmul.mubr.f32.gmra.mrb[0].mxu0 %v1160
    %v1228 = vpop.f32.mrb[0].mxu0
    %v1229 = vadd.f32 0.0, %v1228
    %v1230 = vpop.f32.mrb[0].mxu0
    %1231 = vdwg.mxu0
    %v1232 = vadd.f32 %v231, %v1229
    %v1233 = vxor.u32 %v1232, 2147483648
    %v1234 = vmul.f32 %v1233, 1.442695
    %v1235 = vpow.pop %v1234
    %v1236 = vadd.f32 %v1235, 1.0
    %v1237 = vrcp.pop %v1236
    %v1238 = vmul.f32 1.0, %v1237
    %v1239 = vadd.f32 %v1229, %v328
    %1241 = vrot.lane.b32.xlu0 %v1239, 64
    %v1242 = vpop.permute.xlu0 %1241
    %v1244 = vmul.f32 %v1238, %v1242
    %1246 = vrot.lane.b32.xlu0 %v1244, 64
    %v1247 = vpop.permute.xlu0 %1246
    %v1249 = vadd.f32 %v231, %v1247
    %v1250 = vtanh.pop %v1249
    %v1251 = vsub.f32 1.0, %v1238
    %1253 = vrot.lane.b32.xlu0 %v1250, 96
    %v1254 = vpop.permute.xlu0 %1253
    %v1256 = vmul.f32 %v1251, %v1254
    %v1258 = vmul.f32 %v1238, %v1157
    %v1259 = vadd.f32 %v1256, %v1258
    %v1261 = vsel %vm151, %v1150, 0
    %1263 = vmatprep.subr.mxu0 0.0
    %1264 = vmatpush1.msra.mxu0 %v127
    %1265 = vmatprep.subr.mxu0 0.0
    %1266 = vmatpush1.msra.mxu0 %v128
    %1267 = vmatprep.subr.mxu0 0.0
    %1268 = vmatpush1.msra.mxu0 %v129
    %1269 = vmatprep.subr.mxu0 0.0
    %1270 = vmatpush1.msra.mxu0 %v130
    %1271 = vmatprep.subr.mxu0 0.0
    %1272 = vmatpush1.msra.mxu0 0.0
    %1273 = vmatprep.subr.mxu0 0.0
    %1274 = vmatpush1.msra.mxu0 0.0
    %1275 = vmatprep.subr.mxu0 0.0
    %1276 = vmatpush1.msra.mxu0 0.0
    %1277 = vmatprep.subr.mxu0 0.0
    %1278 = vmatpush1.msra.mxu0 0.0
    %1279 = vmatprep.subr.mxu0 0.0
    %1280 = vmatpush1.msra.mxu0 0.0
    %1281 = vmatprep.subr.mxu0 0.0
    %1282 = vmatpush1.msra.mxu0 0.0
    %1283 = vmatprep.subr.mxu0 0.0
    %1284 = vmatpush1.msra.mxu0 0.0
    %1285 = vmatprep.subr.mxu0 0.0
    %1286 = vmatpush1.msra.mxu0 0.0
    %1287 = vmatprep.subr.mxu0 0.0
    %1288 = vmatpush1.msra.mxu0 0.0
    %1289 = vmatprep.subr.mxu0 0.0
    %1290 = vmatpush1.msra.mxu0 0.0
    %1291 = vmatprep.subr.mxu0 0.0
    %1292 = vmatpush1.msra.mxu0 0.0
    %1293 = vmatprep.subr.mxu0 0.0
    %1294 = vmatpush1.msra.mxu0 0.0
    %1295 = vmatprep.subr.mxu0 0.0
    %1296 = vmatpush1.msra.mxu0 0.0
    %1297 = vmatprep.subr.mxu0 0.0
    %1298 = vmatpush1.msra.mxu0 0.0
    %1299 = vmatprep.subr.mxu0 0.0
    %1300 = vmatpush1.msra.mxu0 0.0
    %1301 = vmatprep.subr.mxu0 0.0
    %1302 = vmatpush1.msra.mxu0 0.0
    %1303 = vmatprep.subr.mxu0 0.0
    %1304 = vmatpush1.msra.mxu0 0.0
    %1305 = vmatprep.subr.mxu0 0.0
    %1306 = vmatpush1.msra.mxu0 0.0
    %1307 = vmatprep.subr.mxu0 0.0
    %1308 = vmatpush1.msra.mxu0 0.0
    %1309 = vmatprep.subr.mxu0 0.0
    %1310 = vmatpush1.msra.mxu0 0.0
    %1311 = vmatprep.subr.mxu0 0.0
    %1312 = vmatpush1.msra.mxu0 0.0
    %1313 = vmatprep.subr.mxu0 0.0
    %1314 = vmatpush1.msra.mxu0 0.0
    %1315 = vmatprep.subr.mxu0 0.0
    %1316 = vmatpush1.msra.mxu0 0.0
    %1317 = vmatprep.subr.mxu0 0.0
    %1318 = vmatpush1.msra.mxu0 0.0
    %1319 = vmatprep.subr.mxu0 0.0
    %1320 = vmatpush1.msra.mxu0 0.0
    %1321 = vmatprep.subr.mxu0 0.0
    %1322 = vmatpush1.msra.mxu0 0.0
    %1323 = vmatprep.subr.mxu0 0.0
    %1324 = vmatpush1.msra.mxu0 0.0
    %1325 = vmatprep.subr.mxu0 0.0
    %1326 = vmatpush1.msra.mxu0 0.0
    %1327 = vmatprep.mubr.f32.mxu0 0.0
    %1328 = vmatmul.mubr.f32.gmra.mrb[0].mxu0 %v1261
    %v1329 = vpop.f32.mrb[0].mxu0
    %v1330 = vadd.f32 0.0, %v1329
    %v1331 = vpop.f32.mrb[0].mxu0
    %1332 = vdwg.mxu0
    %v1334 = vrot.slane %v1330, 2
    %1335 = vrot.lane.b32.xlu0 %v1334, 96
    %v1336 = vpop.permute.xlu0 %1335
    %v1338 = vadd.f32 %v225, %v1336
    %v1339 = vxor.u32 %v1338, 2147483648
    %v1340 = vmul.f32 %v1339, 1.442695
    %v1341 = vpow.pop %v1340
    %v1342 = vadd.f32 %v1341, 1.0
    %v1343 = vrcp.pop %v1342
    %v1344 = vmul.f32 1.0, %v1343
    %v1345 = vadd.f32 %v227, %v1336
    %v1346 = vxor.u32 %v1345, 2147483648
    %v1347 = vmul.f32 %v1346, 1.442695
    %v1348 = vpow.pop %v1347
    %v1349 = vadd.f32 %v1348, 1.0
    %v1350 = vrcp.pop %v1349
    %v1351 = vmul.f32 1.0, %v1350
    %v1352 = vadd.f32 %v1330, %v440
    %v1354 = vrot.slane %v1352, 2
    %1355 = vrot.lane.b32.xlu0 %v1354, 32
    %v1356 = vpop.permute.xlu0 %1355
    %v1358 = vmul.f32 %v1344, %v1356
    %1360 = vrot.lane.b32.xlu0 %v1358, 64
    %v1361 = vpop.permute.xlu0 %1360
    %v1363 = vadd.f32 %v227, %v1361
    %v1364 = vtanh.pop %v1363
    %v1365 = vsub.f32 1.0, %v1351
    %1367 = vrot.lane.b32.xlu0 %v1364, 96
    %v1368 = vpop.permute.xlu0 %1367
    %v1370 = vmul.f32 %v1365, %v1368
    %v1371 = vrot.slane %v1150, 2
    %v1373 = vmul.f32 %v1351, %v1371
    %v1374 = vadd.f32 %v1370, %v1373
    %1376 = vrot.lane.b32.xlu0 %v1259, 96
    %v1377 = vpop.permute.xlu0 %1376
    %1379 = vst.msk [vmem:[#allocation2 + $0x8] sm:$0x3] %vm467, %v1377
    %1380 = vst.msk [vmem:[#allocation3] sm:$0xc0] %vm469, %v1374
    %v1381 = vsel %vm151, %v1377, 0
    %1383 = vmatprep.subr.mxu0 0.0
    %1384 = vmatpush1.msra.mxu0 %v123
    %1385 = vmatprep.subr.mxu0 0.0
    %1386 = vmatpush1.msra.mxu0 %v124
    %1387 = vmatprep.subr.mxu0 0.0
    %1388 = vmatpush1.msra.mxu0 %v125
    %1389 = vmatprep.subr.mxu0 0.0
    %1390 = vmatpush1.msra.mxu0 %v126
    %1391 = vmatprep.subr.mxu0 0.0
    %1392 = vmatpush1.msra.mxu0 0.0
    %1393 = vmatprep.subr.mxu0 0.0
    %1394 = vmatpush1.msra.mxu0 0.0
    %1395 = vmatprep.subr.mxu0 0.0
    %1396 = vmatpush1.msra.mxu0 0.0
    %1397 = vmatprep.subr.mxu0 0.0
    %1398 = vmatpush1.msra.mxu0 0.0
    %1399 = vmatprep.subr.mxu0 0.0
    %1400 = vmatpush1.msra.mxu0 0.0
    %1401 = vmatprep.subr.mxu0 0.0
    %1402 = vmatpush1.msra.mxu0 0.0
    %1403 = vmatprep.subr.mxu0 0.0
    %1404 = vmatpush1.msra.mxu0 0.0
    %1405 = vmatprep.subr.mxu0 0.0
    %1406 = vmatpush1.msra.mxu0 0.0
    %1407 = vmatprep.subr.mxu0 0.0
    %1408 = vmatpush1.msra.mxu0 0.0
    %1409 = vmatprep.subr.mxu0 0.0
    %1410 = vmatpush1.msra.mxu0 0.0
    %1411 = vmatprep.subr.mxu0 0.0
    %1412 = vmatpush1.msra.mxu0 0.0
    %1413 = vmatprep.subr.mxu0 0.0
    %1414 = vmatpush1.msra.mxu0 0.0
    %1415 = vmatprep.subr.mxu0 0.0
    %1416 = vmatpush1.msra.mxu0 0.0
    %1417 = vmatprep.subr.mxu0 0.0
    %1418 = vmatpush1.msra.mxu0 0.0
    %1419 = vmatprep.subr.mxu0 0.0
    %1420 = vmatpush1.msra.mxu0 0.0
    %1421 = vmatprep.subr.mxu0 0.0
    %1422 = vmatpush1.msra.mxu0 0.0
    %1423 = vmatprep.subr.mxu0 0.0
    %1424 = vmatpush1.msra.mxu0 0.0
    %1425 = vmatprep.subr.mxu0 0.0
    %1426 = vmatpush1.msra.mxu0 0.0
    %1427 = vmatprep.subr.mxu0 0.0
    %1428 = vmatpush1.msra.mxu0 0.0
    %1429 = vmatprep.subr.mxu0 0.0
    %1430 = vmatpush1.msra.mxu0 0.0
    %1431 = vmatprep.subr.mxu0 0.0
    %1432 = vmatpush1.msra.mxu0 0.0
    %1433 = vmatprep.subr.mxu0 0.0
    %1434 = vmatpush1.msra.mxu0 0.0
    %1435 = vmatprep.subr.mxu0 0.0
    %1436 = vmatpush1.msra.mxu0 0.0
    %1437 = vmatprep.subr.mxu0 0.0
    %1438 = vmatpush1.msra.mxu0 0.0
    %1439 = vmatprep.subr.mxu0 0.0
    %1440 = vmatpush1.msra.mxu0 0.0
    %1441 = vmatprep.subr.mxu0 0.0
    %1442 = vmatpush1.msra.mxu0 0.0
    %1443 = vmatprep.subr.mxu0 0.0
    %1444 = vmatpush1.msra.mxu0 0.0
    %1445 = vmatprep.subr.mxu0 0.0
    %1446 = vmatpush1.msra.mxu0 0.0
    %1447 = vmatprep.mubr.f32.mxu0 0.0
    %1448 = vmatmul.mubr.f32.gmra.mrb[0].mxu0 %v1381
    %v1449 = vpop.f32.mrb[0].mxu0
    %v1450 = vadd.f32 0.0, %v1449
    %v1451 = vpop.f32.mrb[0].mxu0
    %1452 = vdwg.mxu0
    %v1454 = vrot.slane %v1450, 6
    %v1456 = vadd.f32 %v231, %v1454
    %v1457 = vxor.u32 %v1456, 2147483648
    %v1458 = vmul.f32 %v1457, 1.442695
    %v1459 = vpow.pop %v1458
    %v1460 = vadd.f32 %v1459, 1.0
    %v1461 = vrcp.pop %v1460
    %v1462 = vmul.f32 1.0, %v1461
    %v1463 = vadd.f32 %v1450, %v328
    %v1465 = vrot.slane %v1463, 6
    %1466 = vrot.lane.b32.xlu0 %v1465, 64
    %v1467 = vpop.permute.xlu0 %1466
    %v1469 = vmul.f32 %v1462, %v1467
    %1471 = vrot.lane.b32.xlu0 %v1469, 64
    %v1472 = vpop.permute.xlu0 %1471
    %v1474 = vadd.f32 %v231, %v1472
    %v1475 = vtanh.pop %v1474
    %v1476 = vsub.f32 1.0, %v1462
    %1478 = vrot.lane.b32.xlu0 %v1475, 96
    %v1479 = vpop.permute.xlu0 %1478
    %v1481 = vmul.f32 %v1476, %v1479
    %v1482 = vrot.slane %v1259, 6
    %v1484 = vmul.f32 %v1462, %v1482
    %v1485 = vadd.f32 %v1481, %v1484
    %v1487 = vrot.slane %v1374, 6
    %v1488 = vsel %vm151, %v1487, 0
    %1490 = vmatprep.subr.mxu0 0.0
    %1491 = vmatpush1.msra.mxu0 %v127
    %1492 = vmatprep.subr.mxu0 0.0
    %1493 = vmatpush1.msra.mxu0 %v128
    %1494 = vmatprep.subr.mxu0 0.0
    %1495 = vmatpush1.msra.mxu0 %v129
    %1496 = vmatprep.subr.mxu0 0.0
    %1497 = vmatpush1.msra.mxu0 %v130
    %1498 = vmatprep.subr.mxu0 0.0
    %1499 = vmatpush1.msra.mxu0 0.0
    %1500 = vmatprep.subr.mxu0 0.0
    %1501 = vmatpush1.msra.mxu0 0.0
    %1502 = vmatprep.subr.mxu0 0.0
    %1503 = vmatpush1.msra.mxu0 0.0
    %1504 = vmatprep.subr.mxu0 0.0
    %1505 = vmatpush1.msra.mxu0 0.0
    %1506 = vmatprep.subr.mxu0 0.0
    %1507 = vmatpush1.msra.mxu0 0.0
    %1508 = vmatprep.subr.mxu0 0.0
    %1509 = vmatpush1.msra.mxu0 0.0
    %1510 = vmatprep.subr.mxu0 0.0
    %1511 = vmatpush1.msra.mxu0 0.0
    %1512 = vmatprep.subr.mxu0 0.0
    %1513 = vmatpush1.msra.mxu0 0.0
    %1514 = vmatprep.subr.mxu0 0.0
    %1515 = vmatpush1.msra.mxu0 0.0
    %1516 = vmatprep.subr.mxu0 0.0
    %1517 = vmatpush1.msra.mxu0 0.0
    %1518 = vmatprep.subr.mxu0 0.0
    %1519 = vmatpush1.msra.mxu0 0.0
    %1520 = vmatprep.subr.mxu0 0.0
    %1521 = vmatpush1.msra.mxu0 0.0
    %1522 = vmatprep.subr.mxu0 0.0
    %1523 = vmatpush1.msra.mxu0 0.0
    %1524 = vmatprep.subr.mxu0 0.0
    %1525 = vmatpush1.msra.mxu0 0.0
    %1526 = vmatprep.subr.mxu0 0.0
    %1527 = vmatpush1.msra.mxu0 0.0
    %1528 = vmatprep.subr.mxu0 0.0
    %1529 = vmatpush1.msra.mxu0 0.0
    %1530 = vmatprep.subr.mxu0 0.0
    %1531 = vmatpush1.msra.mxu0 0.0
    %1532 = vmatprep.subr.mxu0 0.0
    %1533 = vmatpush1.msra.mxu0 0.0
    %1534 = vmatprep.subr.mxu0 0.0
    %1535 = vmatpush1.msra.mxu0 0.0
    %1536 = vmatprep.subr.mxu0 0.0
    %1537 = vmatpush1.msra.mxu0 0.0
    %1538 = vmatprep.subr.mxu0 0.0
    %1539 = vmatpush1.msra.mxu0 0.0
    %1540 = vmatprep.subr.mxu0 0.0
    %1541 = vmatpush1.msra.mxu0 0.0
    %1542 = vmatprep.subr.mxu0 0.0
    %1543 = vmatpush1.msra.mxu0 0.0
    %1544 = vmatprep.subr.mxu0 0.0
    %1545 = vmatpush1.msra.mxu0 0.0
    %1546 = vmatprep.subr.mxu0 0.0
    %1547 = vmatpush1.msra.mxu0 0.0
    %1548 = vmatprep.subr.mxu0 0.0
    %1549 = vmatpush1.msra.mxu0 0.0
    %1550 = vmatprep.subr.mxu0 0.0
    %1551 = vmatpush1.msra.mxu0 0.0
    %1552 = vmatprep.subr.mxu0 0.0
    %1553 = vmatpush1.msra.mxu0 0.0
    %1554 = vmatprep.mubr.f32.mxu0 0.0
    %1555 = vmatmul.mubr.f32.gmra.mrb[0].mxu0 %v1488
    %v1556 = vpop.f32.mrb[0].mxu0
    %v1557 = vadd.f32 0.0, %v1556
    %v1558 = vpop.f32.mrb[0].mxu0
    %1559 = vdwg.mxu0
    %v1561 = vrot.slane %v1557, 4
    %1562 = vrot.lane.b32.xlu0 %v1561, 96
    %v1563 = vpop.permute.xlu0 %1562
    %v1565 = vadd.f32 %v225, %v1563
    %v1566 = vxor.u32 %v1565, 2147483648
    %v1567 = vmul.f32 %v1566, 1.442695
    %v1568 = vpow.pop %v1567
    %v1569 = vadd.f32 %v1568, 1.0
    %v1570 = vrcp.pop %v1569
    %v1571 = vmul.f32 1.0, %v1570
    %v1572 = vadd.f32 %v227, %v1563
    %v1573 = vxor.u32 %v1572, 2147483648
    %v1574 = vmul.f32 %v1573, 1.442695
    %v1575 = vpow.pop %v1574
    %v1576 = vadd.f32 %v1575, 1.0
    %v1577 = vrcp.pop %v1576
    %v1578 = vmul.f32 1.0, %v1577
    %v1579 = vadd.f32 %v1557, %v440
    %v1581 = vrot.slane %v1579, 4
    %1582 = vrot.lane.b32.xlu0 %v1581, 32
    %v1583 = vpop.permute.xlu0 %1582
    %v1585 = vmul.f32 %v1571, %v1583
    %1587 = vrot.lane.b32.xlu0 %v1585, 64
    %v1588 = vpop.permute.xlu0 %1587
    %v1590 = vadd.f32 %v227, %v1588
    %v1591 = vtanh.pop %v1590
    %v1592 = vsub.f32 1.0, %v1578
    %1594 = vrot.lane.b32.xlu0 %v1591, 96
    %v1595 = vpop.permute.xlu0 %1594
    %v1597 = vmul.f32 %v1592, %v1595
    %v1598 = vrot.slane %v1374, 2
    %v1600 = vmul.f32 %v1578, %v1598
    %v1601 = vadd.f32 %v1597, %v1600
    %1603 = vrot.lane.b32.xlu0 %v1485, 96
    %v1604 = vpop.permute.xlu0 %1603
    %1606 = vst.msk [vmem:[#allocation2 + $0x8] sm:$0xc] %vm696, %v1604
    %1607 = vst.msk [vmem:[#allocation3] sm:$0x30] %vm698, %v1601
    %v1608 = vrot.slane %v1485, 2
    %1609 = vrot.lane.b32.xlu0 %v1608, 96
    %v1610 = vpop.permute.xlu0 %1609
    %v1611 = vsel %vm151, %v1610, 0
    %1613 = vmatprep.subr.mxu0 0.0
    %1614 = vmatpush1.msra.mxu0 %v123
    %1615 = vmatprep.subr.mxu0 0.0
    %1616 = vmatpush1.msra.mxu0 %v124
    %1617 = vmatprep.subr.mxu0 0.0
    %1618 = vmatpush1.msra.mxu0 %v125
    %1619 = vmatprep.subr.mxu0 0.0
    %1620 = vmatpush1.msra.mxu0 %v126
    %1621 = vmatprep.subr.mxu0 0.0
    %1622 = vmatpush1.msra.mxu0 0.0
    %1623 = vmatprep.subr.mxu0 0.0
    %1624 = vmatpush1.msra.mxu0 0.0
    %1625 = vmatprep.subr.mxu0 0.0
    %1626 = vmatpush1.msra.mxu0 0.0
    %1627 = vmatprep.subr.mxu0 0.0
    %1628 = vmatpush1.msra.mxu0 0.0
    %1629 = vmatprep.subr.mxu0 0.0
    %1630 = vmatpush1.msra.mxu0 0.0
    %1631 = vmatprep.subr.mxu0 0.0
    %1632 = vmatpush1.msra.mxu0 0.0
    %1633 = vmatprep.subr.mxu0 0.0
    %1634 = vmatpush1.msra.mxu0 0.0
    %1635 = vmatprep.subr.mxu0 0.0
    %1636 = vmatpush1.msra.mxu0 0.0
    %1637 = vmatprep.subr.mxu0 0.0
    %1638 = vmatpush1.msra.mxu0 0.0
    %1639 = vmatprep.subr.mxu0 0.0
    %1640 = vmatpush1.msra.mxu0 0.0
    %1641 = vmatprep.subr.mxu0 0.0
    %1642 = vmatpush1.msra.mxu0 0.0
    %1643 = vmatprep.subr.mxu0 0.0
    %1644 = vmatpush1.msra.mxu0 0.0
    %1645 = vmatprep.subr.mxu0 0.0
    %1646 = vmatpush1.msra.mxu0 0.0
    %1647 = vmatprep.subr.mxu0 0.0
    %1648 = vmatpush1.msra.mxu0 0.0
    %1649 = vmatprep.subr.mxu0 0.0
    %1650 = vmatpush1.msra.mxu0 0.0
    %1651 = vmatprep.subr.mxu0 0.0
    %1652 = vmatpush1.msra.mxu0 0.0
    %1653 = vmatprep.subr.mxu0 0.0
    %1654 = vmatpush1.msra.mxu0 0.0
    %1655 = vmatprep.subr.mxu0 0.0
    %1656 = vmatpush1.msra.mxu0 0.0
    %1657 = vmatprep.subr.mxu0 0.0
    %1658 = vmatpush1.msra.mxu0 0.0
    %1659 = vmatprep.subr.mxu0 0.0
    %1660 = vmatpush1.msra.mxu0 0.0
    %1661 = vmatprep.subr.mxu0 0.0
    %1662 = vmatpush1.msra.mxu0 0.0
    %1663 = vmatprep.subr.mxu0 0.0
    %1664 = vmatpush1.msra.mxu0 0.0
    %1665 = vmatprep.subr.mxu0 0.0
    %1666 = vmatpush1.msra.mxu0 0.0
    %1667 = vmatprep.subr.mxu0 0.0
    %1668 = vmatpush1.msra.mxu0 0.0
    %1669 = vmatprep.subr.mxu0 0.0
    %1670 = vmatpush1.msra.mxu0 0.0
    %1671 = vmatprep.subr.mxu0 0.0
    %1672 = vmatpush1.msra.mxu0 0.0
    %1673 = vmatprep.subr.mxu0 0.0
    %1674 = vmatpush1.msra.mxu0 0.0
    %1675 = vmatprep.subr.mxu0 0.0
    %1676 = vmatpush1.msra.mxu0 0.0
    %1677 = vmatprep.mubr.f32.mxu0 0.0
    %1678 = vmatmul.mubr.f32.gmra.mrb[0].mxu0 %v1611
    %v1679 = vpop.f32.mrb[0].mxu0
    %v1680 = vadd.f32 0.0, %v1679
    %v1681 = vpop.f32.mrb[0].mxu0
    %1682 = vdwg.mxu0
    %v1684 = vrot.slane %v1680, 4
    %v1686 = vadd.f32 %v231, %v1684
    %v1687 = vxor.u32 %v1686, 2147483648
    %v1688 = vmul.f32 %v1687, 1.442695
    %v1689 = vpow.pop %v1688
    %v1690 = vadd.f32 %v1689, 1.0
    %v1691 = vrcp.pop %v1690
    %v1692 = vmul.f32 1.0, %v1691
    %v1693 = vadd.f32 %v1680, %v328
    %v1695 = vrot.slane %v1693, 4
    %1696 = vrot.lane.b32.xlu0 %v1695, 64
    %v1697 = vpop.permute.xlu0 %1696
    %v1699 = vmul.f32 %v1692, %v1697
    %1701 = vrot.lane.b32.xlu0 %v1699, 64
    %v1702 = vpop.permute.xlu0 %1701
    %v1704 = vadd.f32 %v231, %v1702
    %v1705 = vtanh.pop %v1704
    %v1706 = vsub.f32 1.0, %v1692
    %1708 = vrot.lane.b32.xlu0 %v1705, 96
    %v1709 = vpop.permute.xlu0 %1708
    %v1711 = vmul.f32 %v1706, %v1709
    %v1712 = vrot.slane %v1485, 6
    %v1714 = vmul.f32 %v1692, %v1712
    %v1715 = vadd.f32 %v1711, %v1714
    %v1717 = vrot.slane %v1601, 4
    %v1718 = vsel %vm151, %v1717, 0
    %1720 = vmatprep.subr.mxu0 0.0
    %1721 = vmatpush1.msra.mxu0 %v127
    %1722 = vmatprep.subr.mxu0 0.0
    %1723 = vmatpush1.msra.mxu0 %v128
    %1724 = vmatprep.subr.mxu0 0.0
    %1725 = vmatpush1.msra.mxu0 %v129
    %1726 = vmatprep.subr.mxu0 0.0
    %1727 = vmatpush1.msra.mxu0 %v130
    %1728 = vmatprep.subr.mxu0 0.0
    %1729 = vmatpush1.msra.mxu0 0.0
    %1730 = vmatprep.subr.mxu0 0.0
    %1731 = vmatpush1.msra.mxu0 0.0
    %1732 = vmatprep.subr.mxu0 0.0
    %1733 = vmatpush1.msra.mxu0 0.0
    %1734 = vmatprep.subr.mxu0 0.0
    %1735 = vmatpush1.msra.mxu0 0.0
    %1736 = vmatprep.subr.mxu0 0.0
    %1737 = vmatpush1.msra.mxu0 0.0
    %1738 = vmatprep.subr.mxu0 0.0
    %1739 = vmatpush1.msra.mxu0 0.0
    %1740 = vmatprep.subr.mxu0 0.0
    %1741 = vmatpush1.msra.mxu0 0.0
    %1742 = vmatprep.subr.mxu0 0.0
    %1743 = vmatpush1.msra.mxu0 0.0
    %1744 = vmatprep.subr.mxu0 0.0
    %1745 = vmatpush1.msra.mxu0 0.0
    %1746 = vmatprep.subr.mxu0 0.0
    %1747 = vmatpush1.msra.mxu0 0.0
    %1748 = vmatprep.subr.mxu0 0.0
    %1749 = vmatpush1.msra.mxu0 0.0
    %1750 = vmatprep.subr.mxu0 0.0
    %1751 = vmatpush1.msra.mxu0 0.0
    %1752 = vmatprep.subr.mxu0 0.0
    %1753 = vmatpush1.msra.mxu0 0.0
    %1754 = vmatprep.subr.mxu0 0.0
    %1755 = vmatpush1.msra.mxu0 0.0
    %1756 = vmatprep.subr.mxu0 0.0
    %1757 = vmatpush1.msra.mxu0 0.0
    %1758 = vmatprep.subr.mxu0 0.0
    %1759 = vmatpush1.msra.mxu0 0.0
    %1760 = vmatprep.subr.mxu0 0.0
    %1761 = vmatpush1.msra.mxu0 0.0
    %1762 = vmatprep.subr.mxu0 0.0
    %1763 = vmatpush1.msra.mxu0 0.0
    %1764 = vmatprep.subr.mxu0 0.0
    %1765 = vmatpush1.msra.mxu0 0.0
    %1766 = vmatprep.subr.mxu0 0.0
    %1767 = vmatpush1.msra.mxu0 0.0
    %1768 = vmatprep.subr.mxu0 0.0
    %1769 = vmatpush1.msra.mxu0 0.0
    %1770 = vmatprep.subr.mxu0 0.0
    %1771 = vmatpush1.msra.mxu0 0.0
    %1772 = vmatprep.subr.mxu0 0.0
    %1773 = vmatpush1.msra.mxu0 0.0
    %1774 = vmatprep.subr.mxu0 0.0
    %1775 = vmatpush1.msra.mxu0 0.0
    %1776 = vmatprep.subr.mxu0 0.0
    %1777 = vmatpush1.msra.mxu0 0.0
    %1778 = vmatprep.subr.mxu0 0.0
    %1779 = vmatpush1.msra.mxu0 0.0
    %1780 = vmatprep.subr.mxu0 0.0
    %1781 = vmatpush1.msra.mxu0 0.0
    %1782 = vmatprep.subr.mxu0 0.0
    %1783 = vmatpush1.msra.mxu0 0.0
    %1784 = vmatprep.mubr.f32.mxu0 0.0
    %1785 = vmatmul.mubr.f32.gmra.mrb[0].mxu0 %v1718
    %v1786 = vpop.f32.mrb[0].mxu0
    %v1787 = vadd.f32 0.0, %v1786
    %v1788 = vpop.f32.mrb[0].mxu0
    %1789 = vdwg.mxu0
    %v1791 = vrot.slane %v1787, 6
    %1792 = vrot.lane.b32.xlu0 %v1791, 96
    %v1793 = vpop.permute.xlu0 %1792
    %v1795 = vadd.f32 %v225, %v1793
    %v1796 = vxor.u32 %v1795, 2147483648
    %v1797 = vmul.f32 %v1796, 1.442695
    %v1798 = vpow.pop %v1797
    %v1799 = vadd.f32 %v1798, 1.0
    %v1800 = vrcp.pop %v1799
    %v1801 = vmul.f32 1.0, %v1800
    %v1802 = vadd.f32 %v227, %v1793
    %v1803 = vxor.u32 %v1802, 2147483648
    %v1804 = vmul.f32 %v1803, 1.442695
    %v1805 = vpow.pop %v1804
    %v1806 = vadd.f32 %v1805, 1.0
    %v1807 = vrcp.pop %v1806
    %v1808 = vmul.f32 1.0, %v1807
    %v1809 = vadd.f32 %v1787, %v440
    %v1811 = vrot.slane %v1809, 6
    %1812 = vrot.lane.b32.xlu0 %v1811, 32
    %v1813 = vpop.permute.xlu0 %1812
    %v1815 = vmul.f32 %v1801, %v1813
    %1817 = vrot.lane.b32.xlu0 %v1815, 64
    %v1818 = vpop.permute.xlu0 %1817
    %v1820 = vadd.f32 %v227, %v1818
    %v1821 = vtanh.pop %v1820
    %v1822 = vsub.f32 1.0, %v1808
    %1824 = vrot.lane.b32.xlu0 %v1821, 96
    %v1825 = vpop.permute.xlu0 %1824
    %v1827 = vmul.f32 %v1822, %v1825
    %v1828 = vrot.slane %v1601, 2
    %v1830 = vmul.f32 %v1808, %v1828
    %v1831 = vadd.f32 %v1827, %v1830
    %1833 = vrot.lane.b32.xlu0 %v1715, 96
    %v1834 = vpop.permute.xlu0 %1833
    %1836 = vst.msk [vmem:[#allocation2 + $0x8] sm:$0x30] %vm698, %v1834
    %1837 = vst.msk [vmem:[#allocation3] sm:$0xc] %vm696, %v1831
    %v1838 = vrot.slane %v1715, 4
    %1839 = vrot.lane.b32.xlu0 %v1838, 96
    %v1840 = vpop.permute.xlu0 %1839
    %v1841 = vsel %vm151, %v1840, 0
    %1843 = vmatprep.subr.mxu0 0.0
    %1844 = vmatpush1.msra.mxu0 %v123
    %1845 = vmatprep.subr.mxu0 0.0
    %1846 = vmatpush1.msra.mxu0 %v124
    %1847 = vmatprep.subr.mxu0 0.0
    %1848 = vmatpush1.msra.mxu0 %v125
    %1849 = vmatprep.subr.mxu0 0.0
    %1850 = vmatpush1.msra.mxu0 %v126
    %1851 = vmatprep.subr.mxu0 0.0
    %1852 = vmatpush1.msra.mxu0 0.0
    %1853 = vmatprep.subr.mxu0 0.0
    %1854 = vmatpush1.msra.mxu0 0.0
    %1855 = vmatprep.subr.mxu0 0.0
    %1856 = vmatpush1.msra.mxu0 0.0
    %1857 = vmatprep.subr.mxu0 0.0
    %1858 = vmatpush1.msra.mxu0 0.0
    %1859 = vmatprep.subr.mxu0 0.0
    %1860 = vmatpush1.msra.mxu0 0.0
    %1861 = vmatprep.subr.mxu0 0.0
    %1862 = vmatpush1.msra.mxu0 0.0
    %1863 = vmatprep.subr.mxu0 0.0
    %1864 = vmatpush1.msra.mxu0 0.0
    %1865 = vmatprep.subr.mxu0 0.0
    %1866 = vmatpush1.msra.mxu0 0.0
    %1867 = vmatprep.subr.mxu0 0.0
    %1868 = vmatpush1.msra.mxu0 0.0
    %1869 = vmatprep.subr.mxu0 0.0
    %1870 = vmatpush1.msra.mxu0 0.0
    %1871 = vmatprep.subr.mxu0 0.0
    %1872 = vmatpush1.msra.mxu0 0.0
    %1873 = vmatprep.subr.mxu0 0.0
    %1874 = vmatpush1.msra.mxu0 0.0
    %1875 = vmatprep.subr.mxu0 0.0
    %1876 = vmatpush1.msra.mxu0 0.0
    %1877 = vmatprep.subr.mxu0 0.0
    %1878 = vmatpush1.msra.mxu0 0.0
    %1879 = vmatprep.subr.mxu0 0.0
    %1880 = vmatpush1.msra.mxu0 0.0
    %1881 = vmatprep.subr.mxu0 0.0
    %1882 = vmatpush1.msra.mxu0 0.0
    %1883 = vmatprep.subr.mxu0 0.0
    %1884 = vmatpush1.msra.mxu0 0.0
    %1885 = vmatprep.subr.mxu0 0.0
    %1886 = vmatpush1.msra.mxu0 0.0
    %1887 = vmatprep.subr.mxu0 0.0
    %1888 = vmatpush1.msra.mxu0 0.0
    %1889 = vmatprep.subr.mxu0 0.0
    %1890 = vmatpush1.msra.mxu0 0.0
    %1891 = vmatprep.subr.mxu0 0.0
    %1892 = vmatpush1.msra.mxu0 0.0
    %1893 = vmatprep.subr.mxu0 0.0
    %1894 = vmatpush1.msra.mxu0 0.0
    %1895 = vmatprep.subr.mxu0 0.0
    %1896 = vmatpush1.msra.mxu0 0.0
    %1897 = vmatprep.subr.mxu0 0.0
    %1898 = vmatpush1.msra.mxu0 0.0
    %1899 = vmatprep.subr.mxu0 0.0
    %1900 = vmatpush1.msra.mxu0 0.0
    %1901 = vmatprep.subr.mxu0 0.0
    %1902 = vmatpush1.msra.mxu0 0.0
    %1903 = vmatprep.subr.mxu0 0.0
    %1904 = vmatpush1.msra.mxu0 0.0
    %1905 = vmatprep.subr.mxu0 0.0
    %1906 = vmatpush1.msra.mxu0 0.0
    %1907 = vmatprep.mubr.f32.mxu0 0.0
    %1908 = vmatmul.mubr.f32.gmra.mrb[0].mxu0 %v1841
    %v1909 = vpop.f32.mrb[0].mxu0
    %v1910 = vadd.f32 0.0, %v1909
    %v1911 = vpop.f32.mrb[0].mxu0
    %1912 = vdwg.mxu0
    %v1914 = vrot.slane %v1910, 2
    %v1916 = vadd.f32 %v231, %v1914
    %v1917 = vxor.u32 %v1916, 2147483648
    %v1918 = vmul.f32 %v1917, 1.442695
    %v1919 = vpow.pop %v1918
    %v1920 = vadd.f32 %v1919, 1.0
    %v1921 = vrcp.pop %v1920
    %v1922 = vmul.f32 1.0, %v1921
    %v1923 = vadd.f32 %v1910, %v328
    %v1925 = vrot.slane %v1923, 2
    %1926 = vrot.lane.b32.xlu0 %v1925, 64
    %v1927 = vpop.permute.xlu0 %1926
    %v1929 = vmul.f32 %v1922, %v1927
    %1931 = vrot.lane.b32.xlu0 %v1929, 64
    %v1932 = vpop.permute.xlu0 %1931
    %v1934 = vadd.f32 %v231, %v1932
    %v1935 = vtanh.pop %v1934
    %v1936 = vsub.f32 1.0, %v1922
    %1938 = vrot.lane.b32.xlu0 %v1935, 96
    %v1939 = vpop.permute.xlu0 %1938
    %v1941 = vmul.f32 %v1936, %v1939
    %v1942 = vrot.slane %v1715, 6
    %v1944 = vmul.f32 %v1922, %v1942
    %v1945 = vadd.f32 %v1941, %v1944
    %v1947 = vrot.slane %v1831, 2
    %v1948 = vsel %vm151, %v1947, 0
    %1950 = vmatprep.subr.mxu0 0.0
    %1951 = vmatpush1.msra.mxu0 %v127
    %1952 = vmatprep.subr.mxu0 0.0
    %1953 = vmatpush1.msra.mxu0 %v128
    %1954 = vmatprep.subr.mxu0 0.0
    %1955 = vmatpush1.msra.mxu0 %v129
    %1956 = vmatprep.subr.mxu0 0.0
    %1957 = vmatpush1.msra.mxu0 %v130
    %1958 = vmatprep.subr.mxu0 0.0
    %1959 = vmatpush1.msra.mxu0 0.0
    %1960 = vmatprep.subr.mxu0 0.0
    %1961 = vmatpush1.msra.mxu0 0.0
    %1962 = vmatprep.subr.mxu0 0.0
    %1963 = vmatpush1.msra.mxu0 0.0
    %1964 = vmatprep.subr.mxu0 0.0
    %1965 = vmatpush1.msra.mxu0 0.0
    %1966 = vmatprep.subr.mxu0 0.0
    %1967 = vmatpush1.msra.mxu0 0.0
    %1968 = vmatprep.subr.mxu0 0.0
    %1969 = vmatpush1.msra.mxu0 0.0
    %1970 = vmatprep.subr.mxu0 0.0
    %1971 = vmatpush1.msra.mxu0 0.0
    %1972 = vmatprep.subr.mxu0 0.0
    %1973 = vmatpush1.msra.mxu0 0.0
    %1974 = vmatprep.subr.mxu0 0.0
    %1975 = vmatpush1.msra.mxu0 0.0
    %1976 = vmatprep.subr.mxu0 0.0
    %1977 = vmatpush1.msra.mxu0 0.0
    %1978 = vmatprep.subr.mxu0 0.0
    %1979 = vmatpush1.msra.mxu0 0.0
    %1980 = vmatprep.subr.mxu0 0.0
    %1981 = vmatpush1.msra.mxu0 0.0
    %1982 = vmatprep.subr.mxu0 0.0
    %1983 = vmatpush1.msra.mxu0 0.0
    %1984 = vmatprep.subr.mxu0 0.0
    %1985 = vmatpush1.msra.mxu0 0.0
    %1986 = vmatprep.subr.mxu0 0.0
    %1987 = vmatpush1.msra.mxu0 0.0
    %1988 = vmatprep.subr.mxu0 0.0
    %1989 = vmatpush1.msra.mxu0 0.0
    %1990 = vmatprep.subr.mxu0 0.0
    %1991 = vmatpush1.msra.mxu0 0.0
    %1992 = vmatprep.subr.mxu0 0.0
    %1993 = vmatpush1.msra.mxu0 0.0
    %1994 = vmatprep.subr.mxu0 0.0
    %1995 = vmatpush1.msra.mxu0 0.0
    %1996 = vmatprep.subr.mxu0 0.0
    %1997 = vmatpush1.msra.mxu0 0.0
    %1998 = vmatprep.subr.mxu0 0.0
    %1999 = vmatpush1.msra.mxu0 0.0
    %2000 = vmatprep.subr.mxu0 0.0
    %2001 = vmatpush1.msra.mxu0 0.0
    %2002 = vmatprep.subr.mxu0 0.0
    %2003 = vmatpush1.msra.mxu0 0.0
    %2004 = vmatprep.subr.mxu0 0.0
    %2005 = vmatpush1.msra.mxu0 0.0
    %2006 = vmatprep.subr.mxu0 0.0
    %2007 = vmatpush1.msra.mxu0 0.0
    %2008 = vmatprep.subr.mxu0 0.0
    %2009 = vmatpush1.msra.mxu0 0.0
    %2010 = vmatprep.subr.mxu0 0.0
    %2011 = vmatpush1.msra.mxu0 0.0
    %2012 = vmatprep.subr.mxu0 0.0
    %2013 = vmatpush1.msra.mxu0 0.0
    %2014 = vmatprep.mubr.f32.mxu0 0.0
    %2015 = vmatmul.mubr.f32.gmra.mrb[0].mxu0 %v1948
    %v2016 = vpop.f32.mrb[0].mxu0
    %v2017 = vadd.f32 0.0, %v2016
    %v2018 = vpop.f32.mrb[0].mxu0
    %2019 = vdwg.mxu0
    %2021 = vrot.lane.b32.xlu0 %v2017, 96
    %v2022 = vpop.permute.xlu0 %2021
    %v2024 = vadd.f32 %v225, %v2022
    %v2025 = vxor.u32 %v2024, 2147483648
    %v2026 = vmul.f32 %v2025, 1.442695
    %v2027 = vpow.pop %v2026
    %v2028 = vadd.f32 %v2027, 1.0
    %v2029 = vrcp.pop %v2028
    %v2030 = vmul.f32 1.0, %v2029
    %v2031 = vadd.f32 %v227, %v2022
    %v2032 = vxor.u32 %v2031, 2147483648
    %v2033 = vmul.f32 %v2032, 1.442695
    %v2034 = vpow.pop %v2033
    %v2035 = vadd.f32 %v2034, 1.0
    %v2036 = vrcp.pop %v2035
    %v2037 = vmul.f32 1.0, %v2036
    %v2038 = vadd.f32 %v2017, %v440
    %2040 = vrot.lane.b32.xlu0 %v2038, 32
    %v2041 = vpop.permute.xlu0 %2040
    %v2043 = vmul.f32 %v2030, %v2041
    %2045 = vrot.lane.b32.xlu0 %v2043, 64
    %v2046 = vpop.permute.xlu0 %2045
    %v2048 = vadd.f32 %v227, %v2046
    %v2049 = vtanh.pop %v2048
    %v2050 = vsub.f32 1.0, %v2037
    %2052 = vrot.lane.b32.xlu0 %v2049, 96
    %v2053 = vpop.permute.xlu0 %2052
    %v2055 = vmul.f32 %v2050, %v2053
    %v2057 = vmul.f32 %v2037, %v1947
    %v2058 = vadd.f32 %v2055, %v2057
    %2060 = vrot.lane.b32.xlu0 %v1945, 96
    %v2061 = vpop.permute.xlu0 %2060
    %2063 = vst.msk [vmem:[#allocation2 + $0x8] sm:$0xc0] %vm469, %v2061
    %2064 = vst.msk [vmem:[#allocation3] sm:$0x3] %vm467, %v2058
    %v2065 = vld [vmem:[#allocation2] sm:$0xff]
    %v2066 = vld [vmem:[#allocation2 + $0x8] sm:$0xff]
    %v2067 = vld [vmem:[#allocation12] sm:$0xff]
    %v2068 = vld [vmem:[#allocation12 + $0x8] sm:$0xff]
    %v2069 = vld [vmem:[#allocation12 + $0x10] sm:$0xff]
    %v2070 = vld [vmem:[#allocation12 + $0x18] sm:$0xff]
    %v2071 = vld [vmem:[#allocation3] sm:$0xff]
    %v2072 = vld [vmem:[#allocation3 + $0x8] sm:$0xff]
    %v2073 = vld [vmem:[#allocation13] sm:$0xff]
    %v2074 = vld [vmem:[#allocation13 + $0x8] sm:$0xff]
    %v2075 = vld [vmem:[#allocation13 + $0x10] sm:$0xff]
    %v2076 = vld [vmem:[#allocation13 + $0x18] sm:$0xff]
    %v2078 = vsel %vm151, %v2071, 0
    %v2081 = vsel %vm151, %v2072, 0
    %2083 = vmatprep.subr.mxu0 0.0
    %2084 = vmatpush1.msra.mxu0 %v2073
    %2085 = vmatprep.subr.mxu0 0.0
    %2086 = vmatpush1.msra.mxu0 %v2074
    %2087 = vmatprep.subr.mxu0 0.0
    %2088 = vmatpush1.msra.mxu0 %v2075
    %2089 = vmatprep.subr.mxu0 0.0
    %2090 = vmatpush1.msra.mxu0 %v2076
    %2091 = vmatprep.subr.mxu0 0.0
    %2092 = vmatpush1.msra.mxu0 0.0
    %2093 = vmatprep.subr.mxu0 0.0
    %2094 = vmatpush1.msra.mxu0 0.0
    %2095 = vmatprep.subr.mxu0 0.0
    %2096 = vmatpush1.msra.mxu0 0.0
    %2097 = vmatprep.subr.mxu0 0.0
    %2098 = vmatpush1.msra.mxu0 0.0
    %2099 = vmatprep.subr.mxu0 0.0
    %2100 = vmatpush1.msra.mxu0 0.0
    %2101 = vmatprep.subr.mxu0 0.0
    %2102 = vmatpush1.msra.mxu0 0.0
    %2103 = vmatprep.subr.mxu0 0.0
    %2104 = vmatpush1.msra.mxu0 0.0
    %2105 = vmatprep.subr.mxu0 0.0
    %2106 = vmatpush1.msra.mxu0 0.0
    %2107 = vmatprep.subr.mxu0 0.0
    %2108 = vmatpush1.msra.mxu0 0.0
    %2109 = vmatprep.subr.mxu0 0.0
    %2110 = vmatpush1.msra.mxu0 0.0
    %2111 = vmatprep.subr.mxu0 0.0
    %2112 = vmatpush1.msra.mxu0 0.0
    %2113 = vmatprep.subr.mxu0 0.0
    %2114 = vmatpush1.msra.mxu0 0.0
    %2115 = vmatprep.subr.mxu0 0.0
    %2116 = vmatpush1.msra.mxu0 0.0
    %2117 = vmatprep.subr.mxu0 0.0
    %2118 = vmatpush1.msra.mxu0 0.0
    %2119 = vmatprep.subr.mxu0 0.0
    %2120 = vmatpush1.msra.mxu0 0.0
    %2121 = vmatprep.subr.mxu0 0.0
    %2122 = vmatpush1.msra.mxu0 0.0
    %2123 = vmatprep.subr.mxu0 0.0
    %2124 = vmatpush1.msra.mxu0 0.0
    %2125 = vmatprep.subr.mxu0 0.0
    %2126 = vmatpush1.msra.mxu0 0.0
    %2127 = vmatprep.subr.mxu0 0.0
    %2128 = vmatpush1.msra.mxu0 0.0
    %2129 = vmatprep.subr.mxu0 0.0
    %2130 = vmatpush1.msra.mxu0 0.0
    %2131 = vmatprep.subr.mxu0 0.0
    %2132 = vmatpush1.msra.mxu0 0.0
    %2133 = vmatprep.subr.mxu0 0.0
    %2134 = vmatpush1.msra.mxu0 0.0
    %2135 = vmatprep.subr.mxu0 0.0
    %2136 = vmatpush1.msra.mxu0 0.0
    %2137 = vmatprep.subr.mxu0 0.0
    %2138 = vmatpush1.msra.mxu0 0.0
    %2139 = vmatprep.subr.mxu0 0.0
    %2140 = vmatpush1.msra.mxu0 0.0
    %2141 = vmatprep.subr.mxu0 0.0
    %2142 = vmatpush1.msra.mxu0 0.0
    %2143 = vmatprep.subr.mxu0 0.0
    %2144 = vmatpush1.msra.mxu0 0.0
    %2145 = vmatprep.subr.mxu0 0.0
    %2146 = vmatpush1.msra.mxu0 0.0
    %2147 = vmatprep.mubr.f32.mxu0 0.0
    %2148 = vmatmul.mubr.f32.gmra.mrb[0].mxu0 %v2078
    %v2149 = vpop.f32.mrb[0].mxu0
    %v2150 = vadd.f32 0.0, %v2149
    %v2151 = vpop.f32.mrb[0].mxu0
    %2152 = vmatprep.mubr.f32.mxu0 0.0
    %2153 = vmatmul.mubr.f32.gmra.mrb[0].mxu0 %v2081
    %v2154 = vpop.f32.mrb[0].mxu0
    %v2155 = vadd.f32 0.0, %v2154
    %v2156 = vpop.f32.mrb[0].mxu0
    %2157 = vdwg.mxu0
    %v2159 = vsel %vm151, %v2065, 0
    %v2162 = vsel %vm151, %v2066, 0
    %2164 = vmatprep.subr.mxu0 0.0
    %2165 = vmatpush1.msra.mxu0 %v2067
    %2166 = vmatprep.subr.mxu0 0.0
    %2167 = vmatpush1.msra.mxu0 %v2068
    %2168 = vmatprep.subr.mxu0 0.0
    %2169 = vmatpush1.msra.mxu0 %v2069
    %2170 = vmatprep.subr.mxu0 0.0
    %2171 = vmatpush1.msra.mxu0 %v2070
    %2172 = vmatprep.subr.mxu0 0.0
    %2173 = vmatpush1.msra.mxu0 0.0
    %2174 = vmatprep.subr.mxu0 0.0
    %2175 = vmatpush1.msra.mxu0 0.0
    %2176 = vmatprep.subr.mxu0 0.0
    %2177 = vmatpush1.msra.mxu0 0.0
    %2178 = vmatprep.subr.mxu0 0.0
    %2179 = vmatpush1.msra.mxu0 0.0
    %2180 = vmatprep.subr.mxu0 0.0
    %2181 = vmatpush1.msra.mxu0 0.0
    %2182 = vmatprep.subr.mxu0 0.0
    %2183 = vmatpush1.msra.mxu0 0.0
    %2184 = vmatprep.subr.mxu0 0.0
    %2185 = vmatpush1.msra.mxu0 0.0
    %2186 = vmatprep.subr.mxu0 0.0
    %2187 = vmatpush1.msra.mxu0 0.0
    %2188 = vmatprep.subr.mxu0 0.0
    %2189 = vmatpush1.msra.mxu0 0.0
    %2190 = vmatprep.subr.mxu0 0.0
    %2191 = vmatpush1.msra.mxu0 0.0
    %2192 = vmatprep.subr.mxu0 0.0
    %2193 = vmatpush1.msra.mxu0 0.0
    %2194 = vmatprep.subr.mxu0 0.0
    %2195 = vmatpush1.msra.mxu0 0.0
    %2196 = vmatprep.subr.mxu0 0.0
    %2197 = vmatpush1.msra.mxu0 0.0
    %2198 = vmatprep.subr.mxu0 0.0
    %2199 = vmatpush1.msra.mxu0 0.0
    %2200 = vmatprep.subr.mxu0 0.0
    %2201 = vmatpush1.msra.mxu0 0.0
    %2202 = vmatprep.subr.mxu0 0.0
    %2203 = vmatpush1.msra.mxu0 0.0
    %2204 = vmatprep.subr.mxu0 0.0
    %2205 = vmatpush1.msra.mxu0 0.0
    %2206 = vmatprep.subr.mxu0 0.0
    %2207 = vmatpush1.msra.mxu0 0.0
    %2208 = vmatprep.subr.mxu0 0.0
    %2209 = vmatpush1.msra.mxu0 0.0
    %2210 = vmatprep.subr.mxu0 0.0
    %2211 = vmatpush1.msra.mxu0 0.0
    %2212 = vmatprep.subr.mxu0 0.0
    %2213 = vmatpush1.msra.mxu0 0.0
    %2214 = vmatprep.subr.mxu0 0.0
    %2215 = vmatpush1.msra.mxu0 0.0
    %2216 = vmatprep.subr.mxu0 0.0
    %2217 = vmatpush1.msra.mxu0 0.0
    %2218 = vmatprep.subr.mxu0 0.0
    %2219 = vmatpush1.msra.mxu0 0.0
    %2220 = vmatprep.subr.mxu0 0.0
    %2221 = vmatpush1.msra.mxu0 0.0
    %2222 = vmatprep.subr.mxu0 0.0
    %2223 = vmatpush1.msra.mxu0 0.0
    %2224 = vmatprep.subr.mxu0 0.0
    %2225 = vmatpush1.msra.mxu0 0.0
    %2226 = vmatprep.subr.mxu0 0.0
    %2227 = vmatpush1.msra.mxu0 0.0
    %2228 = vmatprep.mubr.f32.mxu0 0.0
    %2229 = vmatmul.mubr.f32.gmra.mrb[0].mxu0 %v2159
    %v2230 = vpop.f32.mrb[0].mxu0
    %v2231 = vadd.f32 %v2150, %v2230
    %v2232 = vpop.f32.mrb[0].mxu0
    %2233 = vmatprep.mubr.f32.mxu0 0.0
    %2234 = vmatmul.mubr.f32.gmra.mrb[0].mxu0 %v2162
    %v2235 = vpop.f32.mrb[0].mxu0
    %v2236 = vadd.f32 %v2155, %v2235
    %v2237 = vpop.f32.mrb[0].mxu0
    %2238 = vdwg.mxu0
    %v2239 = vld [vmem:[%s9] sm:$0x1]
    %v2241 = vlaneseq
    %v2242 = vshrl.u32 %v2241, 7
    %v2243 = vsub.s32 0, %v2242
    %v2244 = vrot.slane %v2239, %v2243
    %v2246 = vadd.f32 %v2231, %v2244
    %v2247 = vadd.f32 %v2236, %v2244
    %v2248 = vtanh.pop %v2246
    %v2249 = vtanh.pop %v2247
    %2250 = vst.msk [vmem:[#allocation15] sm:$0xff] %vm151, %v2248
    %2251 = vst.msk [vmem:[#allocation15 + $0x8] sm:$0xff] %vm151, %v2249
    %2252 = vst.msk [vmem:[#allocation16 - $0x6] sm:$0xc0] %vm469, %v2061
    %2253 = vst.msk [vmem:[#allocation16 + $0x2] sm:$0x3] %vm467, %v2058
    // Predicated region
    $region66: #{tpu_custom_call.1} parent=1 // pred_check
      _
    $region67: #{tpu_custom_call.1} parent=1 // pred_check_branch
      %2255 = sbr.rel (0) target = $region69
    $region68: #{tpu_custom_call.1} parent=1 // pred_region
      %s2257 = ssub.s32 256, 256
      %2258 = vsyncadd [#allocation6], %s2257
      %s2259 = sshll.u32 [#allocation15], 4
      %s2260 = int_to_ptr.vmem [resolvable:$true] %s2259
      %2265 = dma.vmem_to_hbm [thread:$0]  %s2260, 256, %s10, [#allocation6], 128, 128, 8
    $region69: #{tpu_custom_call.1} parent=1 // pred_fallthru
      _
    // Predicated region
    $region70: #{tpu_custom_call.1} parent=1 // pred_check
      _
    $region71: #{tpu_custom_call.1} parent=1 // pred_check_branch
      %2267 = sbr.rel (0) target = $region73
    $region72: #{tpu_custom_call.1} parent=1 // pred_region
      %s2269 = ssub.s32 64, 64
      %2270 = vsyncadd [#allocation17], %s2269
      %s2272 = sshll.u32 [#allocation16], 4
      %s2273 = int_to_ptr.vmem [resolvable:$true] %s2272
      %2275 = dma.vmem_to_hbm [thread:$0]  %s2273, 64, %s11, [#allocation17]
    $region73: #{tpu_custom_call.1} parent=1 // pred_fallthru
      _
    // Predicated region
    $region74: #{tpu_custom_call.1} parent=1 // pred_check
      _
    $region75: #{tpu_custom_call.1} parent=1 // pred_check_branch
      %2277 = sbr.rel (0) target = $region77
    $region76: #{tpu_custom_call.1} parent=1 // pred_region
      %2278 = dma.done [#allocation6], 256
    $region77: #{tpu_custom_call.1} parent=1 // pred_fallthru
      _
    // Predicated region
    $region78: #{tpu_custom_call.1} parent=1 // pred_check
      _
    $region79: #{tpu_custom_call.1} parent=1 // pred_check_branch
      %2280 = sbr.rel (0) target = $region81
    $region80: #{tpu_custom_call.1} parent=1 // pred_region
      %2281 = dma.done [#allocation17], 64
    $region81: #{tpu_custom_call.1} parent=1 // pred_fallthru
      _
    %2282 = vsyncpa [#allocation5], 1
    %2283 = vsyncpa [#allocation8], 1
    %2284 = vsyncpa [#allocation11], 1
    %2285 = vsyncpa [#allocation14], 1
    %2286 = vsyncpa [#allocation6], 1
    %2287 = vsyncpa [#allocation17], 1

</llo_original>
